<compile_context>
chip_gen: v7x
topology: tpu7x:2x2x1
jax: 0.10.0
libtpu: 0.0.40
codegen_flags: <defaults>
</compile_context>

<pallas_src>
import functools

import jax
import jax.numpy as jnp
from jax import lax
from jax.experimental import pallas as pl
from jax.experimental.pallas import tpu as pltpu


def _round_up(x, m):
    return (x + m - 1) // m * m


def _vq_kernel(x_ref, cw_ref, cwt_ref, c2_ref, q_ref, idx_ref, sse_ref,
               *, n_valid, tile_n, k_pad, d):
    """One grid step quantizes a (tile_n, D) slab of flattened inputs.

    x_ref   : (tile_n, D)    f32  input rows for this tile
    cw_ref  : (K_pad, D)     f32  codebook, zero-padded rows (resident block)
    cwt_ref : (D, K_pad)     f32  codebook transpose (resident block)
    c2_ref  : (1, K_pad)     f32  ||c||^2 per codeword; +huge on padded entries
    q_ref   : (tile_n, D)    f32  nearest-codeword rows
    idx_ref : (1, 1, tile_n) i32  argmin index per row (lane-dense store)
    sse_ref : (1, 1, 1)      f32  per-tile partial sum of squared error
    """
    step = pl.program_id(0)

    x = x_ref[...]                                   # (TN, D)
    cw = cw_ref[...]                                 # (Kp, D)
    cwt = cwt_ref[...]                               # (D, Kp)
    c2 = c2_ref[...]                                 # (1, Kp)

    # argmin_c ||x - c||^2 == argmin_c (||c||^2 - 2 x.c); ||x||^2 is dropped.
    xc = jnp.dot(x, cwt, preferred_element_type=jnp.float32)      # (TN, Kp) MXU
    dist = c2 - 2.0 * xc                                          # (TN, Kp)
    idx = jnp.argmin(dist, axis=1).astype(jnp.int32)              # (TN,)

    # Gather nearest codewords with an exact 0/1 one-hot matmul (MXU).
    onehot = (idx[:, None] ==
              lax.broadcasted_iota(jnp.int32, (tile_n, k_pad), 1)
              ).astype(jnp.float32)
    q = jnp.dot(onehot, cw, preferred_element_type=jnp.float32)   # (TN, D)

    q_ref[...] = q
    idx_ref[...] = idx.reshape(1, 1, tile_n)

    # Per-tile partial SSE; rows past n_valid (padding) are masked out so the
    # commitment loss is unbiased.
    diff = q - x
    sq = diff * diff
    if n_valid % tile_n != 0:
        row = step * tile_n + lax.broadcasted_iota(jnp.int32, (tile_n, d), 0)
        sq = jnp.where(row < n_valid, sq, 0.0)
    sse_ref[...] = jnp.sum(sq).reshape(1, 1, 1)


def vector_quantizer_ema_forward(inputs, codewords, commitment_cost,
                                 tile_n=4096):
    """Eval-mode forward of VectorQuantizerEMA.

    inputs    : (..., D) float32
    codewords : (K, D)   float32
    Returns (quantized, encoding_indices, loss) matching the PyTorch module.
    """
    in_shape = inputs.shape
    K, D = codewords.shape
    assert in_shape[-1] == D

    flat = inputs.reshape(-1, D).astype(jnp.float32)
    N = flat.shape[0]

    # Lane-pad the codebook to a multiple of 128 so dist / argmin / one-hot are
    # lane-dense; padded entries get a huge ||c||^2 so they never win argmin.
    K_pad = _round_up(max(K, 128), 128)
    cw_pad = jnp.pad(codewords.astype(jnp.float32), ((0, K_pad - K), (0, 0)))
    c2 = jnp.sum(cw_pad * cw_pad, axis=1)
    c2 = jnp.where(jnp.arange(K_pad) < K, c2, jnp.float32(1e30))[None, :]
    cw_t = cw_pad.T                                   # (D, K_pad)

    # Row-pad the flattened inputs to a whole number of tiles; clamp the tile
    # size for small inputs so tiny problems do not over-pad.
    tile = min(_round_up(tile_n, 128), _round_up(N, 128))
    N_pad = _round_up(N, tile)
    flat_p = jnp.pad(flat, ((0, N_pad - N), (0, 0))) if N_pad != N else flat
    num_tiles = N_pad // tile

    kernel = functools.partial(_vq_kernel, n_valid=N, tile_n=tile,
                               k_pad=K_pad, d=D)

    q_flat, idx3, sse_partials = pl.pallas_call(
        kernel,
        out_shape=(
            jax.ShapeDtypeStruct((N_pad, D), jnp.float32),
            jax.ShapeDtypeStruct((num_tiles, 1, tile), jnp.int32),
            jax.ShapeDtypeStruct((num_tiles, 1, 1), jnp.float32),
        ),
        grid_spec=pltpu.PrefetchScalarGridSpec(
            num_scalar_prefetch=0,
            grid=(num_tiles,),
            in_specs=[
                pl.BlockSpec((tile, D), lambda i: (i, 0)),        # input rows
                pl.BlockSpec((K_pad, D), lambda i: (0, 0)),       # codebook
                pl.BlockSpec((D, K_pad), lambda i: (0, 0)),       # codebook^T
                pl.BlockSpec((1, K_pad), lambda i: (0, 0)),       # ||c||^2
            ],
            out_specs=[
                pl.BlockSpec((tile, D), lambda i: (i, 0)),        # quantized
                pl.BlockSpec((1, 1, tile), lambda i: (i, 0, 0)),  # indices
                pl.BlockSpec((1, 1, 1), lambda i: (i, 0, 0)),     # SSE partial
            ],
        ),
        compiler_params=pltpu.CompilerParams(
            dimension_semantics=("parallel",)),
    )(flat_p, cw_pad, cw_t, c2)

    quantized = q_flat[:N].reshape(in_shape)
    # Straight-through estimator: forward value == quantized, grads pass to x.
    quantized = inputs + lax.stop_gradient(quantized - inputs)

    # commitment_loss = mse(quantized.detach(), inputs) = SSE / numel
    commitment_loss = jnp.sum(sse_partials) / jnp.float32(N * D)
    loss = jnp.float32(commitment_cost) * commitment_loss

    encoding_indices = idx3.reshape(-1)[:N].reshape(in_shape[:-1])
    return quantized, encoding_indices, loss


def _reference_forward(inputs, codewords, commitment_cost):
    """Pure-JAX reference mirroring the PyTorch forward (eval mode)."""
    D = codewords.shape[1]
    flat = inputs.reshape(-1, D)
    dist = jnp.sum((flat[:, None, :] - codewords[None, :, :]) ** 2, axis=2)
    idx = jnp.argmin(dist, axis=1)
    q = codewords[idx].reshape(inputs.shape)
    loss = commitment_cost * jnp.mean((q - inputs) ** 2)
    return q, idx.reshape(inputs.shape[:-1]), loss


if __name__ == "__main__":
    num_codewords = 64
    codewords_dim = 32
    commitment_cost = 0.25

    key = jax.random.PRNGKey(0)
    k_cw, k_x = jax.random.split(key)
    # buffer: codewords ~ randn(num_codewords, codewords_dim)
    codewords = jax.random.normal(k_cw, (num_codewords, codewords_dim),
                                  dtype=jnp.float32)
    # inputs: (B, H, W, D) channels-last, N = 2*8*16 = 256 flat rows
    x = jax.random.normal(k_x, (2, 8, 16, codewords_dim), dtype=jnp.float32)

    quantized, indices, loss = vector_quantizer_ema_forward(
        x, codewords, commitment_cost)
    jax.block_until_ready((quantized, indices, loss))

    # Sanity check against a pure-JAX reference.
    q_ref, idx_ref, loss_ref = _reference_forward(x, codewords,
                                                  commitment_cost)
    assert quantized.shape == x.shape
    assert indices.shape == x.shape[:-1]
    assert jnp.array_equal(indices, idx_ref.astype(indices.dtype))
    assert jnp.allclose(quantized, q_ref, atol=1e-5)
    assert jnp.allclose(loss, loss_ref, rtol=1e-5, atol=1e-6)

    print("KERNEL_OK")
</pallas_src>

<mosaic_0001>
module attributes {stable_mosaic.version = 11 : i64} {
  func.func @_vq_kernel(%arg0: i32, %arg1: memref<256x32xf32, #tpu.memory_space<vmem>>, %arg2: memref<128x32xf32, #tpu.memory_space<vmem>>, %arg3: memref<32x128xf32, #tpu.memory_space<vmem>>, %arg4: memref<1x128xf32, #tpu.memory_space<vmem>>, %arg5: memref<256x32xf32, #tpu.memory_space<vmem>>, %arg6: memref<1x1x256xi32, #tpu.memory_space<vmem>>, %arg7: memref<1x1x1xf32, #tpu.memory_space<vmem>>) attributes {dimension_semantics = [#tpu.dimension_semantics<parallel>], iteration_bounds = array<i64: 1>, scalar_prefetch = 0 : i64, scratch_operands = 0 : i64, tpu.core_type = #tpu.core_type<tc>, window_params = [{transform_indices = @transform_0, window_bounds = array<i64: 256, 32>}, {pipeline_mode = #tpu.pipeline_mode<synchronous>, transform_indices = @transform_1, window_bounds = array<i64: 128, 32>}, {pipeline_mode = #tpu.pipeline_mode<synchronous>, transform_indices = @transform_2, window_bounds = array<i64: 32, 128>}, {pipeline_mode = #tpu.pipeline_mode<synchronous>, transform_indices = @transform_3, window_bounds = array<i64: 1, 128>}, {transform_indices = @transform_4, window_bounds = array<i64: 256, 32>}, {transform_indices = @transform_5, window_bounds = array<i64: 1, 1, 256>}, {transform_indices = @transform_6, window_bounds = array<i64: 1, 1, 1>}]} {
    %c0 = arith.constant 0 : index
    %c0_0 = arith.constant 0 : index
    %0 = vector.load %arg1[%c0, %c0_0] : memref<256x32xf32, #tpu.memory_space<vmem>>, vector<256x32xf32>
    %c0_1 = arith.constant 0 : index
    %c0_2 = arith.constant 0 : index
    %1 = vector.load %arg2[%c0_1, %c0_2] : memref<128x32xf32, #tpu.memory_space<vmem>>, vector<128x32xf32>
    %c0_3 = arith.constant 0 : index
    %c0_4 = arith.constant 0 : index
    %2 = vector.load %arg3[%c0_3, %c0_4] : memref<32x128xf32, #tpu.memory_space<vmem>>, vector<32x128xf32>
    %c0_5 = arith.constant 0 : index
    %c0_6 = arith.constant 0 : index
    %3 = vector.load %arg4[%c0_5, %c0_6] : memref<1x128xf32, #tpu.memory_space<vmem>>, vector<1x128xf32>
    %cst = arith.constant dense<0.000000e+00> : vector<256x128xf32>
    %4 = tpu.matmul %0, %2, %cst {dimension_numbers = #tpu.dot_dimension_numbers<[1], [0], [0], [1], [0, 0, 1, 1], [], []>} : vector<256x32xf32>, vector<32x128xf32>, vector<256x128xf32> -> vector<256x128xf32>
    %cst_7 = arith.constant 2.000000e+00 : f32
    %5 = vector.broadcast %cst_7 : f32 to vector<256x128xf32>
    %6 = arith.mulf %5, %4 : vector<256x128xf32>
    %7 = vector.broadcast %3 : vector<1x128xf32> to vector<256x128xf32>
    %8 = arith.subf %7, %6 : vector<256x128xf32>
    %9 = tpu.reduce_index %8 {axis = 1 : i32, kind = #tpu.reduction_kind<arg_min>} : vector<256x128xf32> -> vector<256xi32>
    %10 = vector.shape_cast %9 : vector<256xi32> to vector<256x1xi32>
    %11 = tpu.iota {dimensions = array<i32: 1>} : vector<256x128xi32>
    %12 = vector.broadcast %10 : vector<256x1xi32> to vector<256x128xi32>
    %13 = arith.cmpi eq, %12, %11 : vector<256x128xi32>
    %14 = arith.extui %13 : vector<256x128xi1> to vector<256x128xi32>
    %15 = arith.sitofp %14 : vector<256x128xi32> to vector<256x128xf32>
    %cst_8 = arith.constant dense<0.000000e+00> : vector<256x32xf32>
    %16 = tpu.matmul %15, %1, %cst_8 {dimension_numbers = #tpu.dot_dimension_numbers<[1], [0], [0], [1], [0, 0, 1, 1], [], []>} : vector<256x128xf32>, vector<128x32xf32>, vector<256x32xf32> -> vector<256x32xf32>
    %c0_9 = arith.constant 0 : index
    %c0_10 = arith.constant 0 : index
    %17 = vector.load %arg5[%c0_9, %c0_10] : memref<256x32xf32, #tpu.memory_space<vmem>>, vector<256x32xf32>
    tpu.vector_store %arg5[%c0_9, %c0_10], %16 {strides = array<i32>} : memref<256x32xf32, #tpu.memory_space<vmem>>, vector<256x32xf32>,
    %18 = vector.shape_cast %9 : vector<256xi32> to vector<1x1x256xi32>
    %c0_11 = arith.constant 0 : index
    %c0_12 = arith.constant 0 : index
    %c0_13 = arith.constant 0 : index
    %19 = vector.load %arg6[%c0_11, %c0_12, %c0_13] : memref<1x1x256xi32, #tpu.memory_space<vmem>>, vector<1x1x256xi32>
    tpu.vector_store %arg6[%c0_11, %c0_12, %c0_13], %18 {strides = array<i32>} : memref<1x1x256xi32, #tpu.memory_space<vmem>>, vector<1x1x256xi32>,
    %20 = arith.subf %16, %0 : vector<256x32xf32>
    %21 = arith.mulf %20, %20 : vector<256x32xf32>
    %22 = vector.shape_cast %21 : vector<256x32xf32> to vector<1x256x32xf32>
    %cst_14 = arith.constant dense<0.000000e+00> : vector<1xf32>
    %23 = vector.multi_reduction <add>, %22, %cst_14 [1, 2] : vector<1x256x32xf32> to vector<1xf32>
    %24 = vector.shape_cast %23 : vector<1xf32> to vector<1x1x1xf32>
    %25 = vector.extract %24[0, 0, 0] : f32 from vector<1x1x1xf32>
    %26 = vector.broadcast %25 : f32 to vector<1x1x1xf32>
    %c0_15 = arith.constant 0 : index
    %c0_16 = arith.constant 0 : index
    %c0_17 = arith.constant 0 : index
    %27 = vector.load %arg7[%c0_15, %c0_16, %c0_17] : memref<1x1x1xf32, #tpu.memory_space<vmem>>, vector<1x1x1xf32>
    tpu.vector_store %arg7[%c0_15, %c0_16, %c0_17], %26 {strides = array<i32>} : memref<1x1x1xf32, #tpu.memory_space<vmem>>, vector<1x1x1xf32>,
    return
  }
  func.func @transform_0(%arg0: i32) -> (i32, i32) {
    %c0_i32 = arith.constant 0 : i32
    %c0_i32_0 = arith.constant 0 : i32
    return %arg0, %c0_i32 : i32, i32
  }
  func.func @transform_1(%arg0: i32) -> (i32, i32) {
    %c0_i32 = arith.constant 0 : i32
    %c0_i32_0 = arith.constant 0 : i32
    %c0_i32_1 = arith.constant 0 : i32
    return %c0_i32, %c0_i32_0 : i32, i32
  }
  func.func @transform_2(%arg0: i32) -> (i32, i32) {
    %c0_i32 = arith.constant 0 : i32
    %c0_i32_0 = arith.constant 0 : i32
    %c0_i32_1 = arith.constant 0 : i32
    return %c0_i32, %c0_i32_0 : i32, i32
  }
  func.func @transform_3(%arg0: i32) -> (i32, i32) {
    %c0_i32 = arith.constant 0 : i32
    %c0_i32_0 = arith.constant 0 : i32
    %c0_i32_1 = arith.constant 0 : i32
    return %c0_i32, %c0_i32_0 : i32, i32
  }
  func.func @transform_4(%arg0: i32) -> (i32, i32) {
    %c0_i32 = arith.constant 0 : i32
    %c0_i32_0 = arith.constant 0 : i32
    return %arg0, %c0_i32 : i32, i32
  }
  func.func @transform_5(%arg0: i32) -> (i32, i32, i32) {
    %c0_i32 = arith.constant 0 : i32
    %c0_i32_0 = arith.constant 0 : i32
    %c0_i32_1 = arith.constant 0 : i32
    return %arg0, %c0_i32, %c0_i32_0 : i32, i32, i32
  }
  func.func @transform_6(%arg0: i32) -> (i32, i32, i32) {
    %c0_i32 = arith.constant 0 : i32
    %c0_i32_0 = arith.constant 0 : i32
    %c0_i32_1 = arith.constant 0 : i32
    return %arg0, %c0_i32, %c0_i32_0 : i32, i32, i32
  }
}

</mosaic_0001>

<llo_original>
// kernel: tpu_custom_call.1
$region0: #{tpu_custom_call.1}
  #allocation0 [shape = 'u32[]', space=smem, size = 0x4, offset = 0x4, fixed_abs, tag = 'smem constant byte address 0x4 - core index']
  #allocation1 [shape = 'u32[144,128]{1,0:T(1,128)}', space=vmem, size = 0x12000, scoped, tag = 'internal scratch']
  %s0 = inlined_call_operand.vmem [shape: f32[256,32], index: 0, kind: input, shape index: {}]
  %s1 = inlined_call_operand.vmem [shape: f32[128,32], index: 1, kind: input, shape index: {}]
  %s2 = inlined_call_operand.vmem [shape: f32[32,128], index: 2, kind: input, shape index: {}]
  %s3 = inlined_call_operand.vmem [shape: f32[1,128], index: 3, kind: input, shape index: {}]
  %s4 = inlined_call_operand.vmem [shape: f32[256,32], index: 4, kind: output, shape index: {0}]
  %s5 = inlined_call_operand.hbm [shape: s32[1,1,256], index: 5, kind: output, shape index: {1}]
  %s6 = inlined_call_operand.hbm [shape: f32[1,1,1], index: 6, kind: output, shape index: {2}]
  %7 = xla_tuple %s4, %s5, %s6
  %s8 = sld [smem:[#allocation0]]
  $region42: #{tpu_custom_call.1} parent=0
    _
  %s10 = ssub.s32 1, %s8
  %s11 = scalar_select 0, %s10, %s8
  $region1: #{tpu_custom_call.1} parent=0
    #allocation2 [shape = 'u8[1024]{0}', space=vmem, size = 0x400, scoped, tag = 'output window, operand 1, single buffered']
    #allocation3 [shape = 's32[1]{0}', space=sflag, size = 0x4, scoped, tag = 'scoped memory for tpu_custom_call.1']
    #allocation4 [shape = 'u8[512]{0}', space=vmem, size = 0x400, scoped, tag = 'output window, operand 2, single buffered']
    #allocation5 [shape = 's32[1]{0}', space=sflag, size = 0x4, scoped, tag = 'scoped memory for tpu_custom_call.1']
    %12 = vsyncpa [#allocation3], 0
    %13 = vsyncpa [#allocation5], 0
    // Predicated region
    $region2: #{tpu_custom_call.1} parent=1 // pred_check
      _
    $region3: #{tpu_custom_call.1} parent=1 // pred_check_branch
      %15 = sbr.rel (0) target = $region5
    $region4: #{tpu_custom_call.1} parent=1 // pred_region
      _
    $region5: #{tpu_custom_call.1} parent=1 // pred_fallthru
      _
    // Predicated region
    $region6: #{tpu_custom_call.1} parent=1 // pred_check
      _
    $region7: #{tpu_custom_call.1} parent=1 // pred_check_branch
      %17 = sbr.rel (0) target = $region9
    $region8: #{tpu_custom_call.1} parent=1 // pred_region
      _
    $region9: #{tpu_custom_call.1} parent=1 // pred_fallthru
      _
    // Predicated region
    $region10: #{tpu_custom_call.1} parent=1 // pred_check
      _
    $region11: #{tpu_custom_call.1} parent=1 // pred_check_branch
      %19 = sbr.rel (0) target = $region13
    $region12: #{tpu_custom_call.1} parent=1 // pred_region
      _
    $region13: #{tpu_custom_call.1} parent=1 // pred_fallthru
      _
    // Predicated region
    $region14: #{tpu_custom_call.1} parent=1 // pred_check
      _
    $region15: #{tpu_custom_call.1} parent=1 // pred_check_branch
      %21 = sbr.rel (0) target = $region17
    $region16: #{tpu_custom_call.1} parent=1 // pred_region
      _
    $region17: #{tpu_custom_call.1} parent=1 // pred_fallthru
      _
    %v22 = vld [vmem:[%s0] sm:$0xff]
    %v23 = vld [vmem:[%s0 + $0x8] sm:$0xff]
    %v24 = vld [vmem:[%s0 + $0x10] sm:$0xff]
    %v25 = vld [vmem:[%s0 + $0x18] sm:$0xff]
    %v26 = vld [vmem:[%s0 + $0x20] sm:$0xff]
    %v27 = vld [vmem:[%s0 + $0x28] sm:$0xff]
    %v28 = vld [vmem:[%s0 + $0x30] sm:$0xff]
    %v29 = vld [vmem:[%s0 + $0x38] sm:$0xff]
    %v30 = vld [vmem:[%s0 + $0x40] sm:$0xff]
    %v31 = vld [vmem:[%s0 + $0x48] sm:$0xff]
    %v32 = vld [vmem:[%s0 + $0x50] sm:$0xff]
    %v33 = vld [vmem:[%s0 + $0x58] sm:$0xff]
    %v34 = vld [vmem:[%s0 + $0x60] sm:$0xff]
    %v35 = vld [vmem:[%s0 + $0x68] sm:$0xff]
    %v36 = vld [vmem:[%s0 + $0x70] sm:$0xff]
    %v37 = vld [vmem:[%s0 + $0x78] sm:$0xff]
    %v38 = vld [vmem:[%s0 + $0x80] sm:$0xff]
    %v39 = vld [vmem:[%s0 + $0x88] sm:$0xff]
    %v40 = vld [vmem:[%s0 + $0x90] sm:$0xff]
    %v41 = vld [vmem:[%s0 + $0x98] sm:$0xff]
    %v42 = vld [vmem:[%s0 + $0xa0] sm:$0xff]
    %v43 = vld [vmem:[%s0 + $0xa8] sm:$0xff]
    %v44 = vld [vmem:[%s0 + $0xb0] sm:$0xff]
    %v45 = vld [vmem:[%s0 + $0xb8] sm:$0xff]
    %v46 = vld [vmem:[%s0 + $0xc0] sm:$0xff]
    %v47 = vld [vmem:[%s0 + $0xc8] sm:$0xff]
    %v48 = vld [vmem:[%s0 + $0xd0] sm:$0xff]
    %v49 = vld [vmem:[%s0 + $0xd8] sm:$0xff]
    %v50 = vld [vmem:[%s0 + $0xe0] sm:$0xff]
    %v51 = vld [vmem:[%s0 + $0xe8] sm:$0xff]
    %v52 = vld [vmem:[%s0 + $0xf0] sm:$0xff]
    %v53 = vld [vmem:[%s0 + $0xf8] sm:$0xff]
    %v54 = vld [vmem:[%s1] sm:$0xff]
    %v55 = vld [vmem:[%s1 + $0x8] sm:$0xff]
    %v56 = vld [vmem:[%s1 + $0x10] sm:$0xff]
    %v57 = vld [vmem:[%s1 + $0x18] sm:$0xff]
    %v58 = vld [vmem:[%s1 + $0x20] sm:$0xff]
    %v59 = vld [vmem:[%s1 + $0x28] sm:$0xff]
    %v60 = vld [vmem:[%s1 + $0x30] sm:$0xff]
    %v61 = vld [vmem:[%s1 + $0x38] sm:$0xff]
    %v62 = vld [vmem:[%s1 + $0x40] sm:$0xff]
    %v63 = vld [vmem:[%s1 + $0x48] sm:$0xff]
    %v64 = vld [vmem:[%s1 + $0x50] sm:$0xff]
    %v65 = vld [vmem:[%s1 + $0x58] sm:$0xff]
    %v66 = vld [vmem:[%s1 + $0x60] sm:$0xff]
    %v67 = vld [vmem:[%s1 + $0x68] sm:$0xff]
    %v68 = vld [vmem:[%s1 + $0x70] sm:$0xff]
    %v69 = vld [vmem:[%s1 + $0x78] sm:$0xff]
    %v70 = vld [vmem:[%s2] sm:$0xff]
    %v71 = vld [vmem:[%s2 + $0x8] sm:$0xff]
    %v72 = vld [vmem:[%s2 + $0x10] sm:$0xff]
    %v73 = vld [vmem:[%s2 + $0x18] sm:$0xff]
    %v74 = vld [vmem:[%s3] sm:$0x1]
    %vm75 = vcmask 261120
    %v77 = vsel %vm75, %v22, 0
    %v80 = vsel %vm75, %v23, 0
    %v83 = vsel %vm75, %v24, 0
    %v86 = vsel %vm75, %v25, 0
    %v89 = vsel %vm75, %v26, 0
    %v92 = vsel %vm75, %v27, 0
    %v95 = vsel %vm75, %v28, 0
    %v98 = vsel %vm75, %v29, 0
    %v101 = vsel %vm75, %v30, 0
    %v104 = vsel %vm75, %v31, 0
    %v107 = vsel %vm75, %v32, 0
    %v110 = vsel %vm75, %v33, 0
    %v113 = vsel %vm75, %v34, 0
    %v116 = vsel %vm75, %v35, 0
    %v119 = vsel %vm75, %v36, 0
    %v122 = vsel %vm75, %v37, 0
    %v125 = vsel %vm75, %v38, 0
    %v128 = vsel %vm75, %v39, 0
    %v131 = vsel %vm75, %v40, 0
    %v134 = vsel %vm75, %v41, 0
    %v137 = vsel %vm75, %v42, 0
    %v140 = vsel %vm75, %v43, 0
    %v143 = vsel %vm75, %v44, 0
    %v146 = vsel %vm75, %v45, 0
    %v149 = vsel %vm75, %v46, 0
    %v152 = vsel %vm75, %v47, 0
    %v155 = vsel %vm75, %v48, 0
    %v158 = vsel %vm75, %v49, 0
    %v161 = vsel %vm75, %v50, 0
    %v164 = vsel %vm75, %v51, 0
    %v167 = vsel %vm75, %v52, 0
    %v170 = vsel %vm75, %v53, 0
    %172 = vmatprep.subr.mxu0 0.0
    %173 = vmatpush1.msra.mxu0 %v70
    %174 = vmatprep.subr.mxu0 0.0
    %175 = vmatpush1.msra.mxu0 %v71
    %176 = vmatprep.subr.mxu0 0.0
    %177 = vmatpush1.msra.mxu0 %v72
    %178 = vmatprep.subr.mxu0 0.0
    %179 = vmatpush1.msra.mxu0 %v73
    %180 = vmatprep.subr.mxu0 0.0
    %181 = vmatpush1.msra.mxu0 0.0
    %182 = vmatprep.subr.mxu0 0.0
    %183 = vmatpush1.msra.mxu0 0.0
    %184 = vmatprep.subr.mxu0 0.0
    %185 = vmatpush1.msra.mxu0 0.0
    %186 = vmatprep.subr.mxu0 0.0
    %187 = vmatpush1.msra.mxu0 0.0
    %188 = vmatprep.subr.mxu0 0.0
    %189 = vmatpush1.msra.mxu0 0.0
    %190 = vmatprep.subr.mxu0 0.0
    %191 = vmatpush1.msra.mxu0 0.0
    %192 = vmatprep.subr.mxu0 0.0
    %193 = vmatpush1.msra.mxu0 0.0
    %194 = vmatprep.subr.mxu0 0.0
    %195 = vmatpush1.msra.mxu0 0.0
    %196 = vmatprep.subr.mxu0 0.0
    %197 = vmatpush1.msra.mxu0 0.0
    %198 = vmatprep.subr.mxu0 0.0
    %199 = vmatpush1.msra.mxu0 0.0
    %200 = vmatprep.subr.mxu0 0.0
    %201 = vmatpush1.msra.mxu0 0.0
    %202 = vmatprep.subr.mxu0 0.0
    %203 = vmatpush1.msra.mxu0 0.0
    %204 = vmatprep.subr.mxu0 0.0
    %205 = vmatpush1.msra.mxu0 0.0
    %206 = vmatprep.subr.mxu0 0.0
    %207 = vmatpush1.msra.mxu0 0.0
    %208 = vmatprep.subr.mxu0 0.0
    %209 = vmatpush1.msra.mxu0 0.0
    %210 = vmatprep.subr.mxu0 0.0
    %211 = vmatpush1.msra.mxu0 0.0
    %212 = vmatprep.subr.mxu0 0.0
    %213 = vmatpush1.msra.mxu0 0.0
    %214 = vmatprep.subr.mxu0 0.0
    %215 = vmatpush1.msra.mxu0 0.0
    %216 = vmatprep.subr.mxu0 0.0
    %217 = vmatpush1.msra.mxu0 0.0
    %218 = vmatprep.subr.mxu0 0.0
    %219 = vmatpush1.msra.mxu0 0.0
    %220 = vmatprep.subr.mxu0 0.0
    %221 = vmatpush1.msra.mxu0 0.0
    %222 = vmatprep.subr.mxu0 0.0
    %223 = vmatpush1.msra.mxu0 0.0
    %224 = vmatprep.subr.mxu0 0.0
    %225 = vmatpush1.msra.mxu0 0.0
    %226 = vmatprep.subr.mxu0 0.0
    %227 = vmatpush1.msra.mxu0 0.0
    %228 = vmatprep.subr.mxu0 0.0
    %229 = vmatpush1.msra.mxu0 0.0
    %230 = vmatprep.subr.mxu0 0.0
    %231 = vmatpush1.msra.mxu0 0.0
    %232 = vmatprep.subr.mxu0 0.0
    %233 = vmatpush1.msra.mxu0 0.0
    %234 = vmatprep.subr.mxu0 0.0
    %235 = vmatpush1.msra.mxu0 0.0
    %236 = vmatprep.mubr.f32.mxu0 0.0
    %237 = vmatmul.mubr.f32.gmra.mrb[0].mxu0 %v77
    %v238 = vpop.f32.mrb[0].mxu0
    %v239 = vadd.f32 0.0, %v238
    %v240 = vpop.f32.mrb[0].mxu0
    %241 = vmatprep.mubr.f32.mxu0 0.0
    %242 = vmatmul.mubr.f32.gmra.mrb[0].mxu0 %v80
    %v243 = vpop.f32.mrb[0].mxu0
    %v244 = vadd.f32 0.0, %v243
    %v245 = vpop.f32.mrb[0].mxu0
    %246 = vmatprep.mubr.f32.mxu0 0.0
    %247 = vmatmul.mubr.f32.gmra.mrb[0].mxu0 %v83
    %v248 = vpop.f32.mrb[0].mxu0
    %v249 = vadd.f32 0.0, %v248
    %v250 = vpop.f32.mrb[0].mxu0
    %251 = vmatprep.mubr.f32.mxu0 0.0
    %252 = vmatmul.mubr.f32.gmra.mrb[0].mxu0 %v86
    %v253 = vpop.f32.mrb[0].mxu0
    %v254 = vadd.f32 0.0, %v253
    %v255 = vpop.f32.mrb[0].mxu0
    %256 = vmatprep.mubr.f32.mxu0 0.0
    %257 = vmatmul.mubr.f32.gmra.mrb[0].mxu0 %v89
    %v258 = vpop.f32.mrb[0].mxu0
    %v259 = vadd.f32 0.0, %v258
    %v260 = vpop.f32.mrb[0].mxu0
    %261 = vmatprep.mubr.f32.mxu0 0.0
    %262 = vmatmul.mubr.f32.gmra.mrb[0].mxu0 %v92
    %v263 = vpop.f32.mrb[0].mxu0
    %v264 = vadd.f32 0.0, %v263
    %v265 = vpop.f32.mrb[0].mxu0
    %266 = vmatprep.mubr.f32.mxu0 0.0
    %267 = vmatmul.mubr.f32.gmra.mrb[0].mxu0 %v95
    %v268 = vpop.f32.mrb[0].mxu0
    %v269 = vadd.f32 0.0, %v268
    %v270 = vpop.f32.mrb[0].mxu0
    %271 = vmatprep.mubr.f32.mxu0 0.0
    %272 = vmatmul.mubr.f32.gmra.mrb[0].mxu0 %v98
    %v273 = vpop.f32.mrb[0].mxu0
    %v274 = vadd.f32 0.0, %v273
    %v275 = vpop.f32.mrb[0].mxu0
    %276 = vmatprep.mubr.f32.mxu0 0.0
    %277 = vmatmul.mubr.f32.gmra.mrb[0].mxu0 %v101
    %v278 = vpop.f32.mrb[0].mxu0
    %v279 = vadd.f32 0.0, %v278
    %v280 = vpop.f32.mrb[0].mxu0
    %281 = vmatprep.mubr.f32.mxu0 0.0
    %282 = vmatmul.mubr.f32.gmra.mrb[0].mxu0 %v104
    %v283 = vpop.f32.mrb[0].mxu0
    %v284 = vadd.f32 0.0, %v283
    %v285 = vpop.f32.mrb[0].mxu0
    %286 = vmatprep.mubr.f32.mxu0 0.0
    %287 = vmatmul.mubr.f32.gmra.mrb[0].mxu0 %v107
    %v288 = vpop.f32.mrb[0].mxu0
    %v289 = vadd.f32 0.0, %v288
    %v290 = vpop.f32.mrb[0].mxu0
    %291 = vmatprep.mubr.f32.mxu0 0.0
    %292 = vmatmul.mubr.f32.gmra.mrb[0].mxu0 %v110
    %v293 = vpop.f32.mrb[0].mxu0
    %v294 = vadd.f32 0.0, %v293
    %v295 = vpop.f32.mrb[0].mxu0
    %296 = vmatprep.mubr.f32.mxu0 0.0
    %297 = vmatmul.mubr.f32.gmra.mrb[0].mxu0 %v113
    %v298 = vpop.f32.mrb[0].mxu0
    %v299 = vadd.f32 0.0, %v298
    %v300 = vpop.f32.mrb[0].mxu0
    %301 = vmatprep.mubr.f32.mxu0 0.0
    %302 = vmatmul.mubr.f32.gmra.mrb[0].mxu0 %v116
    %v303 = vpop.f32.mrb[0].mxu0
    %v304 = vadd.f32 0.0, %v303
    %v305 = vpop.f32.mrb[0].mxu0
    %306 = vmatprep.mubr.f32.mxu0 0.0
    %307 = vmatmul.mubr.f32.gmra.mrb[0].mxu0 %v119
    %v308 = vpop.f32.mrb[0].mxu0
    %v309 = vadd.f32 0.0, %v308
    %v310 = vpop.f32.mrb[0].mxu0
    %311 = vmatprep.mubr.f32.mxu0 0.0
    %312 = vmatmul.mubr.f32.gmra.mrb[0].mxu0 %v122
    %v313 = vpop.f32.mrb[0].mxu0
    %v314 = vadd.f32 0.0, %v313
    %v315 = vpop.f32.mrb[0].mxu0
    %316 = vmatprep.mubr.f32.mxu0 0.0
    %317 = vmatmul.mubr.f32.gmra.mrb[0].mxu0 %v125
    %v318 = vpop.f32.mrb[0].mxu0
    %v319 = vadd.f32 0.0, %v318
    %v320 = vpop.f32.mrb[0].mxu0
    %321 = vmatprep.mubr.f32.mxu0 0.0
    %322 = vmatmul.mubr.f32.gmra.mrb[0].mxu0 %v128
    %v323 = vpop.f32.mrb[0].mxu0
    %v324 = vadd.f32 0.0, %v323
    %v325 = vpop.f32.mrb[0].mxu0
    %326 = vmatprep.mubr.f32.mxu0 0.0
    %327 = vmatmul.mubr.f32.gmra.mrb[0].mxu0 %v131
    %v328 = vpop.f32.mrb[0].mxu0
    %v329 = vadd.f32 0.0, %v328
    %v330 = vpop.f32.mrb[0].mxu0
    %331 = vmatprep.mubr.f32.mxu0 0.0
    %332 = vmatmul.mubr.f32.gmra.mrb[0].mxu0 %v134
    %v333 = vpop.f32.mrb[0].mxu0
    %v334 = vadd.f32 0.0, %v333
    %v335 = vpop.f32.mrb[0].mxu0
    %336 = vmatprep.mubr.f32.mxu0 0.0
    %337 = vmatmul.mubr.f32.gmra.mrb[0].mxu0 %v137
    %v338 = vpop.f32.mrb[0].mxu0
    %v339 = vadd.f32 0.0, %v338
    %v340 = vpop.f32.mrb[0].mxu0
    %341 = vmatprep.mubr.f32.mxu0 0.0
    %342 = vmatmul.mubr.f32.gmra.mrb[0].mxu0 %v140
    %v343 = vpop.f32.mrb[0].mxu0
    %v344 = vadd.f32 0.0, %v343
    %v345 = vpop.f32.mrb[0].mxu0
    %346 = vmatprep.mubr.f32.mxu0 0.0
    %347 = vmatmul.mubr.f32.gmra.mrb[0].mxu0 %v143
    %v348 = vpop.f32.mrb[0].mxu0
    %v349 = vadd.f32 0.0, %v348
    %v350 = vpop.f32.mrb[0].mxu0
    %351 = vmatprep.mubr.f32.mxu0 0.0
    %352 = vmatmul.mubr.f32.gmra.mrb[0].mxu0 %v146
    %v353 = vpop.f32.mrb[0].mxu0
    %v354 = vadd.f32 0.0, %v353
    %v355 = vpop.f32.mrb[0].mxu0
    %356 = vmatprep.mubr.f32.mxu0 0.0
    %357 = vmatmul.mubr.f32.gmra.mrb[0].mxu0 %v149
    %v358 = vpop.f32.mrb[0].mxu0
    %v359 = vadd.f32 0.0, %v358
    %v360 = vpop.f32.mrb[0].mxu0
    %361 = vmatprep.mubr.f32.mxu0 0.0
    %362 = vmatmul.mubr.f32.gmra.mrb[0].mxu0 %v152
    %v363 = vpop.f32.mrb[0].mxu0
    %v364 = vadd.f32 0.0, %v363
    %v365 = vpop.f32.mrb[0].mxu0
    %366 = vmatprep.mubr.f32.mxu0 0.0
    %367 = vmatmul.mubr.f32.gmra.mrb[0].mxu0 %v155
    %v368 = vpop.f32.mrb[0].mxu0
    %v369 = vadd.f32 0.0, %v368
    %v370 = vpop.f32.mrb[0].mxu0
    %371 = vmatprep.mubr.f32.mxu0 0.0
    %372 = vmatmul.mubr.f32.gmra.mrb[0].mxu0 %v158
    %v373 = vpop.f32.mrb[0].mxu0
    %v374 = vadd.f32 0.0, %v373
    %v375 = vpop.f32.mrb[0].mxu0
    %376 = vmatprep.mubr.f32.mxu0 0.0
    %377 = vmatmul.mubr.f32.gmra.mrb[0].mxu0 %v161
    %v378 = vpop.f32.mrb[0].mxu0
    %v379 = vadd.f32 0.0, %v378
    %v380 = vpop.f32.mrb[0].mxu0
    %381 = vmatprep.mubr.f32.mxu0 0.0
    %382 = vmatmul.mubr.f32.gmra.mrb[0].mxu0 %v164
    %v383 = vpop.f32.mrb[0].mxu0
    %v384 = vadd.f32 0.0, %v383
    %v385 = vpop.f32.mrb[0].mxu0
    %386 = vmatprep.mubr.f32.mxu0 0.0
    %387 = vmatmul.mubr.f32.gmra.mrb[0].mxu0 %v167
    %v388 = vpop.f32.mrb[0].mxu0
    %v389 = vadd.f32 0.0, %v388
    %v390 = vpop.f32.mrb[0].mxu0
    %391 = vmatprep.mubr.f32.mxu0 0.0
    %392 = vmatmul.mubr.f32.gmra.mrb[0].mxu0 %v170
    %v393 = vpop.f32.mrb[0].mxu0
    %v394 = vadd.f32 0.0, %v393
    %v395 = vpop.f32.mrb[0].mxu0
    %396 = vdwg.mxu0
    %v397 = vmul.f32 %v239, 2.0
    %v398 = vmul.f32 %v244, 2.0
    %v399 = vmul.f32 %v249, 2.0
    %v400 = vmul.f32 %v254, 2.0
    %v401 = vmul.f32 %v259, 2.0
    %v402 = vmul.f32 %v264, 2.0
    %v403 = vmul.f32 %v269, 2.0
    %v404 = vmul.f32 %v274, 2.0
    %v405 = vmul.f32 %v279, 2.0
    %v406 = vmul.f32 %v284, 2.0
    %v407 = vmul.f32 %v289, 2.0
    %v408 = vmul.f32 %v294, 2.0
    %v409 = vmul.f32 %v299, 2.0
    %v410 = vmul.f32 %v304, 2.0
    %v411 = vmul.f32 %v309, 2.0
    %v412 = vmul.f32 %v314, 2.0
    %v413 = vmul.f32 %v319, 2.0
    %v414 = vmul.f32 %v324, 2.0
    %v415 = vmul.f32 %v329, 2.0
    %v416 = vmul.f32 %v334, 2.0
    %v417 = vmul.f32 %v339, 2.0
    %v418 = vmul.f32 %v344, 2.0
    %v419 = vmul.f32 %v349, 2.0
    %v420 = vmul.f32 %v354, 2.0
    %v421 = vmul.f32 %v359, 2.0
    %v422 = vmul.f32 %v364, 2.0
    %v423 = vmul.f32 %v369, 2.0
    %v424 = vmul.f32 %v374, 2.0
    %v425 = vmul.f32 %v379, 2.0
    %v426 = vmul.f32 %v384, 2.0
    %v427 = vmul.f32 %v389, 2.0
    %v428 = vmul.f32 %v394, 2.0
    %v430 = vlaneseq
    %v431 = vshrl.u32 %v430, 7
    %v432 = vsub.s32 0, %v431
    %v433 = vrot.slane %v74, %v432
    %v435 = vsub.f32 %v433, %v397
    %v436 = vsub.f32 %v433, %v398
    %v437 = vsub.f32 %v433, %v399
    %v438 = vsub.f32 %v433, %v400
    %v439 = vsub.f32 %v433, %v401
    %v440 = vsub.f32 %v433, %v402
    %v441 = vsub.f32 %v433, %v403
    %v442 = vsub.f32 %v433, %v404
    %v443 = vsub.f32 %v433, %v405
    %v444 = vsub.f32 %v433, %v406
    %v445 = vsub.f32 %v433, %v407
    %v446 = vsub.f32 %v433, %v408
    %v447 = vsub.f32 %v433, %v409
    %v448 = vsub.f32 %v433, %v410
    %v449 = vsub.f32 %v433, %v411
    %v450 = vsub.f32 %v433, %v412
    %v451 = vsub.f32 %v433, %v413
    %v452 = vsub.f32 %v433, %v414
    %v453 = vsub.f32 %v433, %v415
    %v454 = vsub.f32 %v433, %v416
    %v455 = vsub.f32 %v433, %v417
    %v456 = vsub.f32 %v433, %v418
    %v457 = vsub.f32 %v433, %v419
    %v458 = vsub.f32 %v433, %v420
    %v459 = vsub.f32 %v433, %v421
    %v460 = vsub.f32 %v433, %v422
    %v461 = vsub.f32 %v433, %v423
    %v462 = vsub.f32 %v433, %v424
    %v463 = vsub.f32 %v433, %v425
    %v464 = vsub.f32 %v433, %v426
    %v465 = vsub.f32 %v433, %v427
    %v466 = vsub.f32 %v433, %v428
    %467 = vmin.index.xlane.f32.xlu0 %v435
    %v468 = vpop.xlane.xlu0 %467
    %469 = vmin.index.xlane.f32.xlu0 %v436
    %v470 = vpop.xlane.xlu0 %469
    %471 = vmin.index.xlane.f32.xlu0 %v437
    %v472 = vpop.xlane.xlu0 %471
    %473 = vmin.index.xlane.f32.xlu0 %v438
    %v474 = vpop.xlane.xlu0 %473
    %475 = vmin.index.xlane.f32.xlu0 %v439
    %v476 = vpop.xlane.xlu0 %475
    %477 = vmin.index.xlane.f32.xlu0 %v440
    %v478 = vpop.xlane.xlu0 %477
    %479 = vmin.index.xlane.f32.xlu0 %v441
    %v480 = vpop.xlane.xlu0 %479
    %481 = vmin.index.xlane.f32.xlu0 %v442
    %v482 = vpop.xlane.xlu0 %481
    %483 = vmin.index.xlane.f32.xlu0 %v443
    %v484 = vpop.xlane.xlu0 %483
    %485 = vmin.index.xlane.f32.xlu0 %v444
    %v486 = vpop.xlane.xlu0 %485
    %487 = vmin.index.xlane.f32.xlu0 %v445
    %v488 = vpop.xlane.xlu0 %487
    %489 = vmin.index.xlane.f32.xlu0 %v446
    %v490 = vpop.xlane.xlu0 %489
    %491 = vmin.index.xlane.f32.xlu0 %v447
    %v492 = vpop.xlane.xlu0 %491
    %493 = vmin.index.xlane.f32.xlu0 %v448
    %v494 = vpop.xlane.xlu0 %493
    %495 = vmin.index.xlane.f32.xlu0 %v449
    %v496 = vpop.xlane.xlu0 %495
    %497 = vmin.index.xlane.f32.xlu0 %v450
    %v498 = vpop.xlane.xlu0 %497
    %499 = vmin.index.xlane.f32.xlu0 %v451
    %v500 = vpop.xlane.xlu0 %499
    %501 = vmin.index.xlane.f32.xlu0 %v452
    %v502 = vpop.xlane.xlu0 %501
    %503 = vmin.index.xlane.f32.xlu0 %v453
    %v504 = vpop.xlane.xlu0 %503
    %505 = vmin.index.xlane.f32.xlu0 %v454
    %v506 = vpop.xlane.xlu0 %505
    %507 = vmin.index.xlane.f32.xlu0 %v455
    %v508 = vpop.xlane.xlu0 %507
    %509 = vmin.index.xlane.f32.xlu0 %v456
    %v510 = vpop.xlane.xlu0 %509
    %511 = vmin.index.xlane.f32.xlu0 %v457
    %v512 = vpop.xlane.xlu0 %511
    %513 = vmin.index.xlane.f32.xlu0 %v458
    %v514 = vpop.xlane.xlu0 %513
    %515 = vmin.index.xlane.f32.xlu0 %v459
    %v516 = vpop.xlane.xlu0 %515
    %517 = vmin.index.xlane.f32.xlu0 %v460
    %v518 = vpop.xlane.xlu0 %517
    %519 = vmin.index.xlane.f32.xlu0 %v461
    %v520 = vpop.xlane.xlu0 %519
    %521 = vmin.index.xlane.f32.xlu0 %v462
    %v522 = vpop.xlane.xlu0 %521
    %523 = vmin.index.xlane.f32.xlu0 %v463
    %v524 = vpop.xlane.xlu0 %523
    %525 = vmin.index.xlane.f32.xlu0 %v464
    %v526 = vpop.xlane.xlu0 %525
    %527 = vmin.index.xlane.f32.xlu0 %v465
    %v528 = vpop.xlane.xlu0 %527
    %529 = vmin.index.xlane.f32.xlu0 %v466
    %v530 = vpop.xlane.xlu0 %529
    %v531 = vlaneseq
    %v532 = vand.u32 %v531, 127
    %vm533 = vcmp.eq.s32.totalorder %v468, %v532
    %vm534 = vcmp.eq.s32.totalorder %v470, %v532
    %vm535 = vcmp.eq.s32.totalorder %v472, %v532
    %vm536 = vcmp.eq.s32.totalorder %v474, %v532
    %vm537 = vcmp.eq.s32.totalorder %v476, %v532
    %vm538 = vcmp.eq.s32.totalorder %v478, %v532
    %vm539 = vcmp.eq.s32.totalorder %v480, %v532
    %vm540 = vcmp.eq.s32.totalorder %v482, %v532
    %vm541 = vcmp.eq.s32.totalorder %v484, %v532
    %vm542 = vcmp.eq.s32.totalorder %v486, %v532
    %vm543 = vcmp.eq.s32.totalorder %v488, %v532
    %vm544 = vcmp.eq.s32.totalorder %v490, %v532
    %vm545 = vcmp.eq.s32.totalorder %v492, %v532
    %vm546 = vcmp.eq.s32.totalorder %v494, %v532
    %vm547 = vcmp.eq.s32.totalorder %v496, %v532
    %vm548 = vcmp.eq.s32.totalorder %v498, %v532
    %vm549 = vcmp.eq.s32.totalorder %v500, %v532
    %vm550 = vcmp.eq.s32.totalorder %v502, %v532
    %vm551 = vcmp.eq.s32.totalorder %v504, %v532
    %vm552 = vcmp.eq.s32.totalorder %v506, %v532
    %vm553 = vcmp.eq.s32.totalorder %v508, %v532
    %vm554 = vcmp.eq.s32.totalorder %v510, %v532
    %vm555 = vcmp.eq.s32.totalorder %v512, %v532
    %vm556 = vcmp.eq.s32.totalorder %v514, %v532
    %vm557 = vcmp.eq.s32.totalorder %v516, %v532
    %vm558 = vcmp.eq.s32.totalorder %v518, %v532
    %vm559 = vcmp.eq.s32.totalorder %v520, %v532
    %vm560 = vcmp.eq.s32.totalorder %v522, %v532
    %vm561 = vcmp.eq.s32.totalorder %v524, %v532
    %vm562 = vcmp.eq.s32.totalorder %v526, %v532
    %vm563 = vcmp.eq.s32.totalorder %v528, %v532
    %vm564 = vcmp.eq.s32.totalorder %v530, %v532
    %v565 = vsel %vm533, 1, 0
    %v566 = vsel %vm534, 1, 0
    %v567 = vsel %vm535, 1, 0
    %v568 = vsel %vm536, 1, 0
    %v569 = vsel %vm537, 1, 0
    %v570 = vsel %vm538, 1, 0
    %v571 = vsel %vm539, 1, 0
    %v572 = vsel %vm540, 1, 0
    %v573 = vsel %vm541, 1, 0
    %v574 = vsel %vm542, 1, 0
    %v575 = vsel %vm543, 1, 0
    %v576 = vsel %vm544, 1, 0
    %v577 = vsel %vm545, 1, 0
    %v578 = vsel %vm546, 1, 0
    %v579 = vsel %vm547, 1, 0
    %v580 = vsel %vm548, 1, 0
    %v581 = vsel %vm549, 1, 0
    %v582 = vsel %vm550, 1, 0
    %v583 = vsel %vm551, 1, 0
    %v584 = vsel %vm552, 1, 0
    %v585 = vsel %vm553, 1, 0
    %v586 = vsel %vm554, 1, 0
    %v587 = vsel %vm555, 1, 0
    %v588 = vsel %vm556, 1, 0
    %v589 = vsel %vm557, 1, 0
    %v590 = vsel %vm558, 1, 0
    %v591 = vsel %vm559, 1, 0
    %v592 = vsel %vm560, 1, 0
    %v593 = vsel %vm561, 1, 0
    %v594 = vsel %vm562, 1, 0
    %v595 = vsel %vm563, 1, 0
    %v596 = vsel %vm564, 1, 0
    %v597 = vcvt.s32.f32 %v565
    %v598 = vcvt.s32.f32 %v566
    %v599 = vcvt.s32.f32 %v567
    %v600 = vcvt.s32.f32 %v568
    %v601 = vcvt.s32.f32 %v569
    %v602 = vcvt.s32.f32 %v570
    %v603 = vcvt.s32.f32 %v571
    %v604 = vcvt.s32.f32 %v572
    %v605 = vcvt.s32.f32 %v573
    %v606 = vcvt.s32.f32 %v574
    %v607 = vcvt.s32.f32 %v575
    %v608 = vcvt.s32.f32 %v576
    %v609 = vcvt.s32.f32 %v577
    %v610 = vcvt.s32.f32 %v578
    %v611 = vcvt.s32.f32 %v579
    %v612 = vcvt.s32.f32 %v580
    %v613 = vcvt.s32.f32 %v581
    %v614 = vcvt.s32.f32 %v582
    %v615 = vcvt.s32.f32 %v583
    %v616 = vcvt.s32.f32 %v584
    %v617 = vcvt.s32.f32 %v585
    %v618 = vcvt.s32.f32 %v586
    %v619 = vcvt.s32.f32 %v587
    %v620 = vcvt.s32.f32 %v588
    %v621 = vcvt.s32.f32 %v589
    %v622 = vcvt.s32.f32 %v590
    %v623 = vcvt.s32.f32 %v591
    %v624 = vcvt.s32.f32 %v592
    %v625 = vcvt.s32.f32 %v593
    %v626 = vcvt.s32.f32 %v594
    %v627 = vcvt.s32.f32 %v595
    %v628 = vcvt.s32.f32 %v596
    %629 = vmatprep.subr.mxu0 0.0
    %630 = vmatpush1.msra.mxu0 %v54
    %631 = vmatprep.subr.mxu0 0.0
    %632 = vmatpush1.msra.mxu0 %v55
    %633 = vmatprep.subr.mxu0 0.0
    %634 = vmatpush1.msra.mxu0 %v56
    %635 = vmatprep.subr.mxu0 0.0
    %636 = vmatpush1.msra.mxu0 %v57
    %637 = vmatprep.subr.mxu0 0.0
    %638 = vmatpush1.msra.mxu0 %v58
    %639 = vmatprep.subr.mxu0 0.0
    %640 = vmatpush1.msra.mxu0 %v59
    %641 = vmatprep.subr.mxu0 0.0
    %642 = vmatpush1.msra.mxu0 %v60
    %643 = vmatprep.subr.mxu0 0.0
    %644 = vmatpush1.msra.mxu0 %v61
    %645 = vmatprep.subr.mxu0 0.0
    %646 = vmatpush1.msra.mxu0 %v62
    %647 = vmatprep.subr.mxu0 0.0
    %648 = vmatpush1.msra.mxu0 %v63
    %649 = vmatprep.subr.mxu0 0.0
    %650 = vmatpush1.msra.mxu0 %v64
    %651 = vmatprep.subr.mxu0 0.0
    %652 = vmatpush1.msra.mxu0 %v65
    %653 = vmatprep.subr.mxu0 0.0
    %654 = vmatpush1.msra.mxu0 %v66
    %655 = vmatprep.subr.mxu0 0.0
    %656 = vmatpush1.msra.mxu0 %v67
    %657 = vmatprep.subr.mxu0 0.0
    %658 = vmatpush1.msra.mxu0 %v68
    %659 = vmatprep.subr.mxu0 0.0
    %660 = vmatpush1.msra.mxu0 %v69
    %661 = vmatprep.subr.mxu0 0.0
    %662 = vmatpush1.msra.mxu0 0.0
    %663 = vmatprep.subr.mxu0 0.0
    %664 = vmatpush1.msra.mxu0 0.0
    %665 = vmatprep.subr.mxu0 0.0
    %666 = vmatpush1.msra.mxu0 0.0
    %667 = vmatprep.subr.mxu0 0.0
    %668 = vmatpush1.msra.mxu0 0.0
    %669 = vmatprep.subr.mxu0 0.0
    %670 = vmatpush1.msra.mxu0 0.0
    %671 = vmatprep.subr.mxu0 0.0
    %672 = vmatpush1.msra.mxu0 0.0
    %673 = vmatprep.subr.mxu0 0.0
    %674 = vmatpush1.msra.mxu0 0.0
    %675 = vmatprep.subr.mxu0 0.0
    %676 = vmatpush1.msra.mxu0 0.0
    %677 = vmatprep.subr.mxu0 0.0
    %678 = vmatpush1.msra.mxu0 0.0
    %679 = vmatprep.subr.mxu0 0.0
    %680 = vmatpush1.msra.mxu0 0.0
    %681 = vmatprep.subr.mxu0 0.0
    %682 = vmatpush1.msra.mxu0 0.0
    %683 = vmatprep.subr.mxu0 0.0
    %684 = vmatpush1.msra.mxu0 0.0
    %685 = vmatprep.subr.mxu0 0.0
    %686 = vmatpush1.msra.mxu0 0.0
    %687 = vmatprep.subr.mxu0 0.0
    %688 = vmatpush1.msra.mxu0 0.0
    %689 = vmatprep.subr.mxu0 0.0
    %690 = vmatpush1.msra.mxu0 0.0
    %691 = vmatprep.subr.mxu0 0.0
    %692 = vmatpush1.msra.mxu0 0.0
    %693 = vmatprep.mubr.f32.mxu0 0.0
    %694 = vmatmul.mubr.f32.gmra.mrb[0].mxu0 %v597
    %v695 = vpop.f32.mrb[0].mxu0
    %v696 = vadd.f32 0.0, %v695
    %v697 = vpop.f32.mrb[0].mxu0
    %698 = vmatprep.mubr.f32.mxu0 0.0
    %699 = vmatmul.mubr.f32.gmra.mrb[0].mxu0 %v598
    %v700 = vpop.f32.mrb[0].mxu0
    %v701 = vadd.f32 0.0, %v700
    %v702 = vpop.f32.mrb[0].mxu0
    %703 = vmatprep.mubr.f32.mxu0 0.0
    %704 = vmatmul.mubr.f32.gmra.mrb[0].mxu0 %v599
    %v705 = vpop.f32.mrb[0].mxu0
    %v706 = vadd.f32 0.0, %v705
    %v707 = vpop.f32.mrb[0].mxu0
    %708 = vmatprep.mubr.f32.mxu0 0.0
    %709 = vmatmul.mubr.f32.gmra.mrb[0].mxu0 %v600
    %v710 = vpop.f32.mrb[0].mxu0
    %v711 = vadd.f32 0.0, %v710
    %v712 = vpop.f32.mrb[0].mxu0
    %713 = vmatprep.mubr.f32.mxu0 0.0
    %714 = vmatmul.mubr.f32.gmra.mrb[0].mxu0 %v601
    %v715 = vpop.f32.mrb[0].mxu0
    %v716 = vadd.f32 0.0, %v715
    %v717 = vpop.f32.mrb[0].mxu0
    %718 = vmatprep.mubr.f32.mxu0 0.0
    %719 = vmatmul.mubr.f32.gmra.mrb[0].mxu0 %v602
    %v720 = vpop.f32.mrb[0].mxu0
    %v721 = vadd.f32 0.0, %v720
    %v722 = vpop.f32.mrb[0].mxu0
    %723 = vmatprep.mubr.f32.mxu0 0.0
    %724 = vmatmul.mubr.f32.gmra.mrb[0].mxu0 %v603
    %v725 = vpop.f32.mrb[0].mxu0
    %v726 = vadd.f32 0.0, %v725
    %v727 = vpop.f32.mrb[0].mxu0
    %728 = vmatprep.mubr.f32.mxu0 0.0
    %729 = vmatmul.mubr.f32.gmra.mrb[0].mxu0 %v604
    %v730 = vpop.f32.mrb[0].mxu0
    %v731 = vadd.f32 0.0, %v730
    %v732 = vpop.f32.mrb[0].mxu0
    %733 = vmatprep.mubr.f32.mxu0 0.0
    %734 = vmatmul.mubr.f32.gmra.mrb[0].mxu0 %v605
    %v735 = vpop.f32.mrb[0].mxu0
    %v736 = vadd.f32 0.0, %v735
    %v737 = vpop.f32.mrb[0].mxu0
    %738 = vmatprep.mubr.f32.mxu0 0.0
    %739 = vmatmul.mubr.f32.gmra.mrb[0].mxu0 %v606
    %v740 = vpop.f32.mrb[0].mxu0
    %v741 = vadd.f32 0.0, %v740
    %v742 = vpop.f32.mrb[0].mxu0
    %743 = vmatprep.mubr.f32.mxu0 0.0
    %744 = vmatmul.mubr.f32.gmra.mrb[0].mxu0 %v607
    %v745 = vpop.f32.mrb[0].mxu0
    %v746 = vadd.f32 0.0, %v745
    %v747 = vpop.f32.mrb[0].mxu0
    %748 = vmatprep.mubr.f32.mxu0 0.0
    %749 = vmatmul.mubr.f32.gmra.mrb[0].mxu0 %v608
    %v750 = vpop.f32.mrb[0].mxu0
    %v751 = vadd.f32 0.0, %v750
    %v752 = vpop.f32.mrb[0].mxu0
    %753 = vmatprep.mubr.f32.mxu0 0.0
    %754 = vmatmul.mubr.f32.gmra.mrb[0].mxu0 %v609
    %v755 = vpop.f32.mrb[0].mxu0
    %v756 = vadd.f32 0.0, %v755
    %v757 = vpop.f32.mrb[0].mxu0
    %758 = vmatprep.mubr.f32.mxu0 0.0
    %759 = vmatmul.mubr.f32.gmra.mrb[0].mxu0 %v610
    %v760 = vpop.f32.mrb[0].mxu0
    %v761 = vadd.f32 0.0, %v760
    %v762 = vpop.f32.mrb[0].mxu0
    %763 = vmatprep.mubr.f32.mxu0 0.0
    %764 = vmatmul.mubr.f32.gmra.mrb[0].mxu0 %v611
    %v765 = vpop.f32.mrb[0].mxu0
    %v766 = vadd.f32 0.0, %v765
    %v767 = vpop.f32.mrb[0].mxu0
    %768 = vmatprep.mubr.f32.mxu0 0.0
    %769 = vmatmul.mubr.f32.gmra.mrb[0].mxu0 %v612
    %v770 = vpop.f32.mrb[0].mxu0
    %v771 = vadd.f32 0.0, %v770
    %v772 = vpop.f32.mrb[0].mxu0
    %773 = vmatprep.mubr.f32.mxu0 0.0
    %774 = vmatmul.mubr.f32.gmra.mrb[0].mxu0 %v613
    %v775 = vpop.f32.mrb[0].mxu0
    %v776 = vadd.f32 0.0, %v775
    %v777 = vpop.f32.mrb[0].mxu0
    %778 = vmatprep.mubr.f32.mxu0 0.0
    %779 = vmatmul.mubr.f32.gmra.mrb[0].mxu0 %v614
    %v780 = vpop.f32.mrb[0].mxu0
    %v781 = vadd.f32 0.0, %v780
    %v782 = vpop.f32.mrb[0].mxu0
    %783 = vmatprep.mubr.f32.mxu0 0.0
    %784 = vmatmul.mubr.f32.gmra.mrb[0].mxu0 %v615
    %v785 = vpop.f32.mrb[0].mxu0
    %v786 = vadd.f32 0.0, %v785
    %v787 = vpop.f32.mrb[0].mxu0
    %788 = vmatprep.mubr.f32.mxu0 0.0
    %789 = vmatmul.mubr.f32.gmra.mrb[0].mxu0 %v616
    %v790 = vpop.f32.mrb[0].mxu0
    %v791 = vadd.f32 0.0, %v790
    %v792 = vpop.f32.mrb[0].mxu0
    %793 = vmatprep.mubr.f32.mxu0 0.0
    %794 = vmatmul.mubr.f32.gmra.mrb[0].mxu0 %v617
    %v795 = vpop.f32.mrb[0].mxu0
    %v796 = vadd.f32 0.0, %v795
    %v797 = vpop.f32.mrb[0].mxu0
    %798 = vmatprep.mubr.f32.mxu0 0.0
    %799 = vmatmul.mubr.f32.gmra.mrb[0].mxu0 %v618
    %v800 = vpop.f32.mrb[0].mxu0
    %v801 = vadd.f32 0.0, %v800
    %v802 = vpop.f32.mrb[0].mxu0
    %803 = vmatprep.mubr.f32.mxu0 0.0
    %804 = vmatmul.mubr.f32.gmra.mrb[0].mxu0 %v619
    %v805 = vpop.f32.mrb[0].mxu0
    %v806 = vadd.f32 0.0, %v805
    %v807 = vpop.f32.mrb[0].mxu0
    %808 = vmatprep.mubr.f32.mxu0 0.0
    %809 = vmatmul.mubr.f32.gmra.mrb[0].mxu0 %v620
    %v810 = vpop.f32.mrb[0].mxu0
    %v811 = vadd.f32 0.0, %v810
    %v812 = vpop.f32.mrb[0].mxu0
    %813 = vmatprep.mubr.f32.mxu0 0.0
    %814 = vmatmul.mubr.f32.gmra.mrb[0].mxu0 %v621
    %v815 = vpop.f32.mrb[0].mxu0
    %v816 = vadd.f32 0.0, %v815
    %v817 = vpop.f32.mrb[0].mxu0
    %818 = vmatprep.mubr.f32.mxu0 0.0
    %819 = vmatmul.mubr.f32.gmra.mrb[0].mxu0 %v622
    %v820 = vpop.f32.mrb[0].mxu0
    %v821 = vadd.f32 0.0, %v820
    %v822 = vpop.f32.mrb[0].mxu0
    %823 = vmatprep.mubr.f32.mxu0 0.0
    %824 = vmatmul.mubr.f32.gmra.mrb[0].mxu0 %v623
    %v825 = vpop.f32.mrb[0].mxu0
    %v826 = vadd.f32 0.0, %v825
    %v827 = vpop.f32.mrb[0].mxu0
    %828 = vmatprep.mubr.f32.mxu0 0.0
    %829 = vmatmul.mubr.f32.gmra.mrb[0].mxu0 %v624
    %v830 = vpop.f32.mrb[0].mxu0
    %v831 = vadd.f32 0.0, %v830
    %v832 = vpop.f32.mrb[0].mxu0
    %833 = vmatprep.mubr.f32.mxu0 0.0
    %834 = vmatmul.mubr.f32.gmra.mrb[0].mxu0 %v625
    %v835 = vpop.f32.mrb[0].mxu0
    %v836 = vadd.f32 0.0, %v835
    %v837 = vpop.f32.mrb[0].mxu0
    %838 = vmatprep.mubr.f32.mxu0 0.0
    %839 = vmatmul.mubr.f32.gmra.mrb[0].mxu0 %v626
    %v840 = vpop.f32.mrb[0].mxu0
    %v841 = vadd.f32 0.0, %v840
    %v842 = vpop.f32.mrb[0].mxu0
    %843 = vmatprep.mubr.f32.mxu0 0.0
    %844 = vmatmul.mubr.f32.gmra.mrb[0].mxu0 %v627
    %v845 = vpop.f32.mrb[0].mxu0
    %v846 = vadd.f32 0.0, %v845
    %v847 = vpop.f32.mrb[0].mxu0
    %848 = vmatprep.mubr.f32.mxu0 0.0
    %849 = vmatmul.mubr.f32.gmra.mrb[0].mxu0 %v628
    %v850 = vpop.f32.mrb[0].mxu0
    %v851 = vadd.f32 0.0, %v850
    %v852 = vpop.f32.mrb[0].mxu0
    %853 = vdwg.mxu0
    %854 = vst.msk [vmem:[%s4] sm:$0xff] %vm75, %v696
    %855 = vst.msk [vmem:[%s4 + $0x8] sm:$0xff] %vm75, %v701
    %856 = vst.msk [vmem:[%s4 + $0x10] sm:$0xff] %vm75, %v706
    %857 = vst.msk [vmem:[%s4 + $0x18] sm:$0xff] %vm75, %v711
    %858 = vst.msk [vmem:[%s4 + $0x20] sm:$0xff] %vm75, %v716
    %859 = vst.msk [vmem:[%s4 + $0x28] sm:$0xff] %vm75, %v721
    %860 = vst.msk [vmem:[%s4 + $0x30] sm:$0xff] %vm75, %v726
    %861 = vst.msk [vmem:[%s4 + $0x38] sm:$0xff] %vm75, %v731
    %862 = vst.msk [vmem:[%s4 + $0x40] sm:$0xff] %vm75, %v736
    %863 = vst.msk [vmem:[%s4 + $0x48] sm:$0xff] %vm75, %v741
    %864 = vst.msk [vmem:[%s4 + $0x50] sm:$0xff] %vm75, %v746
    %865 = vst.msk [vmem:[%s4 + $0x58] sm:$0xff] %vm75, %v751
    %866 = vst.msk [vmem:[%s4 + $0x60] sm:$0xff] %vm75, %v756
    %867 = vst.msk [vmem:[%s4 + $0x68] sm:$0xff] %vm75, %v761
    %868 = vst.msk [vmem:[%s4 + $0x70] sm:$0xff] %vm75, %v766
    %869 = vst.msk [vmem:[%s4 + $0x78] sm:$0xff] %vm75, %v771
    %870 = vst.msk [vmem:[%s4 + $0x80] sm:$0xff] %vm75, %v776
    %871 = vst.msk [vmem:[%s4 + $0x88] sm:$0xff] %vm75, %v781
    %872 = vst.msk [vmem:[%s4 + $0x90] sm:$0xff] %vm75, %v786
    %873 = vst.msk [vmem:[%s4 + $0x98] sm:$0xff] %vm75, %v791
    %874 = vst.msk [vmem:[%s4 + $0xa0] sm:$0xff] %vm75, %v796
    %875 = vst.msk [vmem:[%s4 + $0xa8] sm:$0xff] %vm75, %v801
    %876 = vst.msk [vmem:[%s4 + $0xb0] sm:$0xff] %vm75, %v806
    %877 = vst.msk [vmem:[%s4 + $0xb8] sm:$0xff] %vm75, %v811
    %878 = vst.msk [vmem:[%s4 + $0xc0] sm:$0xff] %vm75, %v816
    %879 = vst.msk [vmem:[%s4 + $0xc8] sm:$0xff] %vm75, %v821
    %880 = vst.msk [vmem:[%s4 + $0xd0] sm:$0xff] %vm75, %v826
    %881 = vst.msk [vmem:[%s4 + $0xd8] sm:$0xff] %vm75, %v831
    %882 = vst.msk [vmem:[%s4 + $0xe0] sm:$0xff] %vm75, %v836
    %883 = vst.msk [vmem:[%s4 + $0xe8] sm:$0xff] %vm75, %v841
    %884 = vst.msk [vmem:[%s4 + $0xf0] sm:$0xff] %vm75, %v846
    %885 = vst.msk [vmem:[%s4 + $0xf8] sm:$0xff] %vm75, %v851
    %v886 = vlaneseq
    %v887 = vshrl.u32 %v886, 7
    %v888 = vsub.s32 0, %v887
    %v889 = vrot.slane %v468, %v888
    %v890 = vlaneseq
    %v891 = vshrl.u32 %v890, 7
    %v892 = vsub.s32 1, %v891
    %v893 = vrot.slane %v468, %v892
    %v894 = vlaneseq
    %v895 = vshrl.u32 %v894, 7
    %v896 = vsub.s32 2, %v895
    %v897 = vrot.slane %v468, %v896
    %v898 = vlaneseq
    %v899 = vshrl.u32 %v898, 7
    %v900 = vsub.s32 3, %v899
    %v901 = vrot.slane %v468, %v900
    %v902 = vlaneseq
    %v903 = vshrl.u32 %v902, 7
    %v904 = vsub.s32 4, %v903
    %v905 = vrot.slane %v468, %v904
    %v906 = vlaneseq
    %v907 = vshrl.u32 %v906, 7
    %v908 = vsub.s32 5, %v907
    %v909 = vrot.slane %v468, %v908
    %v910 = vlaneseq
    %v911 = vshrl.u32 %v910, 7
    %v912 = vsub.s32 6, %v911
    %v913 = vrot.slane %v468, %v912
    %v914 = vlaneseq
    %v915 = vshrl.u32 %v914, 7
    %v916 = vsub.s32 7, %v915
    %v917 = vrot.slane %v468, %v916
    %v918 = vlaneseq
    %v919 = vshrl.u32 %v918, 7
    %v920 = vsub.s32 0, %v919
    %v921 = vrot.slane %v470, %v920
    %v922 = vlaneseq
    %v923 = vshrl.u32 %v922, 7
    %v924 = vsub.s32 1, %v923
    %v925 = vrot.slane %v470, %v924
    %v926 = vlaneseq
    %v927 = vshrl.u32 %v926, 7
    %v928 = vsub.s32 2, %v927
    %v929 = vrot.slane %v470, %v928
    %v930 = vlaneseq
    %v931 = vshrl.u32 %v930, 7
    %v932 = vsub.s32 3, %v931
    %v933 = vrot.slane %v470, %v932
    %v934 = vlaneseq
    %v935 = vshrl.u32 %v934, 7
    %v936 = vsub.s32 4, %v935
    %v937 = vrot.slane %v470, %v936
    %v938 = vlaneseq
    %v939 = vshrl.u32 %v938, 7
    %v940 = vsub.s32 5, %v939
    %v941 = vrot.slane %v470, %v940
    %v942 = vlaneseq
    %v943 = vshrl.u32 %v942, 7
    %v944 = vsub.s32 6, %v943
    %v945 = vrot.slane %v470, %v944
    %v946 = vlaneseq
    %v947 = vshrl.u32 %v946, 7
    %v948 = vsub.s32 7, %v947
    %v949 = vrot.slane %v470, %v948
    %v950 = vlaneseq
    %v951 = vshrl.u32 %v950, 7
    %v952 = vsub.s32 0, %v951
    %v953 = vrot.slane %v472, %v952
    %v954 = vlaneseq
    %v955 = vshrl.u32 %v954, 7
    %v956 = vsub.s32 1, %v955
    %v957 = vrot.slane %v472, %v956
    %v958 = vlaneseq
    %v959 = vshrl.u32 %v958, 7
    %v960 = vsub.s32 2, %v959
    %v961 = vrot.slane %v472, %v960
    %v962 = vlaneseq
    %v963 = vshrl.u32 %v962, 7
    %v964 = vsub.s32 3, %v963
    %v965 = vrot.slane %v472, %v964
    %v966 = vlaneseq
    %v967 = vshrl.u32 %v966, 7
    %v968 = vsub.s32 4, %v967
    %v969 = vrot.slane %v472, %v968
    %v970 = vlaneseq
    %v971 = vshrl.u32 %v970, 7
    %v972 = vsub.s32 5, %v971
    %v973 = vrot.slane %v472, %v972
    %v974 = vlaneseq
    %v975 = vshrl.u32 %v974, 7
    %v976 = vsub.s32 6, %v975
    %v977 = vrot.slane %v472, %v976
    %v978 = vlaneseq
    %v979 = vshrl.u32 %v978, 7
    %v980 = vsub.s32 7, %v979
    %v981 = vrot.slane %v472, %v980
    %v982 = vlaneseq
    %v983 = vshrl.u32 %v982, 7
    %v984 = vsub.s32 0, %v983
    %v985 = vrot.slane %v474, %v984
    %v986 = vlaneseq
    %v987 = vshrl.u32 %v986, 7
    %v988 = vsub.s32 1, %v987
    %v989 = vrot.slane %v474, %v988
    %v990 = vlaneseq
    %v991 = vshrl.u32 %v990, 7
    %v992 = vsub.s32 2, %v991
    %v993 = vrot.slane %v474, %v992
    %v994 = vlaneseq
    %v995 = vshrl.u32 %v994, 7
    %v996 = vsub.s32 3, %v995
    %v997 = vrot.slane %v474, %v996
    %v998 = vlaneseq
    %v999 = vshrl.u32 %v998, 7
    %v1000 = vsub.s32 4, %v999
    %v1001 = vrot.slane %v474, %v1000
    %v1002 = vlaneseq
    %v1003 = vshrl.u32 %v1002, 7
    %v1004 = vsub.s32 5, %v1003
    %v1005 = vrot.slane %v474, %v1004
    %v1006 = vlaneseq
    %v1007 = vshrl.u32 %v1006, 7
    %v1008 = vsub.s32 6, %v1007
    %v1009 = vrot.slane %v474, %v1008
    %v1010 = vlaneseq
    %v1011 = vshrl.u32 %v1010, 7
    %v1012 = vsub.s32 7, %v1011
    %v1013 = vrot.slane %v474, %v1012
    %v1014 = vlaneseq
    %v1015 = vshrl.u32 %v1014, 7
    %v1016 = vsub.s32 0, %v1015
    %v1017 = vrot.slane %v476, %v1016
    %v1018 = vlaneseq
    %v1019 = vshrl.u32 %v1018, 7
    %v1020 = vsub.s32 1, %v1019
    %v1021 = vrot.slane %v476, %v1020
    %v1022 = vlaneseq
    %v1023 = vshrl.u32 %v1022, 7
    %v1024 = vsub.s32 2, %v1023
    %v1025 = vrot.slane %v476, %v1024
    %v1026 = vlaneseq
    %v1027 = vshrl.u32 %v1026, 7
    %v1028 = vsub.s32 3, %v1027
    %v1029 = vrot.slane %v476, %v1028
    %v1030 = vlaneseq
    %v1031 = vshrl.u32 %v1030, 7
    %v1032 = vsub.s32 4, %v1031
    %v1033 = vrot.slane %v476, %v1032
    %v1034 = vlaneseq
    %v1035 = vshrl.u32 %v1034, 7
    %v1036 = vsub.s32 5, %v1035
    %v1037 = vrot.slane %v476, %v1036
    %v1038 = vlaneseq
    %v1039 = vshrl.u32 %v1038, 7
    %v1040 = vsub.s32 6, %v1039
    %v1041 = vrot.slane %v476, %v1040
    %v1042 = vlaneseq
    %v1043 = vshrl.u32 %v1042, 7
    %v1044 = vsub.s32 7, %v1043
    %v1045 = vrot.slane %v476, %v1044
    %v1046 = vlaneseq
    %v1047 = vshrl.u32 %v1046, 7
    %v1048 = vsub.s32 0, %v1047
    %v1049 = vrot.slane %v478, %v1048
    %v1050 = vlaneseq
    %v1051 = vshrl.u32 %v1050, 7
    %v1052 = vsub.s32 1, %v1051
    %v1053 = vrot.slane %v478, %v1052
    %v1054 = vlaneseq
    %v1055 = vshrl.u32 %v1054, 7
    %v1056 = vsub.s32 2, %v1055
    %v1057 = vrot.slane %v478, %v1056
    %v1058 = vlaneseq
    %v1059 = vshrl.u32 %v1058, 7
    %v1060 = vsub.s32 3, %v1059
    %v1061 = vrot.slane %v478, %v1060
    %v1062 = vlaneseq
    %v1063 = vshrl.u32 %v1062, 7
    %v1064 = vsub.s32 4, %v1063
    %v1065 = vrot.slane %v478, %v1064
    %v1066 = vlaneseq
    %v1067 = vshrl.u32 %v1066, 7
    %v1068 = vsub.s32 5, %v1067
    %v1069 = vrot.slane %v478, %v1068
    %v1070 = vlaneseq
    %v1071 = vshrl.u32 %v1070, 7
    %v1072 = vsub.s32 6, %v1071
    %v1073 = vrot.slane %v478, %v1072
    %v1074 = vlaneseq
    %v1075 = vshrl.u32 %v1074, 7
    %v1076 = vsub.s32 7, %v1075
    %v1077 = vrot.slane %v478, %v1076
    %v1078 = vlaneseq
    %v1079 = vshrl.u32 %v1078, 7
    %v1080 = vsub.s32 0, %v1079
    %v1081 = vrot.slane %v480, %v1080
    %v1082 = vlaneseq
    %v1083 = vshrl.u32 %v1082, 7
    %v1084 = vsub.s32 1, %v1083
    %v1085 = vrot.slane %v480, %v1084
    %v1086 = vlaneseq
    %v1087 = vshrl.u32 %v1086, 7
    %v1088 = vsub.s32 2, %v1087
    %v1089 = vrot.slane %v480, %v1088
    %v1090 = vlaneseq
    %v1091 = vshrl.u32 %v1090, 7
    %v1092 = vsub.s32 3, %v1091
    %v1093 = vrot.slane %v480, %v1092
    %v1094 = vlaneseq
    %v1095 = vshrl.u32 %v1094, 7
    %v1096 = vsub.s32 4, %v1095
    %v1097 = vrot.slane %v480, %v1096
    %v1098 = vlaneseq
    %v1099 = vshrl.u32 %v1098, 7
    %v1100 = vsub.s32 5, %v1099
    %v1101 = vrot.slane %v480, %v1100
    %v1102 = vlaneseq
    %v1103 = vshrl.u32 %v1102, 7
    %v1104 = vsub.s32 6, %v1103
    %v1105 = vrot.slane %v480, %v1104
    %v1106 = vlaneseq
    %v1107 = vshrl.u32 %v1106, 7
    %v1108 = vsub.s32 7, %v1107
    %v1109 = vrot.slane %v480, %v1108
    %v1110 = vlaneseq
    %v1111 = vshrl.u32 %v1110, 7
    %v1112 = vsub.s32 0, %v1111
    %v1113 = vrot.slane %v482, %v1112
    %v1114 = vlaneseq
    %v1115 = vshrl.u32 %v1114, 7
    %v1116 = vsub.s32 1, %v1115
    %v1117 = vrot.slane %v482, %v1116
    %v1118 = vlaneseq
    %v1119 = vshrl.u32 %v1118, 7
    %v1120 = vsub.s32 2, %v1119
    %v1121 = vrot.slane %v482, %v1120
    %v1122 = vlaneseq
    %v1123 = vshrl.u32 %v1122, 7
    %v1124 = vsub.s32 3, %v1123
    %v1125 = vrot.slane %v482, %v1124
    %v1126 = vlaneseq
    %v1127 = vshrl.u32 %v1126, 7
    %v1128 = vsub.s32 4, %v1127
    %v1129 = vrot.slane %v482, %v1128
    %v1130 = vlaneseq
    %v1131 = vshrl.u32 %v1130, 7
    %v1132 = vsub.s32 5, %v1131
    %v1133 = vrot.slane %v482, %v1132
    %v1134 = vlaneseq
    %v1135 = vshrl.u32 %v1134, 7
    %v1136 = vsub.s32 6, %v1135
    %v1137 = vrot.slane %v482, %v1136
    %v1138 = vlaneseq
    %v1139 = vshrl.u32 %v1138, 7
    %v1140 = vsub.s32 7, %v1139
    %v1141 = vrot.slane %v482, %v1140
    %v1142 = vlaneseq
    %v1143 = vshrl.u32 %v1142, 7
    %v1144 = vsub.s32 0, %v1143
    %v1145 = vrot.slane %v484, %v1144
    %v1146 = vlaneseq
    %v1147 = vshrl.u32 %v1146, 7
    %v1148 = vsub.s32 1, %v1147
    %v1149 = vrot.slane %v484, %v1148
    %v1150 = vlaneseq
    %v1151 = vshrl.u32 %v1150, 7
    %v1152 = vsub.s32 2, %v1151
    %v1153 = vrot.slane %v484, %v1152
    %v1154 = vlaneseq
    %v1155 = vshrl.u32 %v1154, 7
    %v1156 = vsub.s32 3, %v1155
    %v1157 = vrot.slane %v484, %v1156
    %v1158 = vlaneseq
    %v1159 = vshrl.u32 %v1158, 7
    %v1160 = vsub.s32 4, %v1159
    %v1161 = vrot.slane %v484, %v1160
    %v1162 = vlaneseq
    %v1163 = vshrl.u32 %v1162, 7
    %v1164 = vsub.s32 5, %v1163
    %v1165 = vrot.slane %v484, %v1164
    %v1166 = vlaneseq
    %v1167 = vshrl.u32 %v1166, 7
    %v1168 = vsub.s32 6, %v1167
    %v1169 = vrot.slane %v484, %v1168
    %v1170 = vlaneseq
    %v1171 = vshrl.u32 %v1170, 7
    %v1172 = vsub.s32 7, %v1171
    %v1173 = vrot.slane %v484, %v1172
    %v1174 = vlaneseq
    %v1175 = vshrl.u32 %v1174, 7
    %v1176 = vsub.s32 0, %v1175
    %v1177 = vrot.slane %v486, %v1176
    %v1178 = vlaneseq
    %v1179 = vshrl.u32 %v1178, 7
    %v1180 = vsub.s32 1, %v1179
    %v1181 = vrot.slane %v486, %v1180
    %v1182 = vlaneseq
    %v1183 = vshrl.u32 %v1182, 7
    %v1184 = vsub.s32 2, %v1183
    %v1185 = vrot.slane %v486, %v1184
    %v1186 = vlaneseq
    %v1187 = vshrl.u32 %v1186, 7
    %v1188 = vsub.s32 3, %v1187
    %v1189 = vrot.slane %v486, %v1188
    %v1190 = vlaneseq
    %v1191 = vshrl.u32 %v1190, 7
    %v1192 = vsub.s32 4, %v1191
    %v1193 = vrot.slane %v486, %v1192
    %v1194 = vlaneseq
    %v1195 = vshrl.u32 %v1194, 7
    %v1196 = vsub.s32 5, %v1195
    %v1197 = vrot.slane %v486, %v1196
    %v1198 = vlaneseq
    %v1199 = vshrl.u32 %v1198, 7
    %v1200 = vsub.s32 6, %v1199
    %v1201 = vrot.slane %v486, %v1200
    %v1202 = vlaneseq
    %v1203 = vshrl.u32 %v1202, 7
    %v1204 = vsub.s32 7, %v1203
    %v1205 = vrot.slane %v486, %v1204
    %v1206 = vlaneseq
    %v1207 = vshrl.u32 %v1206, 7
    %v1208 = vsub.s32 0, %v1207
    %v1209 = vrot.slane %v488, %v1208
    %v1210 = vlaneseq
    %v1211 = vshrl.u32 %v1210, 7
    %v1212 = vsub.s32 1, %v1211
    %v1213 = vrot.slane %v488, %v1212
    %v1214 = vlaneseq
    %v1215 = vshrl.u32 %v1214, 7
    %v1216 = vsub.s32 2, %v1215
    %v1217 = vrot.slane %v488, %v1216
    %v1218 = vlaneseq
    %v1219 = vshrl.u32 %v1218, 7
    %v1220 = vsub.s32 3, %v1219
    %v1221 = vrot.slane %v488, %v1220
    %v1222 = vlaneseq
    %v1223 = vshrl.u32 %v1222, 7
    %v1224 = vsub.s32 4, %v1223
    %v1225 = vrot.slane %v488, %v1224
    %v1226 = vlaneseq
    %v1227 = vshrl.u32 %v1226, 7
    %v1228 = vsub.s32 5, %v1227
    %v1229 = vrot.slane %v488, %v1228
    %v1230 = vlaneseq
    %v1231 = vshrl.u32 %v1230, 7
    %v1232 = vsub.s32 6, %v1231
    %v1233 = vrot.slane %v488, %v1232
    %v1234 = vlaneseq
    %v1235 = vshrl.u32 %v1234, 7
    %v1236 = vsub.s32 7, %v1235
    %v1237 = vrot.slane %v488, %v1236
    %v1238 = vlaneseq
    %v1239 = vshrl.u32 %v1238, 7
    %v1240 = vsub.s32 0, %v1239
    %v1241 = vrot.slane %v490, %v1240
    %v1242 = vlaneseq
    %v1243 = vshrl.u32 %v1242, 7
    %v1244 = vsub.s32 1, %v1243
    %v1245 = vrot.slane %v490, %v1244
    %v1246 = vlaneseq
    %v1247 = vshrl.u32 %v1246, 7
    %v1248 = vsub.s32 2, %v1247
    %v1249 = vrot.slane %v490, %v1248
    %v1250 = vlaneseq
    %v1251 = vshrl.u32 %v1250, 7
    %v1252 = vsub.s32 3, %v1251
    %v1253 = vrot.slane %v490, %v1252
    %v1254 = vlaneseq
    %v1255 = vshrl.u32 %v1254, 7
    %v1256 = vsub.s32 4, %v1255
    %v1257 = vrot.slane %v490, %v1256
    %v1258 = vlaneseq
    %v1259 = vshrl.u32 %v1258, 7
    %v1260 = vsub.s32 5, %v1259
    %v1261 = vrot.slane %v490, %v1260
    %v1262 = vlaneseq
    %v1263 = vshrl.u32 %v1262, 7
    %v1264 = vsub.s32 6, %v1263
    %v1265 = vrot.slane %v490, %v1264
    %v1266 = vlaneseq
    %v1267 = vshrl.u32 %v1266, 7
    %v1268 = vsub.s32 7, %v1267
    %v1269 = vrot.slane %v490, %v1268
    %v1270 = vlaneseq
    %v1271 = vshrl.u32 %v1270, 7
    %v1272 = vsub.s32 0, %v1271
    %v1273 = vrot.slane %v492, %v1272
    %v1274 = vlaneseq
    %v1275 = vshrl.u32 %v1274, 7
    %v1276 = vsub.s32 1, %v1275
    %v1277 = vrot.slane %v492, %v1276
    %v1278 = vlaneseq
    %v1279 = vshrl.u32 %v1278, 7
    %v1280 = vsub.s32 2, %v1279
    %v1281 = vrot.slane %v492, %v1280
    %v1282 = vlaneseq
    %v1283 = vshrl.u32 %v1282, 7
    %v1284 = vsub.s32 3, %v1283
    %v1285 = vrot.slane %v492, %v1284
    %v1286 = vlaneseq
    %v1287 = vshrl.u32 %v1286, 7
    %v1288 = vsub.s32 4, %v1287
    %v1289 = vrot.slane %v492, %v1288
    %v1290 = vlaneseq
    %v1291 = vshrl.u32 %v1290, 7
    %v1292 = vsub.s32 5, %v1291
    %v1293 = vrot.slane %v492, %v1292
    %v1294 = vlaneseq
    %v1295 = vshrl.u32 %v1294, 7
    %v1296 = vsub.s32 6, %v1295
    %v1297 = vrot.slane %v492, %v1296
    %v1298 = vlaneseq
    %v1299 = vshrl.u32 %v1298, 7
    %v1300 = vsub.s32 7, %v1299
    %v1301 = vrot.slane %v492, %v1300
    %v1302 = vlaneseq
    %v1303 = vshrl.u32 %v1302, 7
    %v1304 = vsub.s32 0, %v1303
    %v1305 = vrot.slane %v494, %v1304
    %v1306 = vlaneseq
    %v1307 = vshrl.u32 %v1306, 7
    %v1308 = vsub.s32 1, %v1307
    %v1309 = vrot.slane %v494, %v1308
    %v1310 = vlaneseq
    %v1311 = vshrl.u32 %v1310, 7
    %v1312 = vsub.s32 2, %v1311
    %v1313 = vrot.slane %v494, %v1312
    %v1314 = vlaneseq
    %v1315 = vshrl.u32 %v1314, 7
    %v1316 = vsub.s32 3, %v1315
    %v1317 = vrot.slane %v494, %v1316
    %v1318 = vlaneseq
    %v1319 = vshrl.u32 %v1318, 7
    %v1320 = vsub.s32 4, %v1319
    %v1321 = vrot.slane %v494, %v1320
    %v1322 = vlaneseq
    %v1323 = vshrl.u32 %v1322, 7
    %v1324 = vsub.s32 5, %v1323
    %v1325 = vrot.slane %v494, %v1324
    %v1326 = vlaneseq
    %v1327 = vshrl.u32 %v1326, 7
    %v1328 = vsub.s32 6, %v1327
    %v1329 = vrot.slane %v494, %v1328
    %v1330 = vlaneseq
    %v1331 = vshrl.u32 %v1330, 7
    %v1332 = vsub.s32 7, %v1331
    %v1333 = vrot.slane %v494, %v1332
    %v1334 = vlaneseq
    %v1335 = vshrl.u32 %v1334, 7
    %v1336 = vsub.s32 0, %v1335
    %v1337 = vrot.slane %v496, %v1336
    %v1338 = vlaneseq
    %v1339 = vshrl.u32 %v1338, 7
    %v1340 = vsub.s32 1, %v1339
    %v1341 = vrot.slane %v496, %v1340
    %v1342 = vlaneseq
    %v1343 = vshrl.u32 %v1342, 7
    %v1344 = vsub.s32 2, %v1343
    %v1345 = vrot.slane %v496, %v1344
    %v1346 = vlaneseq
    %v1347 = vshrl.u32 %v1346, 7
    %v1348 = vsub.s32 3, %v1347
    %v1349 = vrot.slane %v496, %v1348
    %v1350 = vlaneseq
    %v1351 = vshrl.u32 %v1350, 7
    %v1352 = vsub.s32 4, %v1351
    %v1353 = vrot.slane %v496, %v1352
    %v1354 = vlaneseq
    %v1355 = vshrl.u32 %v1354, 7
    %v1356 = vsub.s32 5, %v1355
    %v1357 = vrot.slane %v496, %v1356
    %v1358 = vlaneseq
    %v1359 = vshrl.u32 %v1358, 7
    %v1360 = vsub.s32 6, %v1359
    %v1361 = vrot.slane %v496, %v1360
    %v1362 = vlaneseq
    %v1363 = vshrl.u32 %v1362, 7
    %v1364 = vsub.s32 7, %v1363
    %v1365 = vrot.slane %v496, %v1364
    %v1366 = vlaneseq
    %v1367 = vshrl.u32 %v1366, 7
    %v1368 = vsub.s32 0, %v1367
    %v1369 = vrot.slane %v498, %v1368
    %v1370 = vlaneseq
    %v1371 = vshrl.u32 %v1370, 7
    %v1372 = vsub.s32 1, %v1371
    %v1373 = vrot.slane %v498, %v1372
    %v1374 = vlaneseq
    %v1375 = vshrl.u32 %v1374, 7
    %v1376 = vsub.s32 2, %v1375
    %v1377 = vrot.slane %v498, %v1376
    %v1378 = vlaneseq
    %v1379 = vshrl.u32 %v1378, 7
    %v1380 = vsub.s32 3, %v1379
    %v1381 = vrot.slane %v498, %v1380
    %v1382 = vlaneseq
    %v1383 = vshrl.u32 %v1382, 7
    %v1384 = vsub.s32 4, %v1383
    %v1385 = vrot.slane %v498, %v1384
    %v1386 = vlaneseq
    %v1387 = vshrl.u32 %v1386, 7
    %v1388 = vsub.s32 5, %v1387
    %v1389 = vrot.slane %v498, %v1388
    %v1390 = vlaneseq
    %v1391 = vshrl.u32 %v1390, 7
    %v1392 = vsub.s32 6, %v1391
    %v1393 = vrot.slane %v498, %v1392
    %v1394 = vlaneseq
    %v1395 = vshrl.u32 %v1394, 7
    %v1396 = vsub.s32 7, %v1395
    %v1397 = vrot.slane %v498, %v1396
    %v1398 = vlaneseq
    %v1399 = vshrl.u32 %v1398, 7
    %v1400 = vsub.s32 0, %v1399
    %v1401 = vrot.slane %v500, %v1400
    %v1402 = vlaneseq
    %v1403 = vshrl.u32 %v1402, 7
    %v1404 = vsub.s32 1, %v1403
    %v1405 = vrot.slane %v500, %v1404
    %v1406 = vlaneseq
    %v1407 = vshrl.u32 %v1406, 7
    %v1408 = vsub.s32 2, %v1407
    %v1409 = vrot.slane %v500, %v1408
    %v1410 = vlaneseq
    %v1411 = vshrl.u32 %v1410, 7
    %v1412 = vsub.s32 3, %v1411
    %v1413 = vrot.slane %v500, %v1412
    %v1414 = vlaneseq
    %v1415 = vshrl.u32 %v1414, 7
    %v1416 = vsub.s32 4, %v1415
    %v1417 = vrot.slane %v500, %v1416
    %v1418 = vlaneseq
    %v1419 = vshrl.u32 %v1418, 7
    %v1420 = vsub.s32 5, %v1419
    %v1421 = vrot.slane %v500, %v1420
    %v1422 = vlaneseq
    %v1423 = vshrl.u32 %v1422, 7
    %v1424 = vsub.s32 6, %v1423
    %v1425 = vrot.slane %v500, %v1424
    %v1426 = vlaneseq
    %v1427 = vshrl.u32 %v1426, 7
    %v1428 = vsub.s32 7, %v1427
    %v1429 = vrot.slane %v500, %v1428
    %v1430 = vlaneseq
    %v1431 = vshrl.u32 %v1430, 7
    %v1432 = vsub.s32 0, %v1431
    %v1433 = vrot.slane %v502, %v1432
    %v1434 = vlaneseq
    %v1435 = vshrl.u32 %v1434, 7
    %v1436 = vsub.s32 1, %v1435
    %v1437 = vrot.slane %v502, %v1436
    %v1438 = vlaneseq
    %v1439 = vshrl.u32 %v1438, 7
    %v1440 = vsub.s32 2, %v1439
    %v1441 = vrot.slane %v502, %v1440
    %v1442 = vlaneseq
    %v1443 = vshrl.u32 %v1442, 7
    %v1444 = vsub.s32 3, %v1443
    %v1445 = vrot.slane %v502, %v1444
    %v1446 = vlaneseq
    %v1447 = vshrl.u32 %v1446, 7
    %v1448 = vsub.s32 4, %v1447
    %v1449 = vrot.slane %v502, %v1448
    %v1450 = vlaneseq
    %v1451 = vshrl.u32 %v1450, 7
    %v1452 = vsub.s32 5, %v1451
    %v1453 = vrot.slane %v502, %v1452
    %v1454 = vlaneseq
    %v1455 = vshrl.u32 %v1454, 7
    %v1456 = vsub.s32 6, %v1455
    %v1457 = vrot.slane %v502, %v1456
    %v1458 = vlaneseq
    %v1459 = vshrl.u32 %v1458, 7
    %v1460 = vsub.s32 7, %v1459
    %v1461 = vrot.slane %v502, %v1460
    %v1462 = vlaneseq
    %v1463 = vshrl.u32 %v1462, 7
    %v1464 = vsub.s32 0, %v1463
    %v1465 = vrot.slane %v504, %v1464
    %v1466 = vlaneseq
    %v1467 = vshrl.u32 %v1466, 7
    %v1468 = vsub.s32 1, %v1467
    %v1469 = vrot.slane %v504, %v1468
    %v1470 = vlaneseq
    %v1471 = vshrl.u32 %v1470, 7
    %v1472 = vsub.s32 2, %v1471
    %v1473 = vrot.slane %v504, %v1472
    %v1474 = vlaneseq
    %v1475 = vshrl.u32 %v1474, 7
    %v1476 = vsub.s32 3, %v1475
    %v1477 = vrot.slane %v504, %v1476
    %v1478 = vlaneseq
    %v1479 = vshrl.u32 %v1478, 7
    %v1480 = vsub.s32 4, %v1479
    %v1481 = vrot.slane %v504, %v1480
    %v1482 = vlaneseq
    %v1483 = vshrl.u32 %v1482, 7
    %v1484 = vsub.s32 5, %v1483
    %v1485 = vrot.slane %v504, %v1484
    %v1486 = vlaneseq
    %v1487 = vshrl.u32 %v1486, 7
    %v1488 = vsub.s32 6, %v1487
    %v1489 = vrot.slane %v504, %v1488
    %v1490 = vlaneseq
    %v1491 = vshrl.u32 %v1490, 7
    %v1492 = vsub.s32 7, %v1491
    %v1493 = vrot.slane %v504, %v1492
    %v1494 = vlaneseq
    %v1495 = vshrl.u32 %v1494, 7
    %v1496 = vsub.s32 0, %v1495
    %v1497 = vrot.slane %v506, %v1496
    %v1498 = vlaneseq
    %v1499 = vshrl.u32 %v1498, 7
    %v1500 = vsub.s32 1, %v1499
    %v1501 = vrot.slane %v506, %v1500
    %v1502 = vlaneseq
    %v1503 = vshrl.u32 %v1502, 7
    %v1504 = vsub.s32 2, %v1503
    %v1505 = vrot.slane %v506, %v1504
    %v1506 = vlaneseq
    %v1507 = vshrl.u32 %v1506, 7
    %v1508 = vsub.s32 3, %v1507
    %v1509 = vrot.slane %v506, %v1508
    %v1510 = vlaneseq
    %v1511 = vshrl.u32 %v1510, 7
    %v1512 = vsub.s32 4, %v1511
    %v1513 = vrot.slane %v506, %v1512
    %v1514 = vlaneseq
    %v1515 = vshrl.u32 %v1514, 7
    %v1516 = vsub.s32 5, %v1515
    %v1517 = vrot.slane %v506, %v1516
    %v1518 = vlaneseq
    %v1519 = vshrl.u32 %v1518, 7
    %v1520 = vsub.s32 6, %v1519
    %v1521 = vrot.slane %v506, %v1520
    %v1522 = vlaneseq
    %v1523 = vshrl.u32 %v1522, 7
    %v1524 = vsub.s32 7, %v1523
    %v1525 = vrot.slane %v506, %v1524
    %v1526 = vlaneseq
    %v1527 = vshrl.u32 %v1526, 7
    %v1528 = vsub.s32 0, %v1527
    %v1529 = vrot.slane %v508, %v1528
    %v1530 = vlaneseq
    %v1531 = vshrl.u32 %v1530, 7
    %v1532 = vsub.s32 1, %v1531
    %v1533 = vrot.slane %v508, %v1532
    %v1534 = vlaneseq
    %v1535 = vshrl.u32 %v1534, 7
    %v1536 = vsub.s32 2, %v1535
    %v1537 = vrot.slane %v508, %v1536
    %v1538 = vlaneseq
    %v1539 = vshrl.u32 %v1538, 7
    %v1540 = vsub.s32 3, %v1539
    %v1541 = vrot.slane %v508, %v1540
    %v1542 = vlaneseq
    %v1543 = vshrl.u32 %v1542, 7
    %v1544 = vsub.s32 4, %v1543
    %v1545 = vrot.slane %v508, %v1544
    %v1546 = vlaneseq
    %v1547 = vshrl.u32 %v1546, 7
    %v1548 = vsub.s32 5, %v1547
    %v1549 = vrot.slane %v508, %v1548
    %v1550 = vlaneseq
    %v1551 = vshrl.u32 %v1550, 7
    %v1552 = vsub.s32 6, %v1551
    %v1553 = vrot.slane %v508, %v1552
    %v1554 = vlaneseq
    %v1555 = vshrl.u32 %v1554, 7
    %v1556 = vsub.s32 7, %v1555
    %v1557 = vrot.slane %v508, %v1556
    %v1558 = vlaneseq
    %v1559 = vshrl.u32 %v1558, 7
    %v1560 = vsub.s32 0, %v1559
    %v1561 = vrot.slane %v510, %v1560
    %v1562 = vlaneseq
    %v1563 = vshrl.u32 %v1562, 7
    %v1564 = vsub.s32 1, %v1563
    %v1565 = vrot.slane %v510, %v1564
    %v1566 = vlaneseq
    %v1567 = vshrl.u32 %v1566, 7
    %v1568 = vsub.s32 2, %v1567
    %v1569 = vrot.slane %v510, %v1568
    %v1570 = vlaneseq
    %v1571 = vshrl.u32 %v1570, 7
    %v1572 = vsub.s32 3, %v1571
    %v1573 = vrot.slane %v510, %v1572
    %v1574 = vlaneseq
    %v1575 = vshrl.u32 %v1574, 7
    %v1576 = vsub.s32 4, %v1575
    %v1577 = vrot.slane %v510, %v1576
    %v1578 = vlaneseq
    %v1579 = vshrl.u32 %v1578, 7
    %v1580 = vsub.s32 5, %v1579
    %v1581 = vrot.slane %v510, %v1580
    %v1582 = vlaneseq
    %v1583 = vshrl.u32 %v1582, 7
    %v1584 = vsub.s32 6, %v1583
    %v1585 = vrot.slane %v510, %v1584
    %v1586 = vlaneseq
    %v1587 = vshrl.u32 %v1586, 7
    %v1588 = vsub.s32 7, %v1587
    %v1589 = vrot.slane %v510, %v1588
    %v1590 = vlaneseq
    %v1591 = vshrl.u32 %v1590, 7
    %v1592 = vsub.s32 0, %v1591
    %v1593 = vrot.slane %v512, %v1592
    %v1594 = vlaneseq
    %v1595 = vshrl.u32 %v1594, 7
    %v1596 = vsub.s32 1, %v1595
    %v1597 = vrot.slane %v512, %v1596
    %v1598 = vlaneseq
    %v1599 = vshrl.u32 %v1598, 7
    %v1600 = vsub.s32 2, %v1599
    %v1601 = vrot.slane %v512, %v1600
    %v1602 = vlaneseq
    %v1603 = vshrl.u32 %v1602, 7
    %v1604 = vsub.s32 3, %v1603
    %v1605 = vrot.slane %v512, %v1604
    %v1606 = vlaneseq
    %v1607 = vshrl.u32 %v1606, 7
    %v1608 = vsub.s32 4, %v1607
    %v1609 = vrot.slane %v512, %v1608
    %v1610 = vlaneseq
    %v1611 = vshrl.u32 %v1610, 7
    %v1612 = vsub.s32 5, %v1611
    %v1613 = vrot.slane %v512, %v1612
    %v1614 = vlaneseq
    %v1615 = vshrl.u32 %v1614, 7
    %v1616 = vsub.s32 6, %v1615
    %v1617 = vrot.slane %v512, %v1616
    %v1618 = vlaneseq
    %v1619 = vshrl.u32 %v1618, 7
    %v1620 = vsub.s32 7, %v1619
    %v1621 = vrot.slane %v512, %v1620
    %v1622 = vlaneseq
    %v1623 = vshrl.u32 %v1622, 7
    %v1624 = vsub.s32 0, %v1623
    %v1625 = vrot.slane %v514, %v1624
    %v1626 = vlaneseq
    %v1627 = vshrl.u32 %v1626, 7
    %v1628 = vsub.s32 1, %v1627
    %v1629 = vrot.slane %v514, %v1628
    %v1630 = vlaneseq
    %v1631 = vshrl.u32 %v1630, 7
    %v1632 = vsub.s32 2, %v1631
    %v1633 = vrot.slane %v514, %v1632
    %v1634 = vlaneseq
    %v1635 = vshrl.u32 %v1634, 7
    %v1636 = vsub.s32 3, %v1635
    %v1637 = vrot.slane %v514, %v1636
    %v1638 = vlaneseq
    %v1639 = vshrl.u32 %v1638, 7
    %v1640 = vsub.s32 4, %v1639
    %v1641 = vrot.slane %v514, %v1640
    %v1642 = vlaneseq
    %v1643 = vshrl.u32 %v1642, 7
    %v1644 = vsub.s32 5, %v1643
    %v1645 = vrot.slane %v514, %v1644
    %v1646 = vlaneseq
    %v1647 = vshrl.u32 %v1646, 7
    %v1648 = vsub.s32 6, %v1647
    %v1649 = vrot.slane %v514, %v1648
    %v1650 = vlaneseq
    %v1651 = vshrl.u32 %v1650, 7
    %v1652 = vsub.s32 7, %v1651
    %v1653 = vrot.slane %v514, %v1652
    %v1654 = vlaneseq
    %v1655 = vshrl.u32 %v1654, 7
    %v1656 = vsub.s32 0, %v1655
    %v1657 = vrot.slane %v516, %v1656
    %v1658 = vlaneseq
    %v1659 = vshrl.u32 %v1658, 7
    %v1660 = vsub.s32 1, %v1659
    %v1661 = vrot.slane %v516, %v1660
    %v1662 = vlaneseq
    %v1663 = vshrl.u32 %v1662, 7
    %v1664 = vsub.s32 2, %v1663
    %v1665 = vrot.slane %v516, %v1664
    %v1666 = vlaneseq
    %v1667 = vshrl.u32 %v1666, 7
    %v1668 = vsub.s32 3, %v1667
    %v1669 = vrot.slane %v516, %v1668
    %v1670 = vlaneseq
    %v1671 = vshrl.u32 %v1670, 7
    %v1672 = vsub.s32 4, %v1671
    %v1673 = vrot.slane %v516, %v1672
    %v1674 = vlaneseq
    %v1675 = vshrl.u32 %v1674, 7
    %v1676 = vsub.s32 5, %v1675
    %v1677 = vrot.slane %v516, %v1676
    %v1678 = vlaneseq
    %v1679 = vshrl.u32 %v1678, 7
    %v1680 = vsub.s32 6, %v1679
    %v1681 = vrot.slane %v516, %v1680
    %v1682 = vlaneseq
    %v1683 = vshrl.u32 %v1682, 7
    %v1684 = vsub.s32 7, %v1683
    %v1685 = vrot.slane %v516, %v1684
    %v1686 = vlaneseq
    %v1687 = vshrl.u32 %v1686, 7
    %v1688 = vsub.s32 0, %v1687
    %v1689 = vrot.slane %v518, %v1688
    %v1690 = vlaneseq
    %v1691 = vshrl.u32 %v1690, 7
    %v1692 = vsub.s32 1, %v1691
    %v1693 = vrot.slane %v518, %v1692
    %v1694 = vlaneseq
    %v1695 = vshrl.u32 %v1694, 7
    %v1696 = vsub.s32 2, %v1695
    %v1697 = vrot.slane %v518, %v1696
    %v1698 = vlaneseq
    %v1699 = vshrl.u32 %v1698, 7
    %v1700 = vsub.s32 3, %v1699
    %v1701 = vrot.slane %v518, %v1700
    %v1702 = vlaneseq
    %v1703 = vshrl.u32 %v1702, 7
    %v1704 = vsub.s32 4, %v1703
    %v1705 = vrot.slane %v518, %v1704
    %v1706 = vlaneseq
    %v1707 = vshrl.u32 %v1706, 7
    %v1708 = vsub.s32 5, %v1707
    %v1709 = vrot.slane %v518, %v1708
    %v1710 = vlaneseq
    %v1711 = vshrl.u32 %v1710, 7
    %v1712 = vsub.s32 6, %v1711
    %v1713 = vrot.slane %v518, %v1712
    %v1714 = vlaneseq
    %v1715 = vshrl.u32 %v1714, 7
    %v1716 = vsub.s32 7, %v1715
    %v1717 = vrot.slane %v518, %v1716
    %v1718 = vlaneseq
    %v1719 = vshrl.u32 %v1718, 7
    %v1720 = vsub.s32 0, %v1719
    %v1721 = vrot.slane %v520, %v1720
    %v1722 = vlaneseq
    %v1723 = vshrl.u32 %v1722, 7
    %v1724 = vsub.s32 1, %v1723
    %v1725 = vrot.slane %v520, %v1724
    %v1726 = vlaneseq
    %v1727 = vshrl.u32 %v1726, 7
    %v1728 = vsub.s32 2, %v1727
    %v1729 = vrot.slane %v520, %v1728
    %v1730 = vlaneseq
    %v1731 = vshrl.u32 %v1730, 7
    %v1732 = vsub.s32 3, %v1731
    %v1733 = vrot.slane %v520, %v1732
    %v1734 = vlaneseq
    %v1735 = vshrl.u32 %v1734, 7
    %v1736 = vsub.s32 4, %v1735
    %v1737 = vrot.slane %v520, %v1736
    %v1738 = vlaneseq
    %v1739 = vshrl.u32 %v1738, 7
    %v1740 = vsub.s32 5, %v1739
    %v1741 = vrot.slane %v520, %v1740
    %v1742 = vlaneseq
    %v1743 = vshrl.u32 %v1742, 7
    %v1744 = vsub.s32 6, %v1743
    %v1745 = vrot.slane %v520, %v1744
    %v1746 = vlaneseq
    %v1747 = vshrl.u32 %v1746, 7
    %v1748 = vsub.s32 7, %v1747
    %v1749 = vrot.slane %v520, %v1748
    %v1750 = vlaneseq
    %v1751 = vshrl.u32 %v1750, 7
    %v1752 = vsub.s32 0, %v1751
    %v1753 = vrot.slane %v522, %v1752
    %v1754 = vlaneseq
    %v1755 = vshrl.u32 %v1754, 7
    %v1756 = vsub.s32 1, %v1755
    %v1757 = vrot.slane %v522, %v1756
    %v1758 = vlaneseq
    %v1759 = vshrl.u32 %v1758, 7
    %v1760 = vsub.s32 2, %v1759
    %v1761 = vrot.slane %v522, %v1760
    %v1762 = vlaneseq
    %v1763 = vshrl.u32 %v1762, 7
    %v1764 = vsub.s32 3, %v1763
    %v1765 = vrot.slane %v522, %v1764
    %v1766 = vlaneseq
    %v1767 = vshrl.u32 %v1766, 7
    %v1768 = vsub.s32 4, %v1767
    %v1769 = vrot.slane %v522, %v1768
    %v1770 = vlaneseq
    %v1771 = vshrl.u32 %v1770, 7
    %v1772 = vsub.s32 5, %v1771
    %v1773 = vrot.slane %v522, %v1772
    %v1774 = vlaneseq
    %v1775 = vshrl.u32 %v1774, 7
    %v1776 = vsub.s32 6, %v1775
    %v1777 = vrot.slane %v522, %v1776
    %v1778 = vlaneseq
    %v1779 = vshrl.u32 %v1778, 7
    %v1780 = vsub.s32 7, %v1779
    %v1781 = vrot.slane %v522, %v1780
    %v1782 = vlaneseq
    %v1783 = vshrl.u32 %v1782, 7
    %v1784 = vsub.s32 0, %v1783
    %v1785 = vrot.slane %v524, %v1784
    %v1786 = vlaneseq
    %v1787 = vshrl.u32 %v1786, 7
    %v1788 = vsub.s32 1, %v1787
    %v1789 = vrot.slane %v524, %v1788
    %v1790 = vlaneseq
    %v1791 = vshrl.u32 %v1790, 7
    %v1792 = vsub.s32 2, %v1791
    %v1793 = vrot.slane %v524, %v1792
    %v1794 = vlaneseq
    %v1795 = vshrl.u32 %v1794, 7
    %v1796 = vsub.s32 3, %v1795
    %v1797 = vrot.slane %v524, %v1796
    %v1798 = vlaneseq
    %v1799 = vshrl.u32 %v1798, 7
    %v1800 = vsub.s32 4, %v1799
    %v1801 = vrot.slane %v524, %v1800
    %v1802 = vlaneseq
    %v1803 = vshrl.u32 %v1802, 7
    %v1804 = vsub.s32 5, %v1803
    %v1805 = vrot.slane %v524, %v1804
    %v1806 = vlaneseq
    %v1807 = vshrl.u32 %v1806, 7
    %v1808 = vsub.s32 6, %v1807
    %v1809 = vrot.slane %v524, %v1808
    %v1810 = vlaneseq
    %v1811 = vshrl.u32 %v1810, 7
    %v1812 = vsub.s32 7, %v1811
    %v1813 = vrot.slane %v524, %v1812
    %v1814 = vlaneseq
    %v1815 = vshrl.u32 %v1814, 7
    %v1816 = vsub.s32 0, %v1815
    %v1817 = vrot.slane %v526, %v1816
    %v1818 = vlaneseq
    %v1819 = vshrl.u32 %v1818, 7
    %v1820 = vsub.s32 1, %v1819
    %v1821 = vrot.slane %v526, %v1820
    %v1822 = vlaneseq
    %v1823 = vshrl.u32 %v1822, 7
    %v1824 = vsub.s32 2, %v1823
    %v1825 = vrot.slane %v526, %v1824
    %v1826 = vlaneseq
    %v1827 = vshrl.u32 %v1826, 7
    %v1828 = vsub.s32 3, %v1827
    %v1829 = vrot.slane %v526, %v1828
    %v1830 = vlaneseq
    %v1831 = vshrl.u32 %v1830, 7
    %v1832 = vsub.s32 4, %v1831
    %v1833 = vrot.slane %v526, %v1832
    %v1834 = vlaneseq
    %v1835 = vshrl.u32 %v1834, 7
    %v1836 = vsub.s32 5, %v1835
    %v1837 = vrot.slane %v526, %v1836
    %v1838 = vlaneseq
    %v1839 = vshrl.u32 %v1838, 7
    %v1840 = vsub.s32 6, %v1839
    %v1841 = vrot.slane %v526, %v1840
    %v1842 = vlaneseq
    %v1843 = vshrl.u32 %v1842, 7
    %v1844 = vsub.s32 7, %v1843
    %v1845 = vrot.slane %v526, %v1844
    %v1846 = vlaneseq
    %v1847 = vshrl.u32 %v1846, 7
    %v1848 = vsub.s32 0, %v1847
    %v1849 = vrot.slane %v528, %v1848
    %v1850 = vlaneseq
    %v1851 = vshrl.u32 %v1850, 7
    %v1852 = vsub.s32 1, %v1851
    %v1853 = vrot.slane %v528, %v1852
    %v1854 = vlaneseq
    %v1855 = vshrl.u32 %v1854, 7
    %v1856 = vsub.s32 2, %v1855
    %v1857 = vrot.slane %v528, %v1856
    %v1858 = vlaneseq
    %v1859 = vshrl.u32 %v1858, 7
    %v1860 = vsub.s32 3, %v1859
    %v1861 = vrot.slane %v528, %v1860
    %v1862 = vlaneseq
    %v1863 = vshrl.u32 %v1862, 7
    %v1864 = vsub.s32 4, %v1863
    %v1865 = vrot.slane %v528, %v1864
    %v1866 = vlaneseq
    %v1867 = vshrl.u32 %v1866, 7
    %v1868 = vsub.s32 5, %v1867
    %v1869 = vrot.slane %v528, %v1868
    %v1870 = vlaneseq
    %v1871 = vshrl.u32 %v1870, 7
    %v1872 = vsub.s32 6, %v1871
    %v1873 = vrot.slane %v528, %v1872
    %v1874 = vlaneseq
    %v1875 = vshrl.u32 %v1874, 7
    %v1876 = vsub.s32 7, %v1875
    %v1877 = vrot.slane %v528, %v1876
    %v1878 = vlaneseq
    %v1879 = vshrl.u32 %v1878, 7
    %v1880 = vsub.s32 0, %v1879
    %v1881 = vrot.slane %v530, %v1880
    %v1882 = vlaneseq
    %v1883 = vshrl.u32 %v1882, 7
    %v1884 = vsub.s32 1, %v1883
    %v1885 = vrot.slane %v530, %v1884
    %v1886 = vlaneseq
    %v1887 = vshrl.u32 %v1886, 7
    %v1888 = vsub.s32 2, %v1887
    %v1889 = vrot.slane %v530, %v1888
    %v1890 = vlaneseq
    %v1891 = vshrl.u32 %v1890, 7
    %v1892 = vsub.s32 3, %v1891
    %v1893 = vrot.slane %v530, %v1892
    %v1894 = vlaneseq
    %v1895 = vshrl.u32 %v1894, 7
    %v1896 = vsub.s32 4, %v1895
    %v1897 = vrot.slane %v530, %v1896
    %v1898 = vlaneseq
    %v1899 = vshrl.u32 %v1898, 7
    %v1900 = vsub.s32 5, %v1899
    %v1901 = vrot.slane %v530, %v1900
    %v1902 = vlaneseq
    %v1903 = vshrl.u32 %v1902, 7
    %v1904 = vsub.s32 6, %v1903
    %v1905 = vrot.slane %v530, %v1904
    %v1906 = vlaneseq
    %v1907 = vshrl.u32 %v1906, 7
    %v1908 = vsub.s32 7, %v1907
    %v1909 = vrot.slane %v530, %v1908
    %v1910 = vcombine.low %v889, %v893
    %v1911 = vcombine.low %v897, %v901
    %v1912 = vcombine.low %v905, %v909
    %v1913 = vcombine.low %v913, %v917
    %v1915 = vunpack.c.l.s4 1966171168
    %v1916 = vunpack.c.0.s8 %v1915
    %v1917 = vlaneseq
    %v1918 = vshrl.u32 %v1917, 7
    %v1919 = vsub.s32 %v1916, %v1918
    %v1920 = vrot.slane %v1910, %v1919
    %v1922 = vunpack.c.l.s4 1966171168
    %v1923 = vunpack.c.0.s8 %v1922
    %v1924 = vlaneseq
    %v1925 = vshrl.u32 %v1924, 7
    %v1926 = vsub.s32 %v1923, %v1925
    %v1927 = vrot.slane %v1911, %v1926
    %v1929 = vunpack.c.l.s4 1966171168
    %v1930 = vunpack.c.0.s8 %v1929
    %v1931 = vlaneseq
    %v1932 = vshrl.u32 %v1931, 7
    %v1933 = vsub.s32 %v1930, %v1932
    %v1934 = vrot.slane %v1912, %v1933
    %v1936 = vunpack.c.l.s4 1966171168
    %v1937 = vunpack.c.0.s8 %v1936
    %v1938 = vlaneseq
    %v1939 = vshrl.u32 %v1938, 7
    %v1940 = vsub.s32 %v1937, %v1939
    %v1941 = vrot.slane %v1913, %v1940
    %v1942 = vcombine.low %v1920, %v1927
    %v1943 = vcombine.low %v1934, %v1941
    %v1945 = vunpack.c.l.s4 1966171168
    %v1946 = vunpack.c.0.s8 %v1945
    %v1947 = vlaneseq
    %v1948 = vshrl.u32 %v1947, 7
    %v1949 = vsub.s32 %v1946, %v1948
    %v1950 = vrot.slane %v1942, %v1949
    %v1952 = vunpack.c.l.s4 1966171168
    %v1953 = vunpack.c.0.s8 %v1952
    %v1954 = vlaneseq
    %v1955 = vshrl.u32 %v1954, 7
    %v1956 = vsub.s32 %v1953, %v1955
    %v1957 = vrot.slane %v1943, %v1956
    %v1958 = vcombine.low %v1950, %v1957
    %v1959 = vcombine.low %v921, %v925
    %v1960 = vcombine.low %v929, %v933
    %v1961 = vcombine.low %v937, %v941
    %v1962 = vcombine.low %v945, %v949
    %v1964 = vunpack.c.l.s4 1966171168
    %v1965 = vunpack.c.0.s8 %v1964
    %v1966 = vlaneseq
    %v1967 = vshrl.u32 %v1966, 7
    %v1968 = vsub.s32 %v1965, %v1967
    %v1969 = vrot.slane %v1959, %v1968
    %v1971 = vunpack.c.l.s4 1966171168
    %v1972 = vunpack.c.0.s8 %v1971
    %v1973 = vlaneseq
    %v1974 = vshrl.u32 %v1973, 7
    %v1975 = vsub.s32 %v1972, %v1974
    %v1976 = vrot.slane %v1960, %v1975
    %v1978 = vunpack.c.l.s4 1966171168
    %v1979 = vunpack.c.0.s8 %v1978
    %v1980 = vlaneseq
    %v1981 = vshrl.u32 %v1980, 7
    %v1982 = vsub.s32 %v1979, %v1981
    %v1983 = vrot.slane %v1961, %v1982
    %v1985 = vunpack.c.l.s4 1966171168
    %v1986 = vunpack.c.0.s8 %v1985
    %v1987 = vlaneseq
    %v1988 = vshrl.u32 %v1987, 7
    %v1989 = vsub.s32 %v1986, %v1988
    %v1990 = vrot.slane %v1962, %v1989
    %v1991 = vcombine.low %v1969, %v1976
    %v1992 = vcombine.low %v1983, %v1990
    %v1994 = vunpack.c.l.s4 1966171168
    %v1995 = vunpack.c.0.s8 %v1994
    %v1996 = vlaneseq
    %v1997 = vshrl.u32 %v1996, 7
    %v1998 = vsub.s32 %v1995, %v1997
    %v1999 = vrot.slane %v1991, %v1998
    %v2001 = vunpack.c.l.s4 1966171168
    %v2002 = vunpack.c.0.s8 %v2001
    %v2003 = vlaneseq
    %v2004 = vshrl.u32 %v2003, 7
    %v2005 = vsub.s32 %v2002, %v2004
    %v2006 = vrot.slane %v1992, %v2005
    %v2007 = vcombine.low %v1999, %v2006
    %v2008 = vcombine.low %v953, %v957
    %v2009 = vcombine.low %v961, %v965
    %v2010 = vcombine.low %v969, %v973
    %v2011 = vcombine.low %v977, %v981
    %v2013 = vunpack.c.l.s4 1966171168
    %v2014 = vunpack.c.0.s8 %v2013
    %v2015 = vlaneseq
    %v2016 = vshrl.u32 %v2015, 7
    %v2017 = vsub.s32 %v2014, %v2016
    %v2018 = vrot.slane %v2008, %v2017
    %v2020 = vunpack.c.l.s4 1966171168
    %v2021 = vunpack.c.0.s8 %v2020
    %v2022 = vlaneseq
    %v2023 = vshrl.u32 %v2022, 7
    %v2024 = vsub.s32 %v2021, %v2023
    %v2025 = vrot.slane %v2009, %v2024
    %v2027 = vunpack.c.l.s4 1966171168
    %v2028 = vunpack.c.0.s8 %v2027
    %v2029 = vlaneseq
    %v2030 = vshrl.u32 %v2029, 7
    %v2031 = vsub.s32 %v2028, %v2030
    %v2032 = vrot.slane %v2010, %v2031
    %v2034 = vunpack.c.l.s4 1966171168
    %v2035 = vunpack.c.0.s8 %v2034
    %v2036 = vlaneseq
    %v2037 = vshrl.u32 %v2036, 7
    %v2038 = vsub.s32 %v2035, %v2037
    %v2039 = vrot.slane %v2011, %v2038
    %v2040 = vcombine.low %v2018, %v2025
    %v2041 = vcombine.low %v2032, %v2039
    %v2043 = vunpack.c.l.s4 1966171168
    %v2044 = vunpack.c.0.s8 %v2043
    %v2045 = vlaneseq
    %v2046 = vshrl.u32 %v2045, 7
    %v2047 = vsub.s32 %v2044, %v2046
    %v2048 = vrot.slane %v2040, %v2047
    %v2050 = vunpack.c.l.s4 1966171168
    %v2051 = vunpack.c.0.s8 %v2050
    %v2052 = vlaneseq
    %v2053 = vshrl.u32 %v2052, 7
    %v2054 = vsub.s32 %v2051, %v2053
    %v2055 = vrot.slane %v2041, %v2054
    %v2056 = vcombine.low %v2048, %v2055
    %v2057 = vcombine.low %v985, %v989
    %v2058 = vcombine.low %v993, %v997
    %v2059 = vcombine.low %v1001, %v1005
    %v2060 = vcombine.low %v1009, %v1013
    %v2062 = vunpack.c.l.s4 1966171168
    %v2063 = vunpack.c.0.s8 %v2062
    %v2064 = vlaneseq
    %v2065 = vshrl.u32 %v2064, 7
    %v2066 = vsub.s32 %v2063, %v2065
    %v2067 = vrot.slane %v2057, %v2066
    %v2069 = vunpack.c.l.s4 1966171168
    %v2070 = vunpack.c.0.s8 %v2069
    %v2071 = vlaneseq
    %v2072 = vshrl.u32 %v2071, 7
    %v2073 = vsub.s32 %v2070, %v2072
    %v2074 = vrot.slane %v2058, %v2073
    %v2076 = vunpack.c.l.s4 1966171168
    %v2077 = vunpack.c.0.s8 %v2076
    %v2078 = vlaneseq
    %v2079 = vshrl.u32 %v2078, 7
    %v2080 = vsub.s32 %v2077, %v2079
    %v2081 = vrot.slane %v2059, %v2080
    %v2083 = vunpack.c.l.s4 1966171168
    %v2084 = vunpack.c.0.s8 %v2083
    %v2085 = vlaneseq
    %v2086 = vshrl.u32 %v2085, 7
    %v2087 = vsub.s32 %v2084, %v2086
    %v2088 = vrot.slane %v2060, %v2087
    %v2089 = vcombine.low %v2067, %v2074
    %v2090 = vcombine.low %v2081, %v2088
    %v2092 = vunpack.c.l.s4 1966171168
    %v2093 = vunpack.c.0.s8 %v2092
    %v2094 = vlaneseq
    %v2095 = vshrl.u32 %v2094, 7
    %v2096 = vsub.s32 %v2093, %v2095
    %v2097 = vrot.slane %v2089, %v2096
    %v2099 = vunpack.c.l.s4 1966171168
    %v2100 = vunpack.c.0.s8 %v2099
    %v2101 = vlaneseq
    %v2102 = vshrl.u32 %v2101, 7
    %v2103 = vsub.s32 %v2100, %v2102
    %v2104 = vrot.slane %v2090, %v2103
    %v2105 = vcombine.low %v2097, %v2104
    %v2106 = vcombine.low %v1017, %v1021
    %v2107 = vcombine.low %v1025, %v1029
    %v2108 = vcombine.low %v1033, %v1037
    %v2109 = vcombine.low %v1041, %v1045
    %v2111 = vunpack.c.l.s4 1966171168
    %v2112 = vunpack.c.0.s8 %v2111
    %v2113 = vlaneseq
    %v2114 = vshrl.u32 %v2113, 7
    %v2115 = vsub.s32 %v2112, %v2114
    %v2116 = vrot.slane %v2106, %v2115
    %v2118 = vunpack.c.l.s4 1966171168
    %v2119 = vunpack.c.0.s8 %v2118
    %v2120 = vlaneseq
    %v2121 = vshrl.u32 %v2120, 7
    %v2122 = vsub.s32 %v2119, %v2121
    %v2123 = vrot.slane %v2107, %v2122
    %v2125 = vunpack.c.l.s4 1966171168
    %v2126 = vunpack.c.0.s8 %v2125
    %v2127 = vlaneseq
    %v2128 = vshrl.u32 %v2127, 7
    %v2129 = vsub.s32 %v2126, %v2128
    %v2130 = vrot.slane %v2108, %v2129
    %v2132 = vunpack.c.l.s4 1966171168
    %v2133 = vunpack.c.0.s8 %v2132
    %v2134 = vlaneseq
    %v2135 = vshrl.u32 %v2134, 7
    %v2136 = vsub.s32 %v2133, %v2135
    %v2137 = vrot.slane %v2109, %v2136
    %v2138 = vcombine.low %v2116, %v2123
    %v2139 = vcombine.low %v2130, %v2137
    %v2141 = vunpack.c.l.s4 1966171168
    %v2142 = vunpack.c.0.s8 %v2141
    %v2143 = vlaneseq
    %v2144 = vshrl.u32 %v2143, 7
    %v2145 = vsub.s32 %v2142, %v2144
    %v2146 = vrot.slane %v2138, %v2145
    %v2148 = vunpack.c.l.s4 1966171168
    %v2149 = vunpack.c.0.s8 %v2148
    %v2150 = vlaneseq
    %v2151 = vshrl.u32 %v2150, 7
    %v2152 = vsub.s32 %v2149, %v2151
    %v2153 = vrot.slane %v2139, %v2152
    %v2154 = vcombine.low %v2146, %v2153
    %v2155 = vcombine.low %v1049, %v1053
    %v2156 = vcombine.low %v1057, %v1061
    %v2157 = vcombine.low %v1065, %v1069
    %v2158 = vcombine.low %v1073, %v1077
    %v2160 = vunpack.c.l.s4 1966171168
    %v2161 = vunpack.c.0.s8 %v2160
    %v2162 = vlaneseq
    %v2163 = vshrl.u32 %v2162, 7
    %v2164 = vsub.s32 %v2161, %v2163
    %v2165 = vrot.slane %v2155, %v2164
    %v2167 = vunpack.c.l.s4 1966171168
    %v2168 = vunpack.c.0.s8 %v2167
    %v2169 = vlaneseq
    %v2170 = vshrl.u32 %v2169, 7
    %v2171 = vsub.s32 %v2168, %v2170
    %v2172 = vrot.slane %v2156, %v2171
    %v2174 = vunpack.c.l.s4 1966171168
    %v2175 = vunpack.c.0.s8 %v2174
    %v2176 = vlaneseq
    %v2177 = vshrl.u32 %v2176, 7
    %v2178 = vsub.s32 %v2175, %v2177
    %v2179 = vrot.slane %v2157, %v2178
    %v2181 = vunpack.c.l.s4 1966171168
    %v2182 = vunpack.c.0.s8 %v2181
    %v2183 = vlaneseq
    %v2184 = vshrl.u32 %v2183, 7
    %v2185 = vsub.s32 %v2182, %v2184
    %v2186 = vrot.slane %v2158, %v2185
    %v2187 = vcombine.low %v2165, %v2172
    %v2188 = vcombine.low %v2179, %v2186
    %v2190 = vunpack.c.l.s4 1966171168
    %v2191 = vunpack.c.0.s8 %v2190
    %v2192 = vlaneseq
    %v2193 = vshrl.u32 %v2192, 7
    %v2194 = vsub.s32 %v2191, %v2193
    %v2195 = vrot.slane %v2187, %v2194
    %v2197 = vunpack.c.l.s4 1966171168
    %v2198 = vunpack.c.0.s8 %v2197
    %v2199 = vlaneseq
    %v2200 = vshrl.u32 %v2199, 7
    %v2201 = vsub.s32 %v2198, %v2200
    %v2202 = vrot.slane %v2188, %v2201
    %v2203 = vcombine.low %v2195, %v2202
    %v2204 = vcombine.low %v1081, %v1085
    %v2205 = vcombine.low %v1089, %v1093
    %v2206 = vcombine.low %v1097, %v1101
    %v2207 = vcombine.low %v1105, %v1109
    %v2209 = vunpack.c.l.s4 1966171168
    %v2210 = vunpack.c.0.s8 %v2209
    %v2211 = vlaneseq
    %v2212 = vshrl.u32 %v2211, 7
    %v2213 = vsub.s32 %v2210, %v2212
    %v2214 = vrot.slane %v2204, %v2213
    %v2216 = vunpack.c.l.s4 1966171168
    %v2217 = vunpack.c.0.s8 %v2216
    %v2218 = vlaneseq
    %v2219 = vshrl.u32 %v2218, 7
    %v2220 = vsub.s32 %v2217, %v2219
    %v2221 = vrot.slane %v2205, %v2220
    %v2223 = vunpack.c.l.s4 1966171168
    %v2224 = vunpack.c.0.s8 %v2223
    %v2225 = vlaneseq
    %v2226 = vshrl.u32 %v2225, 7
    %v2227 = vsub.s32 %v2224, %v2226
    %v2228 = vrot.slane %v2206, %v2227
    %v2230 = vunpack.c.l.s4 1966171168
    %v2231 = vunpack.c.0.s8 %v2230
    %v2232 = vlaneseq
    %v2233 = vshrl.u32 %v2232, 7
    %v2234 = vsub.s32 %v2231, %v2233
    %v2235 = vrot.slane %v2207, %v2234
    %v2236 = vcombine.low %v2214, %v2221
    %v2237 = vcombine.low %v2228, %v2235
    %v2239 = vunpack.c.l.s4 1966171168
    %v2240 = vunpack.c.0.s8 %v2239
    %v2241 = vlaneseq
    %v2242 = vshrl.u32 %v2241, 7
    %v2243 = vsub.s32 %v2240, %v2242
    %v2244 = vrot.slane %v2236, %v2243
    %v2246 = vunpack.c.l.s4 1966171168
    %v2247 = vunpack.c.0.s8 %v2246
    %v2248 = vlaneseq
    %v2249 = vshrl.u32 %v2248, 7
    %v2250 = vsub.s32 %v2247, %v2249
    %v2251 = vrot.slane %v2237, %v2250
    %v2252 = vcombine.low %v2244, %v2251
    %v2253 = vcombine.low %v1113, %v1117
    %v2254 = vcombine.low %v1121, %v1125
    %v2255 = vcombine.low %v1129, %v1133
    %v2256 = vcombine.low %v1137, %v1141
    %v2258 = vunpack.c.l.s4 1966171168
    %v2259 = vunpack.c.0.s8 %v2258
    %v2260 = vlaneseq
    %v2261 = vshrl.u32 %v2260, 7
    %v2262 = vsub.s32 %v2259, %v2261
    %v2263 = vrot.slane %v2253, %v2262
    %v2265 = vunpack.c.l.s4 1966171168
    %v2266 = vunpack.c.0.s8 %v2265
    %v2267 = vlaneseq
    %v2268 = vshrl.u32 %v2267, 7
    %v2269 = vsub.s32 %v2266, %v2268
    %v2270 = vrot.slane %v2254, %v2269
    %v2272 = vunpack.c.l.s4 1966171168
    %v2273 = vunpack.c.0.s8 %v2272
    %v2274 = vlaneseq
    %v2275 = vshrl.u32 %v2274, 7
    %v2276 = vsub.s32 %v2273, %v2275
    %v2277 = vrot.slane %v2255, %v2276
    %v2279 = vunpack.c.l.s4 1966171168
    %v2280 = vunpack.c.0.s8 %v2279
    %v2281 = vlaneseq
    %v2282 = vshrl.u32 %v2281, 7
    %v2283 = vsub.s32 %v2280, %v2282
    %v2284 = vrot.slane %v2256, %v2283
    %v2285 = vcombine.low %v2263, %v2270
    %v2286 = vcombine.low %v2277, %v2284
    %v2288 = vunpack.c.l.s4 1966171168
    %v2289 = vunpack.c.0.s8 %v2288
    %v2290 = vlaneseq
    %v2291 = vshrl.u32 %v2290, 7
    %v2292 = vsub.s32 %v2289, %v2291
    %v2293 = vrot.slane %v2285, %v2292
    %v2295 = vunpack.c.l.s4 1966171168
    %v2296 = vunpack.c.0.s8 %v2295
    %v2297 = vlaneseq
    %v2298 = vshrl.u32 %v2297, 7
    %v2299 = vsub.s32 %v2296, %v2298
    %v2300 = vrot.slane %v2286, %v2299
    %v2301 = vcombine.low %v2293, %v2300
    %v2302 = vcombine.low %v1145, %v1149
    %v2303 = vcombine.low %v1153, %v1157
    %v2304 = vcombine.low %v1161, %v1165
    %v2305 = vcombine.low %v1169, %v1173
    %v2307 = vunpack.c.l.s4 1966171168
    %v2308 = vunpack.c.0.s8 %v2307
    %v2309 = vlaneseq
    %v2310 = vshrl.u32 %v2309, 7
    %v2311 = vsub.s32 %v2308, %v2310
    %v2312 = vrot.slane %v2302, %v2311
    %v2314 = vunpack.c.l.s4 1966171168
    %v2315 = vunpack.c.0.s8 %v2314
    %v2316 = vlaneseq
    %v2317 = vshrl.u32 %v2316, 7
    %v2318 = vsub.s32 %v2315, %v2317
    %v2319 = vrot.slane %v2303, %v2318
    %v2321 = vunpack.c.l.s4 1966171168
    %v2322 = vunpack.c.0.s8 %v2321
    %v2323 = vlaneseq
    %v2324 = vshrl.u32 %v2323, 7
    %v2325 = vsub.s32 %v2322, %v2324
    %v2326 = vrot.slane %v2304, %v2325
    %v2328 = vunpack.c.l.s4 1966171168
    %v2329 = vunpack.c.0.s8 %v2328
    %v2330 = vlaneseq
    %v2331 = vshrl.u32 %v2330, 7
    %v2332 = vsub.s32 %v2329, %v2331
    %v2333 = vrot.slane %v2305, %v2332
    %v2334 = vcombine.low %v2312, %v2319
    %v2335 = vcombine.low %v2326, %v2333
    %v2337 = vunpack.c.l.s4 1966171168
    %v2338 = vunpack.c.0.s8 %v2337
    %v2339 = vlaneseq
    %v2340 = vshrl.u32 %v2339, 7
    %v2341 = vsub.s32 %v2338, %v2340
    %v2342 = vrot.slane %v2334, %v2341
    %v2344 = vunpack.c.l.s4 1966171168
    %v2345 = vunpack.c.0.s8 %v2344
    %v2346 = vlaneseq
    %v2347 = vshrl.u32 %v2346, 7
    %v2348 = vsub.s32 %v2345, %v2347
    %v2349 = vrot.slane %v2335, %v2348
    %v2350 = vcombine.low %v2342, %v2349
    %v2351 = vcombine.low %v1177, %v1181
    %v2352 = vcombine.low %v1185, %v1189
    %v2353 = vcombine.low %v1193, %v1197
    %v2354 = vcombine.low %v1201, %v1205
    %v2356 = vunpack.c.l.s4 1966171168
    %v2357 = vunpack.c.0.s8 %v2356
    %v2358 = vlaneseq
    %v2359 = vshrl.u32 %v2358, 7
    %v2360 = vsub.s32 %v2357, %v2359
    %v2361 = vrot.slane %v2351, %v2360
    %v2363 = vunpack.c.l.s4 1966171168
    %v2364 = vunpack.c.0.s8 %v2363
    %v2365 = vlaneseq
    %v2366 = vshrl.u32 %v2365, 7
    %v2367 = vsub.s32 %v2364, %v2366
    %v2368 = vrot.slane %v2352, %v2367
    %v2370 = vunpack.c.l.s4 1966171168
    %v2371 = vunpack.c.0.s8 %v2370
    %v2372 = vlaneseq
    %v2373 = vshrl.u32 %v2372, 7
    %v2374 = vsub.s32 %v2371, %v2373
    %v2375 = vrot.slane %v2353, %v2374
    %v2377 = vunpack.c.l.s4 1966171168
    %v2378 = vunpack.c.0.s8 %v2377
    %v2379 = vlaneseq
    %v2380 = vshrl.u32 %v2379, 7
    %v2381 = vsub.s32 %v2378, %v2380
    %v2382 = vrot.slane %v2354, %v2381
    %v2383 = vcombine.low %v2361, %v2368
    %v2384 = vcombine.low %v2375, %v2382
    %v2386 = vunpack.c.l.s4 1966171168
    %v2387 = vunpack.c.0.s8 %v2386
    %v2388 = vlaneseq
    %v2389 = vshrl.u32 %v2388, 7
    %v2390 = vsub.s32 %v2387, %v2389
    %v2391 = vrot.slane %v2383, %v2390
    %v2393 = vunpack.c.l.s4 1966171168
    %v2394 = vunpack.c.0.s8 %v2393
    %v2395 = vlaneseq
    %v2396 = vshrl.u32 %v2395, 7
    %v2397 = vsub.s32 %v2394, %v2396
    %v2398 = vrot.slane %v2384, %v2397
    %v2399 = vcombine.low %v2391, %v2398
    %v2400 = vcombine.low %v1209, %v1213
    %v2401 = vcombine.low %v1217, %v1221
    %v2402 = vcombine.low %v1225, %v1229
    %v2403 = vcombine.low %v1233, %v1237
    %v2405 = vunpack.c.l.s4 1966171168
    %v2406 = vunpack.c.0.s8 %v2405
    %v2407 = vlaneseq
    %v2408 = vshrl.u32 %v2407, 7
    %v2409 = vsub.s32 %v2406, %v2408
    %v2410 = vrot.slane %v2400, %v2409
    %v2412 = vunpack.c.l.s4 1966171168
    %v2413 = vunpack.c.0.s8 %v2412
    %v2414 = vlaneseq
    %v2415 = vshrl.u32 %v2414, 7
    %v2416 = vsub.s32 %v2413, %v2415
    %v2417 = vrot.slane %v2401, %v2416
    %v2419 = vunpack.c.l.s4 1966171168
    %v2420 = vunpack.c.0.s8 %v2419
    %v2421 = vlaneseq
    %v2422 = vshrl.u32 %v2421, 7
    %v2423 = vsub.s32 %v2420, %v2422
    %v2424 = vrot.slane %v2402, %v2423
    %v2426 = vunpack.c.l.s4 1966171168
    %v2427 = vunpack.c.0.s8 %v2426
    %v2428 = vlaneseq
    %v2429 = vshrl.u32 %v2428, 7
    %v2430 = vsub.s32 %v2427, %v2429
    %v2431 = vrot.slane %v2403, %v2430
    %v2432 = vcombine.low %v2410, %v2417
    %v2433 = vcombine.low %v2424, %v2431
    %v2435 = vunpack.c.l.s4 1966171168
    %v2436 = vunpack.c.0.s8 %v2435
    %v2437 = vlaneseq
    %v2438 = vshrl.u32 %v2437, 7
    %v2439 = vsub.s32 %v2436, %v2438
    %v2440 = vrot.slane %v2432, %v2439
    %v2442 = vunpack.c.l.s4 1966171168
    %v2443 = vunpack.c.0.s8 %v2442
    %v2444 = vlaneseq
    %v2445 = vshrl.u32 %v2444, 7
    %v2446 = vsub.s32 %v2443, %v2445
    %v2447 = vrot.slane %v2433, %v2446
    %v2448 = vcombine.low %v2440, %v2447
    %v2449 = vcombine.low %v1241, %v1245
    %v2450 = vcombine.low %v1249, %v1253
    %v2451 = vcombine.low %v1257, %v1261
    %v2452 = vcombine.low %v1265, %v1269
    %v2454 = vunpack.c.l.s4 1966171168
    %v2455 = vunpack.c.0.s8 %v2454
    %v2456 = vlaneseq
    %v2457 = vshrl.u32 %v2456, 7
    %v2458 = vsub.s32 %v2455, %v2457
    %v2459 = vrot.slane %v2449, %v2458
    %v2461 = vunpack.c.l.s4 1966171168
    %v2462 = vunpack.c.0.s8 %v2461
    %v2463 = vlaneseq
    %v2464 = vshrl.u32 %v2463, 7
    %v2465 = vsub.s32 %v2462, %v2464
    %v2466 = vrot.slane %v2450, %v2465
    %v2468 = vunpack.c.l.s4 1966171168
    %v2469 = vunpack.c.0.s8 %v2468
    %v2470 = vlaneseq
    %v2471 = vshrl.u32 %v2470, 7
    %v2472 = vsub.s32 %v2469, %v2471
    %v2473 = vrot.slane %v2451, %v2472
    %v2475 = vunpack.c.l.s4 1966171168
    %v2476 = vunpack.c.0.s8 %v2475
    %v2477 = vlaneseq
    %v2478 = vshrl.u32 %v2477, 7
    %v2479 = vsub.s32 %v2476, %v2478
    %v2480 = vrot.slane %v2452, %v2479
    %v2481 = vcombine.low %v2459, %v2466
    %v2482 = vcombine.low %v2473, %v2480
    %v2484 = vunpack.c.l.s4 1966171168
    %v2485 = vunpack.c.0.s8 %v2484
    %v2486 = vlaneseq
    %v2487 = vshrl.u32 %v2486, 7
    %v2488 = vsub.s32 %v2485, %v2487
    %v2489 = vrot.slane %v2481, %v2488
    %v2491 = vunpack.c.l.s4 1966171168
    %v2492 = vunpack.c.0.s8 %v2491
    %v2493 = vlaneseq
    %v2494 = vshrl.u32 %v2493, 7
    %v2495 = vsub.s32 %v2492, %v2494
    %v2496 = vrot.slane %v2482, %v2495
    %v2497 = vcombine.low %v2489, %v2496
    %v2498 = vcombine.low %v1273, %v1277
    %v2499 = vcombine.low %v1281, %v1285
    %v2500 = vcombine.low %v1289, %v1293
    %v2501 = vcombine.low %v1297, %v1301
    %v2503 = vunpack.c.l.s4 1966171168
    %v2504 = vunpack.c.0.s8 %v2503
    %v2505 = vlaneseq
    %v2506 = vshrl.u32 %v2505, 7
    %v2507 = vsub.s32 %v2504, %v2506
    %v2508 = vrot.slane %v2498, %v2507
    %v2510 = vunpack.c.l.s4 1966171168
    %v2511 = vunpack.c.0.s8 %v2510
    %v2512 = vlaneseq
    %v2513 = vshrl.u32 %v2512, 7
    %v2514 = vsub.s32 %v2511, %v2513
    %v2515 = vrot.slane %v2499, %v2514
    %v2517 = vunpack.c.l.s4 1966171168
    %v2518 = vunpack.c.0.s8 %v2517
    %v2519 = vlaneseq
    %v2520 = vshrl.u32 %v2519, 7
    %v2521 = vsub.s32 %v2518, %v2520
    %v2522 = vrot.slane %v2500, %v2521
    %v2524 = vunpack.c.l.s4 1966171168
    %v2525 = vunpack.c.0.s8 %v2524
    %v2526 = vlaneseq
    %v2527 = vshrl.u32 %v2526, 7
    %v2528 = vsub.s32 %v2525, %v2527
    %v2529 = vrot.slane %v2501, %v2528
    %v2530 = vcombine.low %v2508, %v2515
    %v2531 = vcombine.low %v2522, %v2529
    %v2533 = vunpack.c.l.s4 1966171168
    %v2534 = vunpack.c.0.s8 %v2533
    %v2535 = vlaneseq
    %v2536 = vshrl.u32 %v2535, 7
    %v2537 = vsub.s32 %v2534, %v2536
    %v2538 = vrot.slane %v2530, %v2537
    %v2540 = vunpack.c.l.s4 1966171168
    %v2541 = vunpack.c.0.s8 %v2540
    %v2542 = vlaneseq
    %v2543 = vshrl.u32 %v2542, 7
    %v2544 = vsub.s32 %v2541, %v2543
    %v2545 = vrot.slane %v2531, %v2544
    %v2546 = vcombine.low %v2538, %v2545
    %v2547 = vcombine.low %v1305, %v1309
    %v2548 = vcombine.low %v1313, %v1317
    %v2549 = vcombine.low %v1321, %v1325
    %v2550 = vcombine.low %v1329, %v1333
    %v2552 = vunpack.c.l.s4 1966171168
    %v2553 = vunpack.c.0.s8 %v2552
    %v2554 = vlaneseq
    %v2555 = vshrl.u32 %v2554, 7
    %v2556 = vsub.s32 %v2553, %v2555
    %v2557 = vrot.slane %v2547, %v2556
    %v2559 = vunpack.c.l.s4 1966171168
    %v2560 = vunpack.c.0.s8 %v2559
    %v2561 = vlaneseq
    %v2562 = vshrl.u32 %v2561, 7
    %v2563 = vsub.s32 %v2560, %v2562
    %v2564 = vrot.slane %v2548, %v2563
    %v2566 = vunpack.c.l.s4 1966171168
    %v2567 = vunpack.c.0.s8 %v2566
    %v2568 = vlaneseq
    %v2569 = vshrl.u32 %v2568, 7
    %v2570 = vsub.s32 %v2567, %v2569
    %v2571 = vrot.slane %v2549, %v2570
    %v2573 = vunpack.c.l.s4 1966171168
    %v2574 = vunpack.c.0.s8 %v2573
    %v2575 = vlaneseq
    %v2576 = vshrl.u32 %v2575, 7
    %v2577 = vsub.s32 %v2574, %v2576
    %v2578 = vrot.slane %v2550, %v2577
    %v2579 = vcombine.low %v2557, %v2564
    %v2580 = vcombine.low %v2571, %v2578
    %v2582 = vunpack.c.l.s4 1966171168
    %v2583 = vunpack.c.0.s8 %v2582
    %v2584 = vlaneseq
    %v2585 = vshrl.u32 %v2584, 7
    %v2586 = vsub.s32 %v2583, %v2585
    %v2587 = vrot.slane %v2579, %v2586
    %v2589 = vunpack.c.l.s4 1966171168
    %v2590 = vunpack.c.0.s8 %v2589
    %v2591 = vlaneseq
    %v2592 = vshrl.u32 %v2591, 7
    %v2593 = vsub.s32 %v2590, %v2592
    %v2594 = vrot.slane %v2580, %v2593
    %v2595 = vcombine.low %v2587, %v2594
    %v2596 = vcombine.low %v1337, %v1341
    %v2597 = vcombine.low %v1345, %v1349
    %v2598 = vcombine.low %v1353, %v1357
    %v2599 = vcombine.low %v1361, %v1365
    %v2601 = vunpack.c.l.s4 1966171168
    %v2602 = vunpack.c.0.s8 %v2601
    %v2603 = vlaneseq
    %v2604 = vshrl.u32 %v2603, 7
    %v2605 = vsub.s32 %v2602, %v2604
    %v2606 = vrot.slane %v2596, %v2605
    %v2608 = vunpack.c.l.s4 1966171168
    %v2609 = vunpack.c.0.s8 %v2608
    %v2610 = vlaneseq
    %v2611 = vshrl.u32 %v2610, 7
    %v2612 = vsub.s32 %v2609, %v2611
    %v2613 = vrot.slane %v2597, %v2612
    %v2615 = vunpack.c.l.s4 1966171168
    %v2616 = vunpack.c.0.s8 %v2615
    %v2617 = vlaneseq
    %v2618 = vshrl.u32 %v2617, 7
    %v2619 = vsub.s32 %v2616, %v2618
    %v2620 = vrot.slane %v2598, %v2619
    %v2622 = vunpack.c.l.s4 1966171168
    %v2623 = vunpack.c.0.s8 %v2622
    %v2624 = vlaneseq
    %v2625 = vshrl.u32 %v2624, 7
    %v2626 = vsub.s32 %v2623, %v2625
    %v2627 = vrot.slane %v2599, %v2626
    %v2628 = vcombine.low %v2606, %v2613
    %v2629 = vcombine.low %v2620, %v2627
    %v2631 = vunpack.c.l.s4 1966171168
    %v2632 = vunpack.c.0.s8 %v2631
    %v2633 = vlaneseq
    %v2634 = vshrl.u32 %v2633, 7
    %v2635 = vsub.s32 %v2632, %v2634
    %v2636 = vrot.slane %v2628, %v2635
    %v2638 = vunpack.c.l.s4 1966171168
    %v2639 = vunpack.c.0.s8 %v2638
    %v2640 = vlaneseq
    %v2641 = vshrl.u32 %v2640, 7
    %v2642 = vsub.s32 %v2639, %v2641
    %v2643 = vrot.slane %v2629, %v2642
    %v2644 = vcombine.low %v2636, %v2643
    %v2645 = vcombine.low %v1369, %v1373
    %v2646 = vcombine.low %v1377, %v1381
    %v2647 = vcombine.low %v1385, %v1389
    %v2648 = vcombine.low %v1393, %v1397
    %v2650 = vunpack.c.l.s4 1966171168
    %v2651 = vunpack.c.0.s8 %v2650
    %v2652 = vlaneseq
    %v2653 = vshrl.u32 %v2652, 7
    %v2654 = vsub.s32 %v2651, %v2653
    %v2655 = vrot.slane %v2645, %v2654
    %v2657 = vunpack.c.l.s4 1966171168
    %v2658 = vunpack.c.0.s8 %v2657
    %v2659 = vlaneseq
    %v2660 = vshrl.u32 %v2659, 7
    %v2661 = vsub.s32 %v2658, %v2660
    %v2662 = vrot.slane %v2646, %v2661
    %v2664 = vunpack.c.l.s4 1966171168
    %v2665 = vunpack.c.0.s8 %v2664
    %v2666 = vlaneseq
    %v2667 = vshrl.u32 %v2666, 7
    %v2668 = vsub.s32 %v2665, %v2667
    %v2669 = vrot.slane %v2647, %v2668
    %v2671 = vunpack.c.l.s4 1966171168
    %v2672 = vunpack.c.0.s8 %v2671
    %v2673 = vlaneseq
    %v2674 = vshrl.u32 %v2673, 7
    %v2675 = vsub.s32 %v2672, %v2674
    %v2676 = vrot.slane %v2648, %v2675
    %v2677 = vcombine.low %v2655, %v2662
    %v2678 = vcombine.low %v2669, %v2676
    %v2680 = vunpack.c.l.s4 1966171168
    %v2681 = vunpack.c.0.s8 %v2680
    %v2682 = vlaneseq
    %v2683 = vshrl.u32 %v2682, 7
    %v2684 = vsub.s32 %v2681, %v2683
    %v2685 = vrot.slane %v2677, %v2684
    %v2687 = vunpack.c.l.s4 1966171168
    %v2688 = vunpack.c.0.s8 %v2687
    %v2689 = vlaneseq
    %v2690 = vshrl.u32 %v2689, 7
    %v2691 = vsub.s32 %v2688, %v2690
    %v2692 = vrot.slane %v2678, %v2691
    %v2693 = vcombine.low %v2685, %v2692
    %v2694 = vcombine.low %v1401, %v1405
    %v2695 = vcombine.low %v1409, %v1413
    %v2696 = vcombine.low %v1417, %v1421
    %v2697 = vcombine.low %v1425, %v1429
    %v2699 = vunpack.c.l.s4 1966171168
    %v2700 = vunpack.c.0.s8 %v2699
    %v2701 = vlaneseq
    %v2702 = vshrl.u32 %v2701, 7
    %v2703 = vsub.s32 %v2700, %v2702
    %v2704 = vrot.slane %v2694, %v2703
    %v2706 = vunpack.c.l.s4 1966171168
    %v2707 = vunpack.c.0.s8 %v2706
    %v2708 = vlaneseq
    %v2709 = vshrl.u32 %v2708, 7
    %v2710 = vsub.s32 %v2707, %v2709
    %v2711 = vrot.slane %v2695, %v2710
    %v2713 = vunpack.c.l.s4 1966171168
    %v2714 = vunpack.c.0.s8 %v2713
    %v2715 = vlaneseq
    %v2716 = vshrl.u32 %v2715, 7
    %v2717 = vsub.s32 %v2714, %v2716
    %v2718 = vrot.slane %v2696, %v2717
    %v2720 = vunpack.c.l.s4 1966171168
    %v2721 = vunpack.c.0.s8 %v2720
    %v2722 = vlaneseq
    %v2723 = vshrl.u32 %v2722, 7
    %v2724 = vsub.s32 %v2721, %v2723
    %v2725 = vrot.slane %v2697, %v2724
    %v2726 = vcombine.low %v2704, %v2711
    %v2727 = vcombine.low %v2718, %v2725
    %v2729 = vunpack.c.l.s4 1966171168
    %v2730 = vunpack.c.0.s8 %v2729
    %v2731 = vlaneseq
    %v2732 = vshrl.u32 %v2731, 7
    %v2733 = vsub.s32 %v2730, %v2732
    %v2734 = vrot.slane %v2726, %v2733
    %v2736 = vunpack.c.l.s4 1966171168
    %v2737 = vunpack.c.0.s8 %v2736
    %v2738 = vlaneseq
    %v2739 = vshrl.u32 %v2738, 7
    %v2740 = vsub.s32 %v2737, %v2739
    %v2741 = vrot.slane %v2727, %v2740
    %v2742 = vcombine.low %v2734, %v2741
    %v2743 = vcombine.low %v1433, %v1437
    %v2744 = vcombine.low %v1441, %v1445
    %v2745 = vcombine.low %v1449, %v1453
    %v2746 = vcombine.low %v1457, %v1461
    %v2748 = vunpack.c.l.s4 1966171168
    %v2749 = vunpack.c.0.s8 %v2748
    %v2750 = vlaneseq
    %v2751 = vshrl.u32 %v2750, 7
    %v2752 = vsub.s32 %v2749, %v2751
    %v2753 = vrot.slane %v2743, %v2752
    %v2755 = vunpack.c.l.s4 1966171168
    %v2756 = vunpack.c.0.s8 %v2755
    %v2757 = vlaneseq
    %v2758 = vshrl.u32 %v2757, 7
    %v2759 = vsub.s32 %v2756, %v2758
    %v2760 = vrot.slane %v2744, %v2759
    %v2762 = vunpack.c.l.s4 1966171168
    %v2763 = vunpack.c.0.s8 %v2762
    %v2764 = vlaneseq
    %v2765 = vshrl.u32 %v2764, 7
    %v2766 = vsub.s32 %v2763, %v2765
    %v2767 = vrot.slane %v2745, %v2766
    %v2769 = vunpack.c.l.s4 1966171168
    %v2770 = vunpack.c.0.s8 %v2769
    %v2771 = vlaneseq
    %v2772 = vshrl.u32 %v2771, 7
    %v2773 = vsub.s32 %v2770, %v2772
    %v2774 = vrot.slane %v2746, %v2773
    %v2775 = vcombine.low %v2753, %v2760
    %v2776 = vcombine.low %v2767, %v2774
    %v2778 = vunpack.c.l.s4 1966171168
    %v2779 = vunpack.c.0.s8 %v2778
    %v2780 = vlaneseq
    %v2781 = vshrl.u32 %v2780, 7
    %v2782 = vsub.s32 %v2779, %v2781
    %v2783 = vrot.slane %v2775, %v2782
    %v2785 = vunpack.c.l.s4 1966171168
    %v2786 = vunpack.c.0.s8 %v2785
    %v2787 = vlaneseq
    %v2788 = vshrl.u32 %v2787, 7
    %v2789 = vsub.s32 %v2786, %v2788
    %v2790 = vrot.slane %v2776, %v2789
    %v2791 = vcombine.low %v2783, %v2790
    %v2792 = vcombine.low %v1465, %v1469
    %v2793 = vcombine.low %v1473, %v1477
    %v2794 = vcombine.low %v1481, %v1485
    %v2795 = vcombine.low %v1489, %v1493
    %v2797 = vunpack.c.l.s4 1966171168
    %v2798 = vunpack.c.0.s8 %v2797
    %v2799 = vlaneseq
    %v2800 = vshrl.u32 %v2799, 7
    %v2801 = vsub.s32 %v2798, %v2800
    %v2802 = vrot.slane %v2792, %v2801
    %v2804 = vunpack.c.l.s4 1966171168
    %v2805 = vunpack.c.0.s8 %v2804
    %v2806 = vlaneseq
    %v2807 = vshrl.u32 %v2806, 7
    %v2808 = vsub.s32 %v2805, %v2807
    %v2809 = vrot.slane %v2793, %v2808
    %v2811 = vunpack.c.l.s4 1966171168
    %v2812 = vunpack.c.0.s8 %v2811
    %v2813 = vlaneseq
    %v2814 = vshrl.u32 %v2813, 7
    %v2815 = vsub.s32 %v2812, %v2814
    %v2816 = vrot.slane %v2794, %v2815
    %v2818 = vunpack.c.l.s4 1966171168
    %v2819 = vunpack.c.0.s8 %v2818
    %v2820 = vlaneseq
    %v2821 = vshrl.u32 %v2820, 7
    %v2822 = vsub.s32 %v2819, %v2821
    %v2823 = vrot.slane %v2795, %v2822
    %v2824 = vcombine.low %v2802, %v2809
    %v2825 = vcombine.low %v2816, %v2823
    %v2827 = vunpack.c.l.s4 1966171168
    %v2828 = vunpack.c.0.s8 %v2827
    %v2829 = vlaneseq
    %v2830 = vshrl.u32 %v2829, 7
    %v2831 = vsub.s32 %v2828, %v2830
    %v2832 = vrot.slane %v2824, %v2831
    %v2834 = vunpack.c.l.s4 1966171168
    %v2835 = vunpack.c.0.s8 %v2834
    %v2836 = vlaneseq
    %v2837 = vshrl.u32 %v2836, 7
    %v2838 = vsub.s32 %v2835, %v2837
    %v2839 = vrot.slane %v2825, %v2838
    %v2840 = vcombine.low %v2832, %v2839
    %v2841 = vcombine.low %v1497, %v1501
    %v2842 = vcombine.low %v1505, %v1509
    %v2843 = vcombine.low %v1513, %v1517
    %v2844 = vcombine.low %v1521, %v1525
    %v2846 = vunpack.c.l.s4 1966171168
    %v2847 = vunpack.c.0.s8 %v2846
    %v2848 = vlaneseq
    %v2849 = vshrl.u32 %v2848, 7
    %v2850 = vsub.s32 %v2847, %v2849
    %v2851 = vrot.slane %v2841, %v2850
    %v2853 = vunpack.c.l.s4 1966171168
    %v2854 = vunpack.c.0.s8 %v2853
    %v2855 = vlaneseq
    %v2856 = vshrl.u32 %v2855, 7
    %v2857 = vsub.s32 %v2854, %v2856
    %v2858 = vrot.slane %v2842, %v2857
    %v2860 = vunpack.c.l.s4 1966171168
    %v2861 = vunpack.c.0.s8 %v2860
    %v2862 = vlaneseq
    %v2863 = vshrl.u32 %v2862, 7
    %v2864 = vsub.s32 %v2861, %v2863
    %v2865 = vrot.slane %v2843, %v2864
    %v2867 = vunpack.c.l.s4 1966171168
    %v2868 = vunpack.c.0.s8 %v2867
    %v2869 = vlaneseq
    %v2870 = vshrl.u32 %v2869, 7
    %v2871 = vsub.s32 %v2868, %v2870
    %v2872 = vrot.slane %v2844, %v2871
    %v2873 = vcombine.low %v2851, %v2858
    %v2874 = vcombine.low %v2865, %v2872
    %v2876 = vunpack.c.l.s4 1966171168
    %v2877 = vunpack.c.0.s8 %v2876
    %v2878 = vlaneseq
    %v2879 = vshrl.u32 %v2878, 7
    %v2880 = vsub.s32 %v2877, %v2879
    %v2881 = vrot.slane %v2873, %v2880
    %v2883 = vunpack.c.l.s4 1966171168
    %v2884 = vunpack.c.0.s8 %v2883
    %v2885 = vlaneseq
    %v2886 = vshrl.u32 %v2885, 7
    %v2887 = vsub.s32 %v2884, %v2886
    %v2888 = vrot.slane %v2874, %v2887
    %v2889 = vcombine.low %v2881, %v2888
    %v2890 = vcombine.low %v1529, %v1533
    %v2891 = vcombine.low %v1537, %v1541
    %v2892 = vcombine.low %v1545, %v1549
    %v2893 = vcombine.low %v1553, %v1557
    %v2895 = vunpack.c.l.s4 1966171168
    %v2896 = vunpack.c.0.s8 %v2895
    %v2897 = vlaneseq
    %v2898 = vshrl.u32 %v2897, 7
    %v2899 = vsub.s32 %v2896, %v2898
    %v2900 = vrot.slane %v2890, %v2899
    %v2902 = vunpack.c.l.s4 1966171168
    %v2903 = vunpack.c.0.s8 %v2902
    %v2904 = vlaneseq
    %v2905 = vshrl.u32 %v2904, 7
    %v2906 = vsub.s32 %v2903, %v2905
    %v2907 = vrot.slane %v2891, %v2906
    %v2909 = vunpack.c.l.s4 1966171168
    %v2910 = vunpack.c.0.s8 %v2909
    %v2911 = vlaneseq
    %v2912 = vshrl.u32 %v2911, 7
    %v2913 = vsub.s32 %v2910, %v2912
    %v2914 = vrot.slane %v2892, %v2913
    %v2916 = vunpack.c.l.s4 1966171168
    %v2917 = vunpack.c.0.s8 %v2916
    %v2918 = vlaneseq
    %v2919 = vshrl.u32 %v2918, 7
    %v2920 = vsub.s32 %v2917, %v2919
    %v2921 = vrot.slane %v2893, %v2920
    %v2922 = vcombine.low %v2900, %v2907
    %v2923 = vcombine.low %v2914, %v2921
    %v2925 = vunpack.c.l.s4 1966171168
    %v2926 = vunpack.c.0.s8 %v2925
    %v2927 = vlaneseq
    %v2928 = vshrl.u32 %v2927, 7
    %v2929 = vsub.s32 %v2926, %v2928
    %v2930 = vrot.slane %v2922, %v2929
    %v2932 = vunpack.c.l.s4 1966171168
    %v2933 = vunpack.c.0.s8 %v2932
    %v2934 = vlaneseq
    %v2935 = vshrl.u32 %v2934, 7
    %v2936 = vsub.s32 %v2933, %v2935
    %v2937 = vrot.slane %v2923, %v2936
    %v2938 = vcombine.low %v2930, %v2937
    %v2939 = vcombine.low %v1561, %v1565
    %v2940 = vcombine.low %v1569, %v1573
    %v2941 = vcombine.low %v1577, %v1581
    %v2942 = vcombine.low %v1585, %v1589
    %v2944 = vunpack.c.l.s4 1966171168
    %v2945 = vunpack.c.0.s8 %v2944
    %v2946 = vlaneseq
    %v2947 = vshrl.u32 %v2946, 7
    %v2948 = vsub.s32 %v2945, %v2947
    %v2949 = vrot.slane %v2939, %v2948
    %v2951 = vunpack.c.l.s4 1966171168
    %v2952 = vunpack.c.0.s8 %v2951
    %v2953 = vlaneseq
    %v2954 = vshrl.u32 %v2953, 7
    %v2955 = vsub.s32 %v2952, %v2954
    %v2956 = vrot.slane %v2940, %v2955
    %v2958 = vunpack.c.l.s4 1966171168
    %v2959 = vunpack.c.0.s8 %v2958
    %v2960 = vlaneseq
    %v2961 = vshrl.u32 %v2960, 7
    %v2962 = vsub.s32 %v2959, %v2961
    %v2963 = vrot.slane %v2941, %v2962
    %v2965 = vunpack.c.l.s4 1966171168
    %v2966 = vunpack.c.0.s8 %v2965
    %v2967 = vlaneseq
    %v2968 = vshrl.u32 %v2967, 7
    %v2969 = vsub.s32 %v2966, %v2968
    %v2970 = vrot.slane %v2942, %v2969
    %v2971 = vcombine.low %v2949, %v2956
    %v2972 = vcombine.low %v2963, %v2970
    %v2974 = vunpack.c.l.s4 1966171168
    %v2975 = vunpack.c.0.s8 %v2974
    %v2976 = vlaneseq
    %v2977 = vshrl.u32 %v2976, 7
    %v2978 = vsub.s32 %v2975, %v2977
    %v2979 = vrot.slane %v2971, %v2978
    %v2981 = vunpack.c.l.s4 1966171168
    %v2982 = vunpack.c.0.s8 %v2981
    %v2983 = vlaneseq
    %v2984 = vshrl.u32 %v2983, 7
    %v2985 = vsub.s32 %v2982, %v2984
    %v2986 = vrot.slane %v2972, %v2985
    %v2987 = vcombine.low %v2979, %v2986
    %v2988 = vcombine.low %v1593, %v1597
    %v2989 = vcombine.low %v1601, %v1605
    %v2990 = vcombine.low %v1609, %v1613
    %v2991 = vcombine.low %v1617, %v1621
    %v2993 = vunpack.c.l.s4 1966171168
    %v2994 = vunpack.c.0.s8 %v2993
    %v2995 = vlaneseq
    %v2996 = vshrl.u32 %v2995, 7
    %v2997 = vsub.s32 %v2994, %v2996
    %v2998 = vrot.slane %v2988, %v2997
    %v3000 = vunpack.c.l.s4 1966171168
    %v3001 = vunpack.c.0.s8 %v3000
    %v3002 = vlaneseq
    %v3003 = vshrl.u32 %v3002, 7
    %v3004 = vsub.s32 %v3001, %v3003
    %v3005 = vrot.slane %v2989, %v3004
    %v3007 = vunpack.c.l.s4 1966171168
    %v3008 = vunpack.c.0.s8 %v3007
    %v3009 = vlaneseq
    %v3010 = vshrl.u32 %v3009, 7
    %v3011 = vsub.s32 %v3008, %v3010
    %v3012 = vrot.slane %v2990, %v3011
    %v3014 = vunpack.c.l.s4 1966171168
    %v3015 = vunpack.c.0.s8 %v3014
    %v3016 = vlaneseq
    %v3017 = vshrl.u32 %v3016, 7
    %v3018 = vsub.s32 %v3015, %v3017
    %v3019 = vrot.slane %v2991, %v3018
    %v3020 = vcombine.low %v2998, %v3005
    %v3021 = vcombine.low %v3012, %v3019
    %v3023 = vunpack.c.l.s4 1966171168
    %v3024 = vunpack.c.0.s8 %v3023
    %v3025 = vlaneseq
    %v3026 = vshrl.u32 %v3025, 7
    %v3027 = vsub.s32 %v3024, %v3026
    %v3028 = vrot.slane %v3020, %v3027
    %v3030 = vunpack.c.l.s4 1966171168
    %v3031 = vunpack.c.0.s8 %v3030
    %v3032 = vlaneseq
    %v3033 = vshrl.u32 %v3032, 7
    %v3034 = vsub.s32 %v3031, %v3033
    %v3035 = vrot.slane %v3021, %v3034
    %v3036 = vcombine.low %v3028, %v3035
    %v3037 = vcombine.low %v1625, %v1629
    %v3038 = vcombine.low %v1633, %v1637
    %v3039 = vcombine.low %v1641, %v1645
    %v3040 = vcombine.low %v1649, %v1653
    %v3042 = vunpack.c.l.s4 1966171168
    %v3043 = vunpack.c.0.s8 %v3042
    %v3044 = vlaneseq
    %v3045 = vshrl.u32 %v3044, 7
    %v3046 = vsub.s32 %v3043, %v3045
    %v3047 = vrot.slane %v3037, %v3046
    %v3049 = vunpack.c.l.s4 1966171168
    %v3050 = vunpack.c.0.s8 %v3049
    %v3051 = vlaneseq
    %v3052 = vshrl.u32 %v3051, 7
    %v3053 = vsub.s32 %v3050, %v3052
    %v3054 = vrot.slane %v3038, %v3053
    %v3056 = vunpack.c.l.s4 1966171168
    %v3057 = vunpack.c.0.s8 %v3056
    %v3058 = vlaneseq
    %v3059 = vshrl.u32 %v3058, 7
    %v3060 = vsub.s32 %v3057, %v3059
    %v3061 = vrot.slane %v3039, %v3060
    %v3063 = vunpack.c.l.s4 1966171168
    %v3064 = vunpack.c.0.s8 %v3063
    %v3065 = vlaneseq
    %v3066 = vshrl.u32 %v3065, 7
    %v3067 = vsub.s32 %v3064, %v3066
    %v3068 = vrot.slane %v3040, %v3067
    %v3069 = vcombine.low %v3047, %v3054
    %v3070 = vcombine.low %v3061, %v3068
    %v3072 = vunpack.c.l.s4 1966171168
    %v3073 = vunpack.c.0.s8 %v3072
    %v3074 = vlaneseq
    %v3075 = vshrl.u32 %v3074, 7
    %v3076 = vsub.s32 %v3073, %v3075
    %v3077 = vrot.slane %v3069, %v3076
    %v3079 = vunpack.c.l.s4 1966171168
    %v3080 = vunpack.c.0.s8 %v3079
    %v3081 = vlaneseq
    %v3082 = vshrl.u32 %v3081, 7
    %v3083 = vsub.s32 %v3080, %v3082
    %v3084 = vrot.slane %v3070, %v3083
    %v3085 = vcombine.low %v3077, %v3084
    %v3086 = vcombine.low %v1657, %v1661
    %v3087 = vcombine.low %v1665, %v1669
    %v3088 = vcombine.low %v1673, %v1677
    %v3089 = vcombine.low %v1681, %v1685
    %v3091 = vunpack.c.l.s4 1966171168
    %v3092 = vunpack.c.0.s8 %v3091
    %v3093 = vlaneseq
    %v3094 = vshrl.u32 %v3093, 7
    %v3095 = vsub.s32 %v3092, %v3094
    %v3096 = vrot.slane %v3086, %v3095
    %v3098 = vunpack.c.l.s4 1966171168
    %v3099 = vunpack.c.0.s8 %v3098
    %v3100 = vlaneseq
    %v3101 = vshrl.u32 %v3100, 7
    %v3102 = vsub.s32 %v3099, %v3101
    %v3103 = vrot.slane %v3087, %v3102
    %v3105 = vunpack.c.l.s4 1966171168
    %v3106 = vunpack.c.0.s8 %v3105
    %v3107 = vlaneseq
    %v3108 = vshrl.u32 %v3107, 7
    %v3109 = vsub.s32 %v3106, %v3108
    %v3110 = vrot.slane %v3088, %v3109
    %v3112 = vunpack.c.l.s4 1966171168
    %v3113 = vunpack.c.0.s8 %v3112
    %v3114 = vlaneseq
    %v3115 = vshrl.u32 %v3114, 7
    %v3116 = vsub.s32 %v3113, %v3115
    %v3117 = vrot.slane %v3089, %v3116
    %v3118 = vcombine.low %v3096, %v3103
    %v3119 = vcombine.low %v3110, %v3117
    %v3121 = vunpack.c.l.s4 1966171168
    %v3122 = vunpack.c.0.s8 %v3121
    %v3123 = vlaneseq
    %v3124 = vshrl.u32 %v3123, 7
    %v3125 = vsub.s32 %v3122, %v3124
    %v3126 = vrot.slane %v3118, %v3125
    %v3128 = vunpack.c.l.s4 1966171168
    %v3129 = vunpack.c.0.s8 %v3128
    %v3130 = vlaneseq
    %v3131 = vshrl.u32 %v3130, 7
    %v3132 = vsub.s32 %v3129, %v3131
    %v3133 = vrot.slane %v3119, %v3132
    %v3134 = vcombine.low %v3126, %v3133
    %v3135 = vcombine.low %v1689, %v1693
    %v3136 = vcombine.low %v1697, %v1701
    %v3137 = vcombine.low %v1705, %v1709
    %v3138 = vcombine.low %v1713, %v1717
    %v3140 = vunpack.c.l.s4 1966171168
    %v3141 = vunpack.c.0.s8 %v3140
    %v3142 = vlaneseq
    %v3143 = vshrl.u32 %v3142, 7
    %v3144 = vsub.s32 %v3141, %v3143
    %v3145 = vrot.slane %v3135, %v3144
    %v3147 = vunpack.c.l.s4 1966171168
    %v3148 = vunpack.c.0.s8 %v3147
    %v3149 = vlaneseq
    %v3150 = vshrl.u32 %v3149, 7
    %v3151 = vsub.s32 %v3148, %v3150
    %v3152 = vrot.slane %v3136, %v3151
    %v3154 = vunpack.c.l.s4 1966171168
    %v3155 = vunpack.c.0.s8 %v3154
    %v3156 = vlaneseq
    %v3157 = vshrl.u32 %v3156, 7
    %v3158 = vsub.s32 %v3155, %v3157
    %v3159 = vrot.slane %v3137, %v3158
    %v3161 = vunpack.c.l.s4 1966171168
    %v3162 = vunpack.c.0.s8 %v3161
    %v3163 = vlaneseq
    %v3164 = vshrl.u32 %v3163, 7
    %v3165 = vsub.s32 %v3162, %v3164
    %v3166 = vrot.slane %v3138, %v3165
    %v3167 = vcombine.low %v3145, %v3152
    %v3168 = vcombine.low %v3159, %v3166
    %v3170 = vunpack.c.l.s4 1966171168
    %v3171 = vunpack.c.0.s8 %v3170
    %v3172 = vlaneseq
    %v3173 = vshrl.u32 %v3172, 7
    %v3174 = vsub.s32 %v3171, %v3173
    %v3175 = vrot.slane %v3167, %v3174
    %v3177 = vunpack.c.l.s4 1966171168
    %v3178 = vunpack.c.0.s8 %v3177
    %v3179 = vlaneseq
    %v3180 = vshrl.u32 %v3179, 7
    %v3181 = vsub.s32 %v3178, %v3180
    %v3182 = vrot.slane %v3168, %v3181
    %v3183 = vcombine.low %v3175, %v3182
    %v3184 = vcombine.low %v1721, %v1725
    %v3185 = vcombine.low %v1729, %v1733
    %v3186 = vcombine.low %v1737, %v1741
    %v3187 = vcombine.low %v1745, %v1749
    %v3189 = vunpack.c.l.s4 1966171168
    %v3190 = vunpack.c.0.s8 %v3189
    %v3191 = vlaneseq
    %v3192 = vshrl.u32 %v3191, 7
    %v3193 = vsub.s32 %v3190, %v3192
    %v3194 = vrot.slane %v3184, %v3193
    %v3196 = vunpack.c.l.s4 1966171168
    %v3197 = vunpack.c.0.s8 %v3196
    %v3198 = vlaneseq
    %v3199 = vshrl.u32 %v3198, 7
    %v3200 = vsub.s32 %v3197, %v3199
    %v3201 = vrot.slane %v3185, %v3200
    %v3203 = vunpack.c.l.s4 1966171168
    %v3204 = vunpack.c.0.s8 %v3203
    %v3205 = vlaneseq
    %v3206 = vshrl.u32 %v3205, 7
    %v3207 = vsub.s32 %v3204, %v3206
    %v3208 = vrot.slane %v3186, %v3207
    %v3210 = vunpack.c.l.s4 1966171168
    %v3211 = vunpack.c.0.s8 %v3210
    %v3212 = vlaneseq
    %v3213 = vshrl.u32 %v3212, 7
    %v3214 = vsub.s32 %v3211, %v3213
    %v3215 = vrot.slane %v3187, %v3214
    %v3216 = vcombine.low %v3194, %v3201
    %v3217 = vcombine.low %v3208, %v3215
    %v3219 = vunpack.c.l.s4 1966171168
    %v3220 = vunpack.c.0.s8 %v3219
    %v3221 = vlaneseq
    %v3222 = vshrl.u32 %v3221, 7
    %v3223 = vsub.s32 %v3220, %v3222
    %v3224 = vrot.slane %v3216, %v3223
    %v3226 = vunpack.c.l.s4 1966171168
    %v3227 = vunpack.c.0.s8 %v3226
    %v3228 = vlaneseq
    %v3229 = vshrl.u32 %v3228, 7
    %v3230 = vsub.s32 %v3227, %v3229
    %v3231 = vrot.slane %v3217, %v3230
    %v3232 = vcombine.low %v3224, %v3231
    %v3233 = vcombine.low %v1753, %v1757
    %v3234 = vcombine.low %v1761, %v1765
    %v3235 = vcombine.low %v1769, %v1773
    %v3236 = vcombine.low %v1777, %v1781
    %v3238 = vunpack.c.l.s4 1966171168
    %v3239 = vunpack.c.0.s8 %v3238
    %v3240 = vlaneseq
    %v3241 = vshrl.u32 %v3240, 7
    %v3242 = vsub.s32 %v3239, %v3241
    %v3243 = vrot.slane %v3233, %v3242
    %v3245 = vunpack.c.l.s4 1966171168
    %v3246 = vunpack.c.0.s8 %v3245
    %v3247 = vlaneseq
    %v3248 = vshrl.u32 %v3247, 7
    %v3249 = vsub.s32 %v3246, %v3248
    %v3250 = vrot.slane %v3234, %v3249
    %v3252 = vunpack.c.l.s4 1966171168
    %v3253 = vunpack.c.0.s8 %v3252
    %v3254 = vlaneseq
    %v3255 = vshrl.u32 %v3254, 7
    %v3256 = vsub.s32 %v3253, %v3255
    %v3257 = vrot.slane %v3235, %v3256
    %v3259 = vunpack.c.l.s4 1966171168
    %v3260 = vunpack.c.0.s8 %v3259
    %v3261 = vlaneseq
    %v3262 = vshrl.u32 %v3261, 7
    %v3263 = vsub.s32 %v3260, %v3262
    %v3264 = vrot.slane %v3236, %v3263
    %v3265 = vcombine.low %v3243, %v3250
    %v3266 = vcombine.low %v3257, %v3264
    %v3268 = vunpack.c.l.s4 1966171168
    %v3269 = vunpack.c.0.s8 %v3268
    %v3270 = vlaneseq
    %v3271 = vshrl.u32 %v3270, 7
    %v3272 = vsub.s32 %v3269, %v3271
    %v3273 = vrot.slane %v3265, %v3272
    %v3275 = vunpack.c.l.s4 1966171168
    %v3276 = vunpack.c.0.s8 %v3275
    %v3277 = vlaneseq
    %v3278 = vshrl.u32 %v3277, 7
    %v3279 = vsub.s32 %v3276, %v3278
    %v3280 = vrot.slane %v3266, %v3279
    %v3281 = vcombine.low %v3273, %v3280
    %v3282 = vcombine.low %v1785, %v1789
    %v3283 = vcombine.low %v1793, %v1797
    %v3284 = vcombine.low %v1801, %v1805
    %v3285 = vcombine.low %v1809, %v1813
    %v3287 = vunpack.c.l.s4 1966171168
    %v3288 = vunpack.c.0.s8 %v3287
    %v3289 = vlaneseq
    %v3290 = vshrl.u32 %v3289, 7
    %v3291 = vsub.s32 %v3288, %v3290
    %v3292 = vrot.slane %v3282, %v3291
    %v3294 = vunpack.c.l.s4 1966171168
    %v3295 = vunpack.c.0.s8 %v3294
    %v3296 = vlaneseq
    %v3297 = vshrl.u32 %v3296, 7
    %v3298 = vsub.s32 %v3295, %v3297
    %v3299 = vrot.slane %v3283, %v3298
    %v3301 = vunpack.c.l.s4 1966171168
    %v3302 = vunpack.c.0.s8 %v3301
    %v3303 = vlaneseq
    %v3304 = vshrl.u32 %v3303, 7
    %v3305 = vsub.s32 %v3302, %v3304
    %v3306 = vrot.slane %v3284, %v3305
    %v3308 = vunpack.c.l.s4 1966171168
    %v3309 = vunpack.c.0.s8 %v3308
    %v3310 = vlaneseq
    %v3311 = vshrl.u32 %v3310, 7
    %v3312 = vsub.s32 %v3309, %v3311
    %v3313 = vrot.slane %v3285, %v3312
    %v3314 = vcombine.low %v3292, %v3299
    %v3315 = vcombine.low %v3306, %v3313
    %v3317 = vunpack.c.l.s4 1966171168
    %v3318 = vunpack.c.0.s8 %v3317
    %v3319 = vlaneseq
    %v3320 = vshrl.u32 %v3319, 7
    %v3321 = vsub.s32 %v3318, %v3320
    %v3322 = vrot.slane %v3314, %v3321
    %v3324 = vunpack.c.l.s4 1966171168
    %v3325 = vunpack.c.0.s8 %v3324
    %v3326 = vlaneseq
    %v3327 = vshrl.u32 %v3326, 7
    %v3328 = vsub.s32 %v3325, %v3327
    %v3329 = vrot.slane %v3315, %v3328
    %v3330 = vcombine.low %v3322, %v3329
    %v3331 = vcombine.low %v1817, %v1821
    %v3332 = vcombine.low %v1825, %v1829
    %v3333 = vcombine.low %v1833, %v1837
    %v3334 = vcombine.low %v1841, %v1845
    %v3336 = vunpack.c.l.s4 1966171168
    %v3337 = vunpack.c.0.s8 %v3336
    %v3338 = vlaneseq
    %v3339 = vshrl.u32 %v3338, 7
    %v3340 = vsub.s32 %v3337, %v3339
    %v3341 = vrot.slane %v3331, %v3340
    %v3343 = vunpack.c.l.s4 1966171168
    %v3344 = vunpack.c.0.s8 %v3343
    %v3345 = vlaneseq
    %v3346 = vshrl.u32 %v3345, 7
    %v3347 = vsub.s32 %v3344, %v3346
    %v3348 = vrot.slane %v3332, %v3347
    %v3350 = vunpack.c.l.s4 1966171168
    %v3351 = vunpack.c.0.s8 %v3350
    %v3352 = vlaneseq
    %v3353 = vshrl.u32 %v3352, 7
    %v3354 = vsub.s32 %v3351, %v3353
    %v3355 = vrot.slane %v3333, %v3354
    %v3357 = vunpack.c.l.s4 1966171168
    %v3358 = vunpack.c.0.s8 %v3357
    %v3359 = vlaneseq
    %v3360 = vshrl.u32 %v3359, 7
    %v3361 = vsub.s32 %v3358, %v3360
    %v3362 = vrot.slane %v3334, %v3361
    %v3363 = vcombine.low %v3341, %v3348
    %v3364 = vcombine.low %v3355, %v3362
    %v3366 = vunpack.c.l.s4 1966171168
    %v3367 = vunpack.c.0.s8 %v3366
    %v3368 = vlaneseq
    %v3369 = vshrl.u32 %v3368, 7
    %v3370 = vsub.s32 %v3367, %v3369
    %v3371 = vrot.slane %v3363, %v3370
    %v3373 = vunpack.c.l.s4 1966171168
    %v3374 = vunpack.c.0.s8 %v3373
    %v3375 = vlaneseq
    %v3376 = vshrl.u32 %v3375, 7
    %v3377 = vsub.s32 %v3374, %v3376
    %v3378 = vrot.slane %v3364, %v3377
    %v3379 = vcombine.low %v3371, %v3378
    %v3380 = vcombine.low %v1849, %v1853
    %v3381 = vcombine.low %v1857, %v1861
    %v3382 = vcombine.low %v1865, %v1869
    %v3383 = vcombine.low %v1873, %v1877
    %v3385 = vunpack.c.l.s4 1966171168
    %v3386 = vunpack.c.0.s8 %v3385
    %v3387 = vlaneseq
    %v3388 = vshrl.u32 %v3387, 7
    %v3389 = vsub.s32 %v3386, %v3388
    %v3390 = vrot.slane %v3380, %v3389
    %v3392 = vunpack.c.l.s4 1966171168
    %v3393 = vunpack.c.0.s8 %v3392
    %v3394 = vlaneseq
    %v3395 = vshrl.u32 %v3394, 7
    %v3396 = vsub.s32 %v3393, %v3395
    %v3397 = vrot.slane %v3381, %v3396
    %v3399 = vunpack.c.l.s4 1966171168
    %v3400 = vunpack.c.0.s8 %v3399
    %v3401 = vlaneseq
    %v3402 = vshrl.u32 %v3401, 7
    %v3403 = vsub.s32 %v3400, %v3402
    %v3404 = vrot.slane %v3382, %v3403
    %v3406 = vunpack.c.l.s4 1966171168
    %v3407 = vunpack.c.0.s8 %v3406
    %v3408 = vlaneseq
    %v3409 = vshrl.u32 %v3408, 7
    %v3410 = vsub.s32 %v3407, %v3409
    %v3411 = vrot.slane %v3383, %v3410
    %v3412 = vcombine.low %v3390, %v3397
    %v3413 = vcombine.low %v3404, %v3411
    %v3415 = vunpack.c.l.s4 1966171168
    %v3416 = vunpack.c.0.s8 %v3415
    %v3417 = vlaneseq
    %v3418 = vshrl.u32 %v3417, 7
    %v3419 = vsub.s32 %v3416, %v3418
    %v3420 = vrot.slane %v3412, %v3419
    %v3422 = vunpack.c.l.s4 1966171168
    %v3423 = vunpack.c.0.s8 %v3422
    %v3424 = vlaneseq
    %v3425 = vshrl.u32 %v3424, 7
    %v3426 = vsub.s32 %v3423, %v3425
    %v3427 = vrot.slane %v3413, %v3426
    %v3428 = vcombine.low %v3420, %v3427
    %v3429 = vcombine.low %v1881, %v1885
    %v3430 = vcombine.low %v1889, %v1893
    %v3431 = vcombine.low %v1897, %v1901
    %v3432 = vcombine.low %v1905, %v1909
    %v3434 = vunpack.c.l.s4 1966171168
    %v3435 = vunpack.c.0.s8 %v3434
    %v3436 = vlaneseq
    %v3437 = vshrl.u32 %v3436, 7
    %v3438 = vsub.s32 %v3435, %v3437
    %v3439 = vrot.slane %v3429, %v3438
    %v3441 = vunpack.c.l.s4 1966171168
    %v3442 = vunpack.c.0.s8 %v3441
    %v3443 = vlaneseq
    %v3444 = vshrl.u32 %v3443, 7
    %v3445 = vsub.s32 %v3442, %v3444
    %v3446 = vrot.slane %v3430, %v3445
    %v3448 = vunpack.c.l.s4 1966171168
    %v3449 = vunpack.c.0.s8 %v3448
    %v3450 = vlaneseq
    %v3451 = vshrl.u32 %v3450, 7
    %v3452 = vsub.s32 %v3449, %v3451
    %v3453 = vrot.slane %v3431, %v3452
    %v3455 = vunpack.c.l.s4 1966171168
    %v3456 = vunpack.c.0.s8 %v3455
    %v3457 = vlaneseq
    %v3458 = vshrl.u32 %v3457, 7
    %v3459 = vsub.s32 %v3456, %v3458
    %v3460 = vrot.slane %v3432, %v3459
    %v3461 = vcombine.low %v3439, %v3446
    %v3462 = vcombine.low %v3453, %v3460
    %v3464 = vunpack.c.l.s4 1966171168
    %v3465 = vunpack.c.0.s8 %v3464
    %v3466 = vlaneseq
    %v3467 = vshrl.u32 %v3466, 7
    %v3468 = vsub.s32 %v3465, %v3467
    %v3469 = vrot.slane %v3461, %v3468
    %v3471 = vunpack.c.l.s4 1966171168
    %v3472 = vunpack.c.0.s8 %v3471
    %v3473 = vlaneseq
    %v3474 = vshrl.u32 %v3473, 7
    %v3475 = vsub.s32 %v3472, %v3474
    %v3476 = vrot.slane %v3462, %v3475
    %v3477 = vcombine.low %v3469, %v3476
    %3478 = vset.pattern.permute.xlu0 0
    %3479 = vperm.xlu0 %3478, %v1958
    %v3480 = vpop.permute.xlu0 %3479
    %3481 = vset.pattern.permute.xlu0 0
    %3482 = vperm.xlu0 %3481, %v2007
    %v3483 = vpop.permute.xlu0 %3482
    %3484 = vset.pattern.permute.xlu0 0
    %3485 = vperm.xlu0 %3484, %v2056
    %v3486 = vpop.permute.xlu0 %3485
    %3487 = vset.pattern.permute.xlu0 0
    %3488 = vperm.xlu0 %3487, %v2105
    %v3489 = vpop.permute.xlu0 %3488
    %3490 = vset.pattern.permute.xlu0 0
    %3491 = vperm.xlu0 %3490, %v2154
    %v3492 = vpop.permute.xlu0 %3491
    %3493 = vset.pattern.permute.xlu0 0
    %3494 = vperm.xlu0 %3493, %v2203
    %v3495 = vpop.permute.xlu0 %3494
    %3496 = vset.pattern.permute.xlu0 0
    %3497 = vperm.xlu0 %3496, %v2252
    %v3498 = vpop.permute.xlu0 %3497
    %3499 = vset.pattern.permute.xlu0 0
    %3500 = vperm.xlu0 %3499, %v2301
    %v3501 = vpop.permute.xlu0 %3500
    %3502 = vset.pattern.permute.xlu0 0
    %3503 = vperm.xlu0 %3502, %v2350
    %v3504 = vpop.permute.xlu0 %3503
    %3505 = vset.pattern.permute.xlu0 0
    %3506 = vperm.xlu0 %3505, %v2399
    %v3507 = vpop.permute.xlu0 %3506
    %3508 = vset.pattern.permute.xlu0 0
    %3509 = vperm.xlu0 %3508, %v2448
    %v3510 = vpop.permute.xlu0 %3509
    %3511 = vset.pattern.permute.xlu0 0
    %3512 = vperm.xlu0 %3511, %v2497
    %v3513 = vpop.permute.xlu0 %3512
    %3514 = vset.pattern.permute.xlu0 0
    %3515 = vperm.xlu0 %3514, %v2546
    %v3516 = vpop.permute.xlu0 %3515
    %3517 = vset.pattern.permute.xlu0 0
    %3518 = vperm.xlu0 %3517, %v2595
    %v3519 = vpop.permute.xlu0 %3518
    %3520 = vset.pattern.permute.xlu0 0
    %3521 = vperm.xlu0 %3520, %v2644
    %v3522 = vpop.permute.xlu0 %3521
    %3523 = vset.pattern.permute.xlu0 0
    %3524 = vperm.xlu0 %3523, %v2693
    %v3525 = vpop.permute.xlu0 %3524
    %3526 = vset.pattern.permute.xlu0 0
    %3527 = vperm.xlu0 %3526, %v2742
    %v3528 = vpop.permute.xlu0 %3527
    %3529 = vset.pattern.permute.xlu0 0
    %3530 = vperm.xlu0 %3529, %v2791
    %v3531 = vpop.permute.xlu0 %3530
    %3532 = vset.pattern.permute.xlu0 0
    %3533 = vperm.xlu0 %3532, %v2840
    %v3534 = vpop.permute.xlu0 %3533
    %3535 = vset.pattern.permute.xlu0 0
    %3536 = vperm.xlu0 %3535, %v2889
    %v3537 = vpop.permute.xlu0 %3536
    %3538 = vset.pattern.permute.xlu0 0
    %3539 = vperm.xlu0 %3538, %v2938
    %v3540 = vpop.permute.xlu0 %3539
    %3541 = vset.pattern.permute.xlu0 0
    %3542 = vperm.xlu0 %3541, %v2987
    %v3543 = vpop.permute.xlu0 %3542
    %3544 = vset.pattern.permute.xlu0 0
    %3545 = vperm.xlu0 %3544, %v3036
    %v3546 = vpop.permute.xlu0 %3545
    %3547 = vset.pattern.permute.xlu0 0
    %3548 = vperm.xlu0 %3547, %v3085
    %v3549 = vpop.permute.xlu0 %3548
    %3550 = vset.pattern.permute.xlu0 0
    %3551 = vperm.xlu0 %3550, %v3134
    %v3552 = vpop.permute.xlu0 %3551
    %3553 = vset.pattern.permute.xlu0 0
    %3554 = vperm.xlu0 %3553, %v3183
    %v3555 = vpop.permute.xlu0 %3554
    %3556 = vset.pattern.permute.xlu0 0
    %3557 = vperm.xlu0 %3556, %v3232
    %v3558 = vpop.permute.xlu0 %3557
    %3559 = vset.pattern.permute.xlu0 0
    %3560 = vperm.xlu0 %3559, %v3281
    %v3561 = vpop.permute.xlu0 %3560
    %3562 = vset.pattern.permute.xlu0 0
    %3563 = vperm.xlu0 %3562, %v3330
    %v3564 = vpop.permute.xlu0 %3563
    %3565 = vset.pattern.permute.xlu0 0
    %3566 = vperm.xlu0 %3565, %v3379
    %v3567 = vpop.permute.xlu0 %3566
    %3568 = vset.pattern.permute.xlu0 0
    %3569 = vperm.xlu0 %3568, %v3428
    %v3570 = vpop.permute.xlu0 %3569
    %3571 = vset.pattern.permute.xlu0 0
    %3572 = vperm.xlu0 %3571, %v3477
    %v3573 = vpop.permute.xlu0 %3572
    %v3574 = vlaneseq
    %v3575 = vshrl.u32 %v3574, 7
    %v3576 = vsub.s32 %v532, %v3575
    %v3577 = vrot.slane %v3480, %v3576
    %v3578 = vadd.s32 %v532, 4294967288
    %v3579 = vlaneseq
    %v3580 = vshrl.u32 %v3579, 7
    %v3581 = vsub.s32 %v3578, %v3580
    %v3582 = vrot.slane %v3483, %v3581
    %vm3583 = vcmask 130112
    %v3584 = vsel %vm3583, %v3582, %v3577
    %v3585 = vadd.s32 %v532, 4294967280
    %v3586 = vlaneseq
    %v3587 = vshrl.u32 %v3586, 7
    %v3588 = vsub.s32 %v3585, %v3587
    %v3589 = vrot.slane %v3486, %v3588
    %vm3590 = vcmask 195712
    %v3591 = vsel %vm3590, %v3589, %v3584
    %v3592 = vadd.s32 %v532, 4294967272
    %v3593 = vlaneseq
    %v3594 = vshrl.u32 %v3593, 7
    %v3595 = vsub.s32 %v3592, %v3594
    %v3596 = vrot.slane %v3489, %v3595
    %vm3597 = vcmask 261312
    %v3598 = vsel %vm3597, %v3596, %v3591
    %v3599 = vadd.s32 %v532, 4294967264
    %v3600 = vlaneseq
    %v3601 = vshrl.u32 %v3600, 7
    %v3602 = vsub.s32 %v3599, %v3601
    %v3603 = vrot.slane %v3492, %v3602
    %vm3604 = vcmask 326912
    %v3605 = vsel %vm3604, %v3603, %v3598
    %v3606 = vadd.s32 %v532, 4294967256
    %v3607 = vlaneseq
    %v3608 = vshrl.u32 %v3607, 7
    %v3609 = vsub.s32 %v3606, %v3608
    %v3610 = vrot.slane %v3495, %v3609
    %vm3611 = vcmask 392512
    %v3612 = vsel %vm3611, %v3610, %v3605
    %v3613 = vadd.s32 %v532, 4294967248
    %v3614 = vlaneseq
    %v3615 = vshrl.u32 %v3614, 7
    %v3616 = vsub.s32 %v3613, %v3615
    %v3617 = vrot.slane %v3498, %v3616
    %vm3618 = vcmask 458112
    %v3619 = vsel %vm3618, %v3617, %v3612
    %v3620 = vadd.s32 %v532, 4294967240
    %v3621 = vlaneseq
    %v3622 = vshrl.u32 %v3621, 7
    %v3623 = vsub.s32 %v3620, %v3622
    %v3624 = vrot.slane %v3501, %v3623
    %vm3625 = vcmask 523712
    %v3626 = vsel %vm3625, %v3624, %v3619
    %v3627 = vadd.s32 %v532, 4294967232
    %v3628 = vlaneseq
    %v3629 = vshrl.u32 %v3628, 7
    %v3630 = vsub.s32 %v3627, %v3629
    %v3631 = vrot.slane %v3504, %v3630
    %vm3632 = vcmask 589312
    %v3633 = vsel %vm3632, %v3631, %v3626
    %v3634 = vadd.s32 %v532, 4294967224
    %v3635 = vlaneseq
    %v3636 = vshrl.u32 %v3635, 7
    %v3637 = vsub.s32 %v3634, %v3636
    %v3638 = vrot.slane %v3507, %v3637
    %vm3639 = vcmask 654912
    %v3640 = vsel %vm3639, %v3638, %v3633
    %v3641 = vadd.s32 %v532, 4294967216
    %v3642 = vlaneseq
    %v3643 = vshrl.u32 %v3642, 7
    %v3644 = vsub.s32 %v3641, %v3643
    %v3645 = vrot.slane %v3510, %v3644
    %vm3646 = vcmask 720512
    %v3647 = vsel %vm3646, %v3645, %v3640
    %v3648 = vadd.s32 %v532, 4294967208
    %v3649 = vlaneseq
    %v3650 = vshrl.u32 %v3649, 7
    %v3651 = vsub.s32 %v3648, %v3650
    %v3652 = vrot.slane %v3513, %v3651
    %vm3653 = vcmask 786112
    %v3654 = vsel %vm3653, %v3652, %v3647
    %v3655 = vadd.s32 %v532, 4294967200
    %v3656 = vlaneseq
    %v3657 = vshrl.u32 %v3656, 7
    %v3658 = vsub.s32 %v3655, %v3657
    %v3659 = vrot.slane %v3516, %v3658
    %vm3660 = vcmask 851712
    %v3661 = vsel %vm3660, %v3659, %v3654
    %v3662 = vadd.s32 %v532, 4294967192
    %v3663 = vlaneseq
    %v3664 = vshrl.u32 %v3663, 7
    %v3665 = vsub.s32 %v3662, %v3664
    %v3666 = vrot.slane %v3519, %v3665
    %vm3667 = vcmask 917312
    %v3668 = vsel %vm3667, %v3666, %v3661
    %v3669 = vadd.s32 %v532, 4294967184
    %v3670 = vlaneseq
    %v3671 = vshrl.u32 %v3670, 7
    %v3672 = vsub.s32 %v3669, %v3671
    %v3673 = vrot.slane %v3522, %v3672
    %vm3674 = vcmask 982912
    %v3675 = vsel %vm3674, %v3673, %v3668
    %v3676 = vadd.s32 %v532, 4294967176
    %v3677 = vlaneseq
    %v3678 = vshrl.u32 %v3677, 7
    %v3679 = vsub.s32 %v3676, %v3678
    %v3680 = vrot.slane %v3525, %v3679
    %vm3681 = vcmask 1048512
    %v3682 = vsel %vm3681, %v3680, %v3675
    %v3683 = vlaneseq
    %v3684 = vshrl.u32 %v3683, 7
    %v3685 = vsub.s32 %v532, %v3684
    %v3686 = vrot.slane %v3528, %v3685
    %v3687 = vlaneseq
    %v3688 = vshrl.u32 %v3687, 7
    %v3689 = vsub.s32 %v3578, %v3688
    %v3690 = vrot.slane %v3531, %v3689
    %v3691 = vsel %vm3583, %v3690, %v3686
    %v3692 = vlaneseq
    %v3693 = vshrl.u32 %v3692, 7
    %v3694 = vsub.s32 %v3585, %v3693
    %v3695 = vrot.slane %v3534, %v3694
    %v3696 = vsel %vm3590, %v3695, %v3691
    %v3697 = vlaneseq
    %v3698 = vshrl.u32 %v3697, 7
    %v3699 = vsub.s32 %v3592, %v3698
    %v3700 = vrot.slane %v3537, %v3699
    %v3701 = vsel %vm3597, %v3700, %v3696
    %v3702 = vlaneseq
    %v3703 = vshrl.u32 %v3702, 7
    %v3704 = vsub.s32 %v3599, %v3703
    %v3705 = vrot.slane %v3540, %v3704
    %v3706 = vsel %vm3604, %v3705, %v3701
    %v3707 = vlaneseq
    %v3708 = vshrl.u32 %v3707, 7
    %v3709 = vsub.s32 %v3606, %v3708
    %v3710 = vrot.slane %v3543, %v3709
    %v3711 = vsel %vm3611, %v3710, %v3706
    %v3712 = vlaneseq
    %v3713 = vshrl.u32 %v3712, 7
    %v3714 = vsub.s32 %v3613, %v3713
    %v3715 = vrot.slane %v3546, %v3714
    %v3716 = vsel %vm3618, %v3715, %v3711
    %v3717 = vlaneseq
    %v3718 = vshrl.u32 %v3717, 7
    %v3719 = vsub.s32 %v3620, %v3718
    %v3720 = vrot.slane %v3549, %v3719
    %v3721 = vsel %vm3625, %v3720, %v3716
    %v3722 = vlaneseq
    %v3723 = vshrl.u32 %v3722, 7
    %v3724 = vsub.s32 %v3627, %v3723
    %v3725 = vrot.slane %v3552, %v3724
    %v3726 = vsel %vm3632, %v3725, %v3721
    %v3727 = vlaneseq
    %v3728 = vshrl.u32 %v3727, 7
    %v3729 = vsub.s32 %v3634, %v3728
    %v3730 = vrot.slane %v3555, %v3729
    %v3731 = vsel %vm3639, %v3730, %v3726
    %v3732 = vlaneseq
    %v3733 = vshrl.u32 %v3732, 7
    %v3734 = vsub.s32 %v3641, %v3733
    %v3735 = vrot.slane %v3558, %v3734
    %v3736 = vsel %vm3646, %v3735, %v3731
    %v3737 = vlaneseq
    %v3738 = vshrl.u32 %v3737, 7
    %v3739 = vsub.s32 %v3648, %v3738
    %v3740 = vrot.slane %v3561, %v3739
    %v3741 = vsel %vm3653, %v3740, %v3736
    %v3742 = vlaneseq
    %v3743 = vshrl.u32 %v3742, 7
    %v3744 = vsub.s32 %v3655, %v3743
    %v3745 = vrot.slane %v3564, %v3744
    %v3746 = vsel %vm3660, %v3745, %v3741
    %v3747 = vlaneseq
    %v3748 = vshrl.u32 %v3747, 7
    %v3749 = vsub.s32 %v3662, %v3748
    %v3750 = vrot.slane %v3567, %v3749
    %v3751 = vsel %vm3667, %v3750, %v3746
    %v3752 = vlaneseq
    %v3753 = vshrl.u32 %v3752, 7
    %v3754 = vsub.s32 %v3669, %v3753
    %v3755 = vrot.slane %v3570, %v3754
    %v3756 = vsel %vm3674, %v3755, %v3751
    %v3757 = vlaneseq
    %v3758 = vshrl.u32 %v3757, 7
    %v3759 = vsub.s32 %v3676, %v3758
    %v3760 = vrot.slane %v3573, %v3759
    %v3761 = vsel %vm3681, %v3760, %v3756
    %v3762 = vcombine.low %v3682, %v3761
    %v3764 = vunpack.c.l.s4 1966171168
    %v3765 = vunpack.c.0.s8 %v3764
    %v3766 = vlaneseq
    %v3767 = vshrl.u32 %v3766, 7
    %v3768 = vsub.s32 %v3765, %v3767
    %v3769 = vrot.slane %v3762, %v3768
    %v3771 = vunpack.c.l.s4 1966171168
    %v3772 = vunpack.c.0.s8 %v3771
    %v3773 = vlaneseq
    %v3774 = vshrl.u32 %v3773, 7
    %v3775 = vsub.s32 %v3772, %v3774
    %v3776 = vrot.slane %v3769, %v3775
    %v3777 = vlaneseq
    %vm3778 = vcmp.ge.s32.totalorder %v3777, 0
    %vm3779 = vcmp.lt.s32.totalorder %v3777, 256
    %vm3780 = vmand %vm3778, %vm3779
    %3781 = vst.msk [vmem:[#allocation2] sm:$0x3] %vm3780, %v3776
    %v3782 = vsub.f32 %v696, %v22
    %v3783 = vsub.f32 %v701, %v23
    %v3784 = vsub.f32 %v706, %v24
    %v3785 = vsub.f32 %v711, %v25
    %v3786 = vsub.f32 %v716, %v26
    %v3787 = vsub.f32 %v721, %v27
    %v3788 = vsub.f32 %v726, %v28
    %v3789 = vsub.f32 %v731, %v29
    %v3790 = vsub.f32 %v736, %v30
    %v3791 = vsub.f32 %v741, %v31
    %v3792 = vsub.f32 %v746, %v32
    %v3793 = vsub.f32 %v751, %v33
    %v3794 = vsub.f32 %v756, %v34
    %v3795 = vsub.f32 %v761, %v35
    %v3796 = vsub.f32 %v766, %v36
    %v3797 = vsub.f32 %v771, %v37
    %v3798 = vsub.f32 %v776, %v38
    %v3799 = vsub.f32 %v781, %v39
    %v3800 = vsub.f32 %v786, %v40
    %v3801 = vsub.f32 %v791, %v41
    %v3802 = vsub.f32 %v796, %v42
    %v3803 = vsub.f32 %v801, %v43
    %v3804 = vsub.f32 %v806, %v44
    %v3805 = vsub.f32 %v811, %v45
    %v3806 = vsub.f32 %v816, %v46
    %v3807 = vsub.f32 %v821, %v47
    %v3808 = vsub.f32 %v826, %v48
    %v3809 = vsub.f32 %v831, %v49
    %v3810 = vsub.f32 %v836, %v50
    %v3811 = vsub.f32 %v841, %v51
    %v3812 = vsub.f32 %v846, %v52
    %v3813 = vsub.f32 %v851, %v53
    %v3814 = vmul.f32 %v3782, %v3782
    %v3815 = vmul.f32 %v3783, %v3783
    %v3816 = vmul.f32 %v3784, %v3784
    %v3817 = vmul.f32 %v3785, %v3785
    %v3818 = vmul.f32 %v3786, %v3786
    %v3819 = vmul.f32 %v3787, %v3787
    %v3820 = vmul.f32 %v3788, %v3788
    %v3821 = vmul.f32 %v3789, %v3789
    %v3822 = vmul.f32 %v3790, %v3790
    %v3823 = vmul.f32 %v3791, %v3791
    %v3824 = vmul.f32 %v3792, %v3792
    %v3825 = vmul.f32 %v3793, %v3793
    %v3826 = vmul.f32 %v3794, %v3794
    %v3827 = vmul.f32 %v3795, %v3795
    %v3828 = vmul.f32 %v3796, %v3796
    %v3829 = vmul.f32 %v3797, %v3797
    %v3830 = vmul.f32 %v3798, %v3798
    %v3831 = vmul.f32 %v3799, %v3799
    %v3832 = vmul.f32 %v3800, %v3800
    %v3833 = vmul.f32 %v3801, %v3801
    %v3834 = vmul.f32 %v3802, %v3802
    %v3835 = vmul.f32 %v3803, %v3803
    %v3836 = vmul.f32 %v3804, %v3804
    %v3837 = vmul.f32 %v3805, %v3805
    %v3838 = vmul.f32 %v3806, %v3806
    %v3839 = vmul.f32 %v3807, %v3807
    %v3840 = vmul.f32 %v3808, %v3808
    %v3841 = vmul.f32 %v3809, %v3809
    %v3842 = vmul.f32 %v3810, %v3810
    %v3843 = vmul.f32 %v3811, %v3811
    %v3844 = vmul.f32 %v3812, %v3812
    %v3845 = vmul.f32 %v3813, %v3813
    %v3846 = vsel %vm75, %v3814, 0.0
    %v3847 = vsel %vm75, %v3815, 0.0
    %v3848 = vadd.f32 %v3846, %v3847
    %v3849 = vsel %vm75, %v3816, 0.0
    %v3850 = vadd.f32 %v3848, %v3849
    %v3851 = vsel %vm75, %v3817, 0.0
    %v3852 = vadd.f32 %v3850, %v3851
    %v3853 = vsel %vm75, %v3818, 0.0
    %v3854 = vadd.f32 %v3852, %v3853
    %v3855 = vsel %vm75, %v3819, 0.0
    %v3856 = vadd.f32 %v3854, %v3855
    %v3857 = vsel %vm75, %v3820, 0.0
    %v3858 = vadd.f32 %v3856, %v3857
    %v3859 = vsel %vm75, %v3821, 0.0
    %v3860 = vadd.f32 %v3858, %v3859
    %v3861 = vsel %vm75, %v3822, 0.0
    %v3862 = vadd.f32 %v3860, %v3861
    %v3863 = vsel %vm75, %v3823, 0.0
    %v3864 = vadd.f32 %v3862, %v3863
    %v3865 = vsel %vm75, %v3824, 0.0
    %v3866 = vadd.f32 %v3864, %v3865
    %v3867 = vsel %vm75, %v3825, 0.0
    %v3868 = vadd.f32 %v3866, %v3867
    %v3869 = vsel %vm75, %v3826, 0.0
    %v3870 = vadd.f32 %v3868, %v3869
    %v3871 = vsel %vm75, %v3827, 0.0
    %v3872 = vadd.f32 %v3870, %v3871
    %v3873 = vsel %vm75, %v3828, 0.0
    %v3874 = vadd.f32 %v3872, %v3873
    %v3875 = vsel %vm75, %v3829, 0.0
    %v3876 = vadd.f32 %v3874, %v3875
    %v3877 = vsel %vm75, %v3830, 0.0
    %v3878 = vadd.f32 %v3876, %v3877
    %v3879 = vsel %vm75, %v3831, 0.0
    %v3880 = vadd.f32 %v3878, %v3879
    %v3881 = vsel %vm75, %v3832, 0.0
    %v3882 = vadd.f32 %v3880, %v3881
    %v3883 = vsel %vm75, %v3833, 0.0
    %v3884 = vadd.f32 %v3882, %v3883
    %v3885 = vsel %vm75, %v3834, 0.0
    %v3886 = vadd.f32 %v3884, %v3885
    %v3887 = vsel %vm75, %v3835, 0.0
    %v3888 = vadd.f32 %v3886, %v3887
    %v3889 = vsel %vm75, %v3836, 0.0
    %v3890 = vadd.f32 %v3888, %v3889
    %v3891 = vsel %vm75, %v3837, 0.0
    %v3892 = vadd.f32 %v3890, %v3891
    %v3893 = vsel %vm75, %v3838, 0.0
    %v3894 = vadd.f32 %v3892, %v3893
    %v3895 = vsel %vm75, %v3839, 0.0
    %v3896 = vadd.f32 %v3894, %v3895
    %v3897 = vsel %vm75, %v3840, 0.0
    %v3898 = vadd.f32 %v3896, %v3897
    %v3899 = vsel %vm75, %v3841, 0.0
    %v3900 = vadd.f32 %v3898, %v3899
    %v3901 = vsel %vm75, %v3842, 0.0
    %v3902 = vadd.f32 %v3900, %v3901
    %v3903 = vsel %vm75, %v3843, 0.0
    %v3904 = vadd.f32 %v3902, %v3903
    %v3905 = vsel %vm75, %v3844, 0.0
    %v3906 = vadd.f32 %v3904, %v3905
    %v3907 = vsel %vm75, %v3845, 0.0
    %v3908 = vadd.f32 %v3906, %v3907
    %3909 = vadd.xlane.f32.xlu0 %v3908
    %v3910 = vpop.xlane.xlu0 %3909
    %v3911 = vrot.slane %v3910, 4
    %v3912 = vadd.f32 %v3910, %v3911
    %v3913 = vrot.slane %v3912, 2
    %v3914 = vadd.f32 %v3912, %v3913
    %v3915 = vrot.slane %v3914, 1
    %v3916 = vadd.f32 %v3914, %v3915
    %s3917 = vtos %v3916
    %v3918 = vstv %s3917
    %vm3919 = vcmask 0
    %3920 = vst.msk [vmem:[#allocation4] sm:$0x1] %vm3919, %v3918
    // Predicated region
    $region18: #{tpu_custom_call.1} parent=1 // pred_check
      _
    $region19: #{tpu_custom_call.1} parent=1 // pred_check_branch
      %3922 = sbr.rel (0) target = $region21
    $region20: #{tpu_custom_call.1} parent=1 // pred_region
      _
    $region21: #{tpu_custom_call.1} parent=1 // pred_fallthru
      _
    // Predicated region
    $region22: #{tpu_custom_call.1} parent=1 // pred_check
      _
    $region23: #{tpu_custom_call.1} parent=1 // pred_check_branch
      %3924 = sbr.rel (0) target = $region25
    $region24: #{tpu_custom_call.1} parent=1 // pred_region
      %s3926 = ssub.s32 32, 32
      %3927 = vsyncadd [#allocation3], %s3926
      %s3929 = sshll.u32 [#allocation2], 4
      %s3930 = int_to_ptr.vmem [resolvable:$true] %s3929
      %3932 = dma.vmem_to_hbm [thread:$0]  %s3930, 32, %s5, [#allocation3]
    $region25: #{tpu_custom_call.1} parent=1 // pred_fallthru
      _
    // Predicated region
    $region26: #{tpu_custom_call.1} parent=1 // pred_check
      _
    $region27: #{tpu_custom_call.1} parent=1 // pred_check_branch
      %3934 = sbr.rel (0) target = $region29
    $region28: #{tpu_custom_call.1} parent=1 // pred_region
      %s3936 = ssub.s32 16, 16
      %3937 = vsyncadd [#allocation5], %s3936
      %s3939 = sshll.u32 [#allocation4], 4
      %s3940 = int_to_ptr.vmem [resolvable:$true] %s3939
      %3942 = dma.vmem_to_hbm [thread:$0]  %s3940, 16, %s6, [#allocation5]
    $region29: #{tpu_custom_call.1} parent=1 // pred_fallthru
      _
    // Predicated region
    $region30: #{tpu_custom_call.1} parent=1 // pred_check
      _
    $region31: #{tpu_custom_call.1} parent=1 // pred_check_branch
      %3944 = sbr.rel (0) target = $region33
    $region32: #{tpu_custom_call.1} parent=1 // pred_region
      _
    $region33: #{tpu_custom_call.1} parent=1 // pred_fallthru
      _
    // Predicated region
    $region34: #{tpu_custom_call.1} parent=1 // pred_check
      _
    $region35: #{tpu_custom_call.1} parent=1 // pred_check_branch
      %3946 = sbr.rel (0) target = $region37
    $region36: #{tpu_custom_call.1} parent=1 // pred_region
      %3947 = dma.done [#allocation3], 32
    $region37: #{tpu_custom_call.1} parent=1 // pred_fallthru
      _
    // Predicated region
    $region38: #{tpu_custom_call.1} parent=1 // pred_check
      _
    $region39: #{tpu_custom_call.1} parent=1 // pred_check_branch
      %3949 = sbr.rel (0) target = $region41
    $region40: #{tpu_custom_call.1} parent=1 // pred_region
      %3950 = dma.done [#allocation5], 16
    $region41: #{tpu_custom_call.1} parent=1 // pred_fallthru
      _
    %3951 = vsyncpa [#allocation3], 1
    %3952 = vsyncpa [#allocation5], 1

</llo_original>
